<compile_context>
chip_gen: v7x
topology: tpu7x:2x2x1
jax: 0.10.0
libtpu: 0.0.40
codegen_flags: <defaults>
</compile_context>

<pallas_src>
import math
from functools import partial

import jax
import jax.numpy as jnp
from jax.experimental import pallas as pl
from jax.experimental.pallas import tpu as pltpu


# ------------------------------ fused kernel -------------------------------

def _decoder_layer_kernel(
    # inputs
    x_ref,                                     # (B*S, D)   f32 embeddings
    w_q_ref, w_k_ref, w_v_ref,                 # (H, D, Dh) bf16   (layer l)
    b_q_ref, b_k_ref, b_v_ref,                 # (H, Dh)    f32
    w_o_ref, b_o_ref,                          # (H, Dh, D) bf16 / (1, D) f32
    ln1_g_ref, ln1_b_ref,                      # (1, D) f32
    w_ff1_ref, b_ff1_ref,                      # (D, F) bf16 / (1, F) f32
    w_ff2_ref, b_ff2_ref,                      # (F, D) bf16 / (1, D) f32
    ln3_g_ref, ln3_b_ref,                      # (1, D) f32
    fin_g_ref, fin_b_ref,                      # (1, D) f32
    w_fin_ref, b_fin_ref,                      # (D, Vp) bf16 / (1, Vp) f32
    # outputs
    o_ref,                                     # (B*S, Vp) f32
    # scratch
    h_ref,                                     # (B*S, D)  f32 activations (persist)
    *, batch, num_heads, eps,
):
    l = pl.program_id(0)

    @pl.when(l == 0)
    def _():
        h_ref[...] = x_ref[...]

    x = h_ref[...]                             # (B*S, D) f32
    BS, D = x.shape
    S = BS // batch
    H = num_heads
    Dh = D // H
    bf16 = jnp.bfloat16

    def layernorm(h, g, b):
        mu = jnp.mean(h, axis=-1, keepdims=True)
        var = jnp.mean(jnp.square(h - mu), axis=-1, keepdims=True)
        return (h - mu) * jax.lax.rsqrt(var + eps) * g + b

    x_bf = x.astype(bf16)

    # ---- self-attention (no tgt mask: reference default is None) ------------
    # Per-head weights: every head's q/k/v/out matmul is lane-0 aligned and the
    # output projection is accumulated per head — no lane slicing, no concat.
    b_q = b_q_ref[...]
    b_k = b_k_ref[...]
    b_v = b_v_ref[...]
    attn = jnp.zeros((BS, D), jnp.float32)
    for h in range(H):                         # static unroll over heads
        # 1/sqrt(Dh) is already folded into w_q / b_q at init time.
        qh = jnp.dot(x_bf, w_q_ref[h], preferred_element_type=jnp.float32) + b_q[h:h + 1]
        kh = jnp.dot(x_bf, w_k_ref[h], preferred_element_type=jnp.float32) + b_k[h:h + 1]
        vh = jnp.dot(x_bf, w_v_ref[h], preferred_element_type=jnp.float32) + b_v[h:h + 1]
        q3 = qh.reshape(batch, S, Dh).astype(bf16)
        k3 = kh.reshape(batch, S, Dh).astype(bf16)
        v3 = vh.reshape(batch, S, Dh).astype(bf16)
        s = jnp.einsum('bqd,bkd->bqk', q3, k3, preferred_element_type=jnp.float32)
        m = jnp.max(s, axis=-1, keepdims=True)
        p = jnp.exp(s - m)
        p = p * pl.reciprocal(jnp.sum(p, axis=-1, keepdims=True), approx=True)
        oh = jnp.einsum('bqk,bkd->bqd', p.astype(bf16), v3,
                        preferred_element_type=jnp.float32)
        attn = attn + jnp.dot(oh.reshape(BS, Dh).astype(bf16), w_o_ref[h],
                              preferred_element_type=jnp.float32)
    attn = attn + b_o_ref[...]
    x = layernorm(x + attn, ln1_g_ref[...], ln1_b_ref[...])

    # TODO(synk): cross-attention (memory=None in reference forward) skipped.

    # ---- feed-forward --------------------------------------------------------
    ff = jnp.dot(x.astype(bf16), w_ff1_ref[...], preferred_element_type=jnp.float32)
    ff = jnp.maximum(ff + b_ff1_ref[...], 0.0)
    ff = jnp.dot(ff.astype(bf16), w_ff2_ref[...], preferred_element_type=jnp.float32)
    ff = ff + b_ff2_ref[...]
    x = layernorm(x + ff, ln3_g_ref[...], ln3_b_ref[...])

    h_ref[...] = x

    # ---- last layer: final LayerNorm + lane-dense padded vocab projection ----
    @pl.when(l == pl.num_programs(0) - 1)
    def _():
        xf = layernorm(x, fin_g_ref[...], fin_b_ref[...])
        logits = jnp.dot(xf.astype(bf16), w_fin_ref[...],
                         preferred_element_type=jnp.float32) + b_fin_ref[...]
        o_ref[...] = logits.astype(o_ref.dtype)


# --------------------------- parameters / forward ---------------------------

def init_params(key, d_model, num_layers, num_heads, d_ff, vocab_size):
    D, L, H, F, V = d_model, num_layers, num_heads, d_ff, vocab_size
    Dh = D // H
    Vp = max(128, ((V + 127) // 128) * 128)          # lane-dense final store
    ks = jax.random.split(key, 8)

    def nrm(k, shape, scale=0.02):
        return scale * jax.random.normal(k, shape, jnp.float32)

    q_scale = 1.0 / math.sqrt(Dh)                    # folded into W_q / b_q

    # Final projection padded to Vp ONCE here (hoisted out of the jit'd forward).
    w_fin = jnp.zeros((D, Vp), jnp.float32).at[:, :V].set(nrm(ks[6], (D, V)))
    b_fin = jnp.zeros((1, Vp), jnp.float32)

    return {
        "embedding": jax.random.normal(ks[0], (V, D), jnp.float32),
        # per-head projection weights, stored bf16 for the MXU / halved DMA bytes
        "w_q": (nrm(ks[1], (L, H, D, Dh)) * q_scale).astype(jnp.bfloat16),
        "w_k": nrm(ks[2], (L, H, D, Dh)).astype(jnp.bfloat16),
        "w_v": nrm(ks[3], (L, H, D, Dh)).astype(jnp.bfloat16),
        "b_q": jnp.zeros((L, H, Dh), jnp.float32),   # q_scale folded (zero anyway)
        "b_k": jnp.zeros((L, H, Dh), jnp.float32),
        "b_v": jnp.zeros((L, H, Dh), jnp.float32),
        "w_o": nrm(ks[4], (L, H, Dh, D)).astype(jnp.bfloat16),
        "b_o": jnp.zeros((L, 1, D), jnp.float32),
        "ln1_g": jnp.ones((L, 1, D), jnp.float32),
        "ln1_b": jnp.zeros((L, 1, D), jnp.float32),
        "w_ff1": nrm(ks[5], (L, D, F)).astype(jnp.bfloat16),
        "b_ff1": jnp.zeros((L, 1, F), jnp.float32),
        "w_ff2": nrm(ks[7], (L, F, D)).astype(jnp.bfloat16),
        "b_ff2": jnp.zeros((L, 1, D), jnp.float32),
        "ln3_g": jnp.ones((L, 1, D), jnp.float32),
        "ln3_b": jnp.zeros((L, 1, D), jnp.float32),
        "final_ln_g": jnp.ones((1, D), jnp.float32),
        "final_ln_b": jnp.zeros((1, D), jnp.float32),
        "w_final": w_fin.astype(jnp.bfloat16),       # already padded to Vp
        "b_final": b_fin,                            # already padded to Vp
    }


def transformer_forward(params, tokens, *, num_heads, layernorm_eps, vocab_size):
    B, S = tokens.shape
    V = vocab_size
    D = params["embedding"].shape[1]
    L = params["w_q"].shape[0]
    H = num_heads
    Dh = params["w_q"].shape[-1]
    F = params["w_ff1"].shape[-1]
    Vp = params["w_final"].shape[-1]
    BS = B * S

    # Embedding lookup + sqrt(d_model) scaling (XLA glue, fused with the reshape).
    # max_abs_position == 0 -> no positional branch; dropout is identity (eval).
    # TODO(synk): could be fused in-kernel via PrefetchScalarGridSpec + pl.Element
    #             row-gather when sequence lengths become large.
    x = jnp.take(params["embedding"], tokens, axis=0).astype(jnp.float32)
    x = (x * math.sqrt(D)).reshape(BS, D)

    def per_layer(shape):
        # one layer's weights per grid step (streaming, double-buffered prefetch)
        n = len(shape)
        return pl.BlockSpec((None,) + shape, lambda l, _n=n: (l,) + (0,) * _n)

    def const(shape):
        # constant block: fetched once, never re-DMA'd across grid steps
        n = len(shape)
        return pl.BlockSpec(shape, lambda l, _n=n: (0,) * _n)

    kernel = partial(_decoder_layer_kernel, batch=B, num_heads=H, eps=layernorm_eps)

    logits = pl.pallas_call(
        kernel,
        out_shape=jax.ShapeDtypeStruct((BS, Vp), jnp.float32),
        grid=(L,),
        in_specs=[
            const((BS, D)),                                          # x
            per_layer((H, D, Dh)), per_layer((H, D, Dh)), per_layer((H, D, Dh)),
            per_layer((H, Dh)), per_layer((H, Dh)), per_layer((H, Dh)),
            per_layer((H, Dh, D)), per_layer((1, D)),                # w_o, b_o
            per_layer((1, D)), per_layer((1, D)),                    # ln1 g, b
            per_layer((D, F)), per_layer((1, F)),                    # ff1
            per_layer((F, D)), per_layer((1, D)),                    # ff2
            per_layer((1, D)), per_layer((1, D)),                    # ln3 g, b
            const((1, D)), const((1, D)),                            # final LN g, b
            const((D, Vp)), const((1, Vp)),                          # final proj
        ],
        out_specs=pl.BlockSpec((BS, Vp), lambda l: (0, 0)),
        scratch_shapes=[pltpu.VMEM((BS, D), jnp.float32)],
        compiler_params=pltpu.CompilerParams(
            dimension_semantics=("arbitrary",),           # layer axis is a reduction/carry
            vmem_limit_bytes=48 * 1024 * 1024,            # headroom below v7x 64 MiB
        ),
    )(x,
      params["w_q"], params["w_k"], params["w_v"],
      params["b_q"], params["b_k"], params["b_v"],
      params["w_o"], params["b_o"],
      params["ln1_g"], params["ln1_b"],
      params["w_ff1"], params["b_ff1"],
      params["w_ff2"], params["b_ff2"],
      params["ln3_g"], params["ln3_b"],
      params["final_ln_g"], params["final_ln_b"],
      params["w_final"], params["b_final"])

    return logits[:, :V].reshape(B, S, V)                 # drop lane padding


# --------------------------------- driver ----------------------------------

if __name__ == "__main__":
    # Model hyper-parameters (small, consistent with the module's __init__ signature)
    d_model = 32
    num_layers = 2
    num_heads = 4
    d_ff = 64
    max_rel_dist = 8        # unused in reference forward
    max_abs_position = 0    # 0 -> positional-encoding branch is skipped
    vocab_size = 50
    dropout = 0.0
    layernorm_eps = 1e-5

    batch, seq = 2, 8

    key = jax.random.PRNGKey(0)
    pkey, tkey = jax.random.split(key)
    params = init_params(pkey, d_model, num_layers, num_heads, d_ff, vocab_size)
    tokens = jax.random.randint(tkey, (batch, seq), 0, vocab_size, dtype=jnp.int32)

    fwd = jax.jit(partial(transformer_forward,
                          num_heads=num_heads,
                          layernorm_eps=layernorm_eps,
                          vocab_size=vocab_size))
    logits = fwd(params, tokens)
    jax.block_until_ready(logits)

    assert logits.shape == (batch, seq, vocab_size), logits.shape
    assert logits.dtype == jnp.float32
    assert bool(jnp.all(jnp.isfinite(logits)))
    print("KERNEL_OK")
</pallas_src>

<mosaic_0001>
module attributes {stable_mosaic.version = 11 : i64} {
  func.func @_decoder_layer_kernel(%arg0: i32, %arg1: memref<16x32xf32, #tpu.memory_space<vmem>>, %arg2: memref<1x4x32x8xbf16, #tpu.memory_space<vmem>>, %arg3: memref<1x4x32x8xbf16, #tpu.memory_space<vmem>>, %arg4: memref<1x4x32x8xbf16, #tpu.memory_space<vmem>>, %arg5: memref<1x4x8xf32, #tpu.memory_space<vmem>>, %arg6: memref<1x4x8xf32, #tpu.memory_space<vmem>>, %arg7: memref<1x4x8xf32, #tpu.memory_space<vmem>>, %arg8: memref<1x4x8x32xbf16, #tpu.memory_space<vmem>>, %arg9: memref<1x1x32xf32, #tpu.memory_space<vmem>>, %arg10: memref<1x1x32xf32, #tpu.memory_space<vmem>>, %arg11: memref<1x1x32xf32, #tpu.memory_space<vmem>>, %arg12: memref<1x32x64xbf16, #tpu.memory_space<vmem>>, %arg13: memref<1x1x64xf32, #tpu.memory_space<vmem>>, %arg14: memref<1x64x32xbf16, #tpu.memory_space<vmem>>, %arg15: memref<1x1x32xf32, #tpu.memory_space<vmem>>, %arg16: memref<1x1x32xf32, #tpu.memory_space<vmem>>, %arg17: memref<1x1x32xf32, #tpu.memory_space<vmem>>, %arg18: memref<1x32xf32, #tpu.memory_space<vmem>>, %arg19: memref<1x32xf32, #tpu.memory_space<vmem>>, %arg20: memref<32x128xbf16, #tpu.memory_space<vmem>>, %arg21: memref<1x128xf32, #tpu.memory_space<vmem>>, %arg22: memref<16x128xf32, #tpu.memory_space<vmem>>, %arg23: memref<16x32xf32, #tpu.memory_space<vmem>>) attributes {dimension_semantics = [#tpu.dimension_semantics<arbitrary>], iteration_bounds = array<i64: 2>, scalar_prefetch = 0 : i64, scratch_operands = 1 : i64, tpu.core_type = #tpu.core_type<tc>, window_params = [{pipeline_mode = #tpu.pipeline_mode<synchronous>, transform_indices = @transform_0, window_bounds = array<i64: 16, 32>}, {transform_indices = @transform_1, window_bounds = array<i64: 1, 4, 32, 8>}, {transform_indices = @transform_2, window_bounds = array<i64: 1, 4, 32, 8>}, {transform_indices = @transform_3, window_bounds = array<i64: 1, 4, 32, 8>}, {transform_indices = @transform_4, window_bounds = array<i64: 1, 4, 8>}, {transform_indices = @transform_5, window_bounds = array<i64: 1, 4, 8>}, {transform_indices = @transform_6, window_bounds = array<i64: 1, 4, 8>}, {transform_indices = @transform_7, window_bounds = array<i64: 1, 4, 8, 32>}, {transform_indices = @transform_8, window_bounds = array<i64: 1, 1, 32>}, {transform_indices = @transform_9, window_bounds = array<i64: 1, 1, 32>}, {transform_indices = @transform_10, window_bounds = array<i64: 1, 1, 32>}, {transform_indices = @transform_11, window_bounds = array<i64: 1, 32, 64>}, {transform_indices = @transform_12, window_bounds = array<i64: 1, 1, 64>}, {transform_indices = @transform_13, window_bounds = array<i64: 1, 64, 32>}, {transform_indices = @transform_14, window_bounds = array<i64: 1, 1, 32>}, {transform_indices = @transform_15, window_bounds = array<i64: 1, 1, 32>}, {transform_indices = @transform_16, window_bounds = array<i64: 1, 1, 32>}, {pipeline_mode = #tpu.pipeline_mode<synchronous>, transform_indices = @transform_17, window_bounds = array<i64: 1, 32>}, {pipeline_mode = #tpu.pipeline_mode<synchronous>, transform_indices = @transform_18, window_bounds = array<i64: 1, 32>}, {pipeline_mode = #tpu.pipeline_mode<synchronous>, transform_indices = @transform_19, window_bounds = array<i64: 32, 128>}, {pipeline_mode = #tpu.pipeline_mode<synchronous>, transform_indices = @transform_20, window_bounds = array<i64: 1, 128>}, {pipeline_mode = #tpu.pipeline_mode<synchronous>, transform_indices = @transform_21, window_bounds = array<i64: 16, 128>}]} {
    %c0_i32 = arith.constant 0 : i32
    %0 = arith.cmpi eq, %arg0, %c0_i32 : i32
    %1 = arith.extui %0 : i1 to i32
    %c0_i32_0 = arith.constant 0 : i32
    %2 = arith.cmpi ne, %1, %c0_i32_0 : i32
    scf.if %2 {
      %c0_147 = arith.constant 0 : index
      %c0_148 = arith.constant 0 : index
      %264 = vector.load %arg1[%c0_147, %c0_148] : memref<16x32xf32, #tpu.memory_space<vmem>>, vector<16x32xf32>
      %c0_149 = arith.constant 0 : index
      %c0_150 = arith.constant 0 : index
      %265 = vector.load %arg23[%c0_149, %c0_150] : memref<16x32xf32, #tpu.memory_space<vmem>>, vector<16x32xf32>
      tpu.vector_store %arg23[%c0_149, %c0_150], %264 {strides = array<i32>} : memref<16x32xf32, #tpu.memory_space<vmem>>, vector<16x32xf32>,
    } else {
    }
    %c0 = arith.constant 0 : index
    %c0_1 = arith.constant 0 : index
    %3 = vector.load %arg23[%c0, %c0_1] : memref<16x32xf32, #tpu.memory_space<vmem>>, vector<16x32xf32>
    %4 = arith.truncf %3 : vector<16x32xf32> to vector<16x32xbf16>
    %c0_2 = arith.constant 0 : index
    %c0_3 = arith.constant 0 : index
    %c0_4 = arith.constant 0 : index
    %5 = vector.load %arg5[%c0_2, %c0_3, %c0_4] : memref<1x4x8xf32, #tpu.memory_space<vmem>>, vector<1x4x8xf32>
    %6 = vector.shape_cast %5 : vector<1x4x8xf32> to vector<4x8xf32>
    %c0_5 = arith.constant 0 : index
    %c0_6 = arith.constant 0 : index
    %c0_7 = arith.constant 0 : index
    %7 = vector.load %arg6[%c0_5, %c0_6, %c0_7] : memref<1x4x8xf32, #tpu.memory_space<vmem>>, vector<1x4x8xf32>
    %8 = vector.shape_cast %7 : vector<1x4x8xf32> to vector<4x8xf32>
    %c0_8 = arith.constant 0 : index
    %c0_9 = arith.constant 0 : index
    %c0_10 = arith.constant 0 : index
    %9 = vector.load %arg7[%c0_8, %c0_9, %c0_10] : memref<1x4x8xf32, #tpu.memory_space<vmem>>, vector<1x4x8xf32>
    %10 = vector.shape_cast %9 : vector<1x4x8xf32> to vector<4x8xf32>
    %cst = arith.constant 0.000000e+00 : f32
    %11 = vector.broadcast %cst : f32 to vector<16x32xf32>
    %c0_11 = arith.constant 0 : index
    %c0_12 = arith.constant 0 : index
    %c0_13 = arith.constant 0 : index
    %c0_14 = arith.constant 0 : index
    %12 = vector.load %arg2[%c0_11, %c0_12, %c0_13, %c0_14] : memref<1x4x32x8xbf16, #tpu.memory_space<vmem>>, vector<1x1x32x8xbf16>
    %13 = vector.shape_cast %12 : vector<1x1x32x8xbf16> to vector<32x8xbf16>
    %cst_15 = arith.constant dense<0.000000e+00> : vector<16x8xf32>
    %14 = tpu.matmul %4, %13, %cst_15 {dimension_numbers = #tpu.dot_dimension_numbers<[1], [0], [0], [1], [0, 0, 1, 1], [], []>} : vector<16x32xbf16>, vector<32x8xbf16>, vector<16x8xf32> -> vector<16x8xf32>
    %15 = vector.extract_strided_slice %6 {offsets = [0, 0], sizes = [1, 8], strides = [1, 1]} : vector<4x8xf32> to vector<1x8xf32>
    %16 = vector.broadcast %15 : vector<1x8xf32> to vector<16x8xf32>
    %17 = arith.addf %14, %16 : vector<16x8xf32>
    %c0_16 = arith.constant 0 : index
    %c0_17 = arith.constant 0 : index
    %c0_18 = arith.constant 0 : index
    %c0_19 = arith.constant 0 : index
    %18 = vector.load %arg3[%c0_16, %c0_17, %c0_18, %c0_19] : memref<1x4x32x8xbf16, #tpu.memory_space<vmem>>, vector<1x1x32x8xbf16>
    %19 = vector.shape_cast %18 : vector<1x1x32x8xbf16> to vector<32x8xbf16>
    %cst_20 = arith.constant dense<0.000000e+00> : vector<16x8xf32>
    %20 = tpu.matmul %4, %19, %cst_20 {dimension_numbers = #tpu.dot_dimension_numbers<[1], [0], [0], [1], [0, 0, 1, 1], [], []>} : vector<16x32xbf16>, vector<32x8xbf16>, vector<16x8xf32> -> vector<16x8xf32>
    %21 = vector.extract_strided_slice %8 {offsets = [0, 0], sizes = [1, 8], strides = [1, 1]} : vector<4x8xf32> to vector<1x8xf32>
    %22 = vector.broadcast %21 : vector<1x8xf32> to vector<16x8xf32>
    %23 = arith.addf %20, %22 : vector<16x8xf32>
    %c0_21 = arith.constant 0 : index
    %c0_22 = arith.constant 0 : index
    %c0_23 = arith.constant 0 : index
    %c0_24 = arith.constant 0 : index
    %24 = vector.load %arg4[%c0_21, %c0_22, %c0_23, %c0_24] : memref<1x4x32x8xbf16, #tpu.memory_space<vmem>>, vector<1x1x32x8xbf16>
    %25 = vector.shape_cast %24 : vector<1x1x32x8xbf16> to vector<32x8xbf16>
    %cst_25 = arith.constant dense<0.000000e+00> : vector<16x8xf32>
    %26 = tpu.matmul %4, %25, %cst_25 {dimension_numbers = #tpu.dot_dimension_numbers<[1], [0], [0], [1], [0, 0, 1, 1], [], []>} : vector<16x32xbf16>, vector<32x8xbf16>, vector<16x8xf32> -> vector<16x8xf32>
    %27 = vector.extract_strided_slice %10 {offsets = [0, 0], sizes = [1, 8], strides = [1, 1]} : vector<4x8xf32> to vector<1x8xf32>
    %28 = vector.broadcast %27 : vector<1x8xf32> to vector<16x8xf32>
    %29 = arith.addf %26, %28 : vector<16x8xf32>
    %30 = vector.shape_cast %17 : vector<16x8xf32> to vector<2x8x8xf32>
    %31 = arith.truncf %30 : vector<2x8x8xf32> to vector<2x8x8xbf16>
    %32 = vector.shape_cast %23 : vector<16x8xf32> to vector<2x8x8xf32>
    %33 = arith.truncf %32 : vector<2x8x8xf32> to vector<2x8x8xbf16>
    %34 = vector.shape_cast %29 : vector<16x8xf32> to vector<2x8x8xf32>
    %35 = arith.truncf %34 : vector<2x8x8xf32> to vector<2x8x8xbf16>
    "tpu.trace_start"() <{level = 10 : i32, message = "bqd,bkd->bqk"}> : () -> ()
    %cst_26 = arith.constant dense<0.000000e+00> : vector<2x8x8xf32>
    %36 = tpu.matmul %31, %33, %cst_26 {dimension_numbers = #tpu.dot_dimension_numbers<[2], [2], [1], [1], [0, 0, 0, 1, 1, 1], [0], [0]>} : vector<2x8x8xbf16>, vector<2x8x8xbf16>, vector<2x8x8xf32> -> vector<2x8x8xf32>
    "tpu.trace_stop"() : () -> ()
    %cst_27 = arith.constant dense<0xFF800000> : vector<2x8xf32>
    %37 = vector.multi_reduction <maximumf>, %36, %cst_27 [2] : vector<2x8x8xf32> to vector<2x8xf32>
    %38 = vector.shape_cast %37 : vector<2x8xf32> to vector<2x8x1xf32>
    %39 = vector.broadcast %38 : vector<2x8x1xf32> to vector<2x8x8xf32>
    %40 = arith.subf %36, %39 : vector<2x8x8xf32>
    %41 = math.exp %40 : vector<2x8x8xf32>
    %cst_28 = arith.constant dense<0.000000e+00> : vector<2x8xf32>
    %42 = vector.multi_reduction <add>, %41, %cst_28 [2] : vector<2x8x8xf32> to vector<2x8xf32>
    %43 = vector.shape_cast %42 : vector<2x8xf32> to vector<2x8x1xf32>
    %44 = tpu.reciprocal %43 {approx = true} : vector<2x8x1xf32> -> vector<2x8x1xf32>
    %45 = vector.broadcast %44 : vector<2x8x1xf32> to vector<2x8x8xf32>
    %46 = arith.mulf %41, %45 : vector<2x8x8xf32>
    %47 = arith.truncf %46 : vector<2x8x8xf32> to vector<2x8x8xbf16>
    "tpu.trace_start"() <{level = 10 : i32, message = "bqk,bkd->bqd"}> : () -> ()
    %cst_29 = arith.constant dense<0.000000e+00> : vector<2x8x8xf32>
    %48 = tpu.matmul %47, %35, %cst_29 {dimension_numbers = #tpu.dot_dimension_numbers<[2], [1], [1], [2], [0, 0, 0, 1, 1, 2], [0], [0]>} : vector<2x8x8xbf16>, vector<2x8x8xbf16>, vector<2x8x8xf32> -> vector<2x8x8xf32>
    "tpu.trace_stop"() : () -> ()
    %49 = vector.shape_cast %48 : vector<2x8x8xf32> to vector<16x8xf32>
    %50 = arith.truncf %49 : vector<16x8xf32> to vector<16x8xbf16>
    %c0_30 = arith.constant 0 : index
    %c0_31 = arith.constant 0 : index
    %c0_32 = arith.constant 0 : index
    %c0_33 = arith.constant 0 : index
    %51 = vector.load %arg8[%c0_30, %c0_31, %c0_32, %c0_33] : memref<1x4x8x32xbf16, #tpu.memory_space<vmem>>, vector<1x1x8x32xbf16>
    %52 = vector.shape_cast %51 : vector<1x1x8x32xbf16> to vector<8x32xbf16>
    %cst_34 = arith.constant dense<0.000000e+00> : vector<16x32xf32>
    %53 = tpu.matmul %50, %52, %cst_34 {dimension_numbers = #tpu.dot_dimension_numbers<[1], [0], [0], [1], [0, 0, 1, 1], [], []>} : vector<16x8xbf16>, vector<8x32xbf16>, vector<16x32xf32> -> vector<16x32xf32>
    %54 = arith.addf %11, %53 : vector<16x32xf32>
    %c0_35 = arith.constant 0 : index
    %c1 = arith.constant 1 : index
    %c0_36 = arith.constant 0 : index
    %c0_37 = arith.constant 0 : index
    %55 = vector.load %arg2[%c0_35, %c1, %c0_36, %c0_37] : memref<1x4x32x8xbf16, #tpu.memory_space<vmem>>, vector<1x1x32x8xbf16>
    %56 = vector.shape_cast %55 : vector<1x1x32x8xbf16> to vector<32x8xbf16>
    %cst_38 = arith.constant dense<0.000000e+00> : vector<16x8xf32>
    %57 = tpu.matmul %4, %56, %cst_38 {dimension_numbers = #tpu.dot_dimension_numbers<[1], [0], [0], [1], [0, 0, 1, 1], [], []>} : vector<16x32xbf16>, vector<32x8xbf16>, vector<16x8xf32> -> vector<16x8xf32>
    %58 = vector.extract_strided_slice %6 {offsets = [1, 0], sizes = [1, 8], strides = [1, 1]} : vector<4x8xf32> to vector<1x8xf32>
    %59 = vector.broadcast %58 : vector<1x8xf32> to vector<16x8xf32>
    %60 = arith.addf %57, %59 : vector<16x8xf32>
    %c0_39 = arith.constant 0 : index
    %c1_40 = arith.constant 1 : index
    %c0_41 = arith.constant 0 : index
    %c0_42 = arith.constant 0 : index
    %61 = vector.load %arg3[%c0_39, %c1_40, %c0_41, %c0_42] : memref<1x4x32x8xbf16, #tpu.memory_space<vmem>>, vector<1x1x32x8xbf16>
    %62 = vector.shape_cast %61 : vector<1x1x32x8xbf16> to vector<32x8xbf16>
    %cst_43 = arith.constant dense<0.000000e+00> : vector<16x8xf32>
    %63 = tpu.matmul %4, %62, %cst_43 {dimension_numbers = #tpu.dot_dimension_numbers<[1], [0], [0], [1], [0, 0, 1, 1], [], []>} : vector<16x32xbf16>, vector<32x8xbf16>, vector<16x8xf32> -> vector<16x8xf32>
    %64 = vector.extract_strided_slice %8 {offsets = [1, 0], sizes = [1, 8], strides = [1, 1]} : vector<4x8xf32> to vector<1x8xf32>
    %65 = vector.broadcast %64 : vector<1x8xf32> to vector<16x8xf32>
    %66 = arith.addf %63, %65 : vector<16x8xf32>
    %c0_44 = arith.constant 0 : index
    %c1_45 = arith.constant 1 : index
    %c0_46 = arith.constant 0 : index
    %c0_47 = arith.constant 0 : index
    %67 = vector.load %arg4[%c0_44, %c1_45, %c0_46, %c0_47] : memref<1x4x32x8xbf16, #tpu.memory_space<vmem>>, vector<1x1x32x8xbf16>
    %68 = vector.shape_cast %67 : vector<1x1x32x8xbf16> to vector<32x8xbf16>
    %cst_48 = arith.constant dense<0.000000e+00> : vector<16x8xf32>
    %69 = tpu.matmul %4, %68, %cst_48 {dimension_numbers = #tpu.dot_dimension_numbers<[1], [0], [0], [1], [0, 0, 1, 1], [], []>} : vector<16x32xbf16>, vector<32x8xbf16>, vector<16x8xf32> -> vector<16x8xf32>
    %70 = vector.extract_strided_slice %10 {offsets = [1, 0], sizes = [1, 8], strides = [1, 1]} : vector<4x8xf32> to vector<1x8xf32>
    %71 = vector.broadcast %70 : vector<1x8xf32> to vector<16x8xf32>
    %72 = arith.addf %69, %71 : vector<16x8xf32>
    %73 = vector.shape_cast %60 : vector<16x8xf32> to vector<2x8x8xf32>
    %74 = arith.truncf %73 : vector<2x8x8xf32> to vector<2x8x8xbf16>
    %75 = vector.shape_cast %66 : vector<16x8xf32> to vector<2x8x8xf32>
    %76 = arith.truncf %75 : vector<2x8x8xf32> to vector<2x8x8xbf16>
    %77 = vector.shape_cast %72 : vector<16x8xf32> to vector<2x8x8xf32>
    %78 = arith.truncf %77 : vector<2x8x8xf32> to vector<2x8x8xbf16>
    "tpu.trace_start"() <{level = 10 : i32, message = "bqd,bkd->bqk"}> : () -> ()
    %cst_49 = arith.constant dense<0.000000e+00> : vector<2x8x8xf32>
    %79 = tpu.matmul %74, %76, %cst_49 {dimension_numbers = #tpu.dot_dimension_numbers<[2], [2], [1], [1], [0, 0, 0, 1, 1, 1], [0], [0]>} : vector<2x8x8xbf16>, vector<2x8x8xbf16>, vector<2x8x8xf32> -> vector<2x8x8xf32>
    "tpu.trace_stop"() : () -> ()
    %cst_50 = arith.constant dense<0xFF800000> : vector<2x8xf32>
    %80 = vector.multi_reduction <maximumf>, %79, %cst_50 [2] : vector<2x8x8xf32> to vector<2x8xf32>
    %81 = vector.shape_cast %80 : vector<2x8xf32> to vector<2x8x1xf32>
    %82 = vector.broadcast %81 : vector<2x8x1xf32> to vector<2x8x8xf32>
    %83 = arith.subf %79, %82 : vector<2x8x8xf32>
    %84 = math.exp %83 : vector<2x8x8xf32>
    %cst_51 = arith.constant dense<0.000000e+00> : vector<2x8xf32>
    %85 = vector.multi_reduction <add>, %84, %cst_51 [2] : vector<2x8x8xf32> to vector<2x8xf32>
    %86 = vector.shape_cast %85 : vector<2x8xf32> to vector<2x8x1xf32>
    %87 = tpu.reciprocal %86 {approx = true} : vector<2x8x1xf32> -> vector<2x8x1xf32>
    %88 = vector.broadcast %87 : vector<2x8x1xf32> to vector<2x8x8xf32>
    %89 = arith.mulf %84, %88 : vector<2x8x8xf32>
    %90 = arith.truncf %89 : vector<2x8x8xf32> to vector<2x8x8xbf16>
    "tpu.trace_start"() <{level = 10 : i32, message = "bqk,bkd->bqd"}> : () -> ()
    %cst_52 = arith.constant dense<0.000000e+00> : vector<2x8x8xf32>
    %91 = tpu.matmul %90, %78, %cst_52 {dimension_numbers = #tpu.dot_dimension_numbers<[2], [1], [1], [2], [0, 0, 0, 1, 1, 2], [0], [0]>} : vector<2x8x8xbf16>, vector<2x8x8xbf16>, vector<2x8x8xf32> -> vector<2x8x8xf32>
    "tpu.trace_stop"() : () -> ()
    %92 = vector.shape_cast %91 : vector<2x8x8xf32> to vector<16x8xf32>
    %93 = arith.truncf %92 : vector<16x8xf32> to vector<16x8xbf16>
    %c0_53 = arith.constant 0 : index
    %c1_54 = arith.constant 1 : index
    %c0_55 = arith.constant 0 : index
    %c0_56 = arith.constant 0 : index
    %94 = vector.load %arg8[%c0_53, %c1_54, %c0_55, %c0_56] : memref<1x4x8x32xbf16, #tpu.memory_space<vmem>>, vector<1x1x8x32xbf16>
    %95 = vector.shape_cast %94 : vector<1x1x8x32xbf16> to vector<8x32xbf16>
    %cst_57 = arith.constant dense<0.000000e+00> : vector<16x32xf32>
    %96 = tpu.matmul %93, %95, %cst_57 {dimension_numbers = #tpu.dot_dimension_numbers<[1], [0], [0], [1], [0, 0, 1, 1], [], []>} : vector<16x8xbf16>, vector<8x32xbf16>, vector<16x32xf32> -> vector<16x32xf32>
    %97 = arith.addf %54, %96 : vector<16x32xf32>
    %c0_58 = arith.constant 0 : index
    %c2 = arith.constant 2 : index
    %c0_59 = arith.constant 0 : index
    %c0_60 = arith.constant 0 : index
    %98 = vector.load %arg2[%c0_58, %c2, %c0_59, %c0_60] : memref<1x4x32x8xbf16, #tpu.memory_space<vmem>>, vector<1x1x32x8xbf16>
    %99 = vector.shape_cast %98 : vector<1x1x32x8xbf16> to vector<32x8xbf16>
    %cst_61 = arith.constant dense<0.000000e+00> : vector<16x8xf32>
    %100 = tpu.matmul %4, %99, %cst_61 {dimension_numbers = #tpu.dot_dimension_numbers<[1], [0], [0], [1], [0, 0, 1, 1], [], []>} : vector<16x32xbf16>, vector<32x8xbf16>, vector<16x8xf32> -> vector<16x8xf32>
    %101 = vector.extract_strided_slice %6 {offsets = [2, 0], sizes = [1, 8], strides = [1, 1]} : vector<4x8xf32> to vector<1x8xf32>
    %102 = vector.broadcast %101 : vector<1x8xf32> to vector<16x8xf32>
    %103 = arith.addf %100, %102 : vector<16x8xf32>
    %c0_62 = arith.constant 0 : index
    %c2_63 = arith.constant 2 : index
    %c0_64 = arith.constant 0 : index
    %c0_65 = arith.constant 0 : index
    %104 = vector.load %arg3[%c0_62, %c2_63, %c0_64, %c0_65] : memref<1x4x32x8xbf16, #tpu.memory_space<vmem>>, vector<1x1x32x8xbf16>
    %105 = vector.shape_cast %104 : vector<1x1x32x8xbf16> to vector<32x8xbf16>
    %cst_66 = arith.constant dense<0.000000e+00> : vector<16x8xf32>
    %106 = tpu.matmul %4, %105, %cst_66 {dimension_numbers = #tpu.dot_dimension_numbers<[1], [0], [0], [1], [0, 0, 1, 1], [], []>} : vector<16x32xbf16>, vector<32x8xbf16>, vector<16x8xf32> -> vector<16x8xf32>
    %107 = vector.extract_strided_slice %8 {offsets = [2, 0], sizes = [1, 8], strides = [1, 1]} : vector<4x8xf32> to vector<1x8xf32>
    %108 = vector.broadcast %107 : vector<1x8xf32> to vector<16x8xf32>
    %109 = arith.addf %106, %108 : vector<16x8xf32>
    %c0_67 = arith.constant 0 : index
    %c2_68 = arith.constant 2 : index
    %c0_69 = arith.constant 0 : index
    %c0_70 = arith.constant 0 : index
    %110 = vector.load %arg4[%c0_67, %c2_68, %c0_69, %c0_70] : memref<1x4x32x8xbf16, #tpu.memory_space<vmem>>, vector<1x1x32x8xbf16>
    %111 = vector.shape_cast %110 : vector<1x1x32x8xbf16> to vector<32x8xbf16>
    %cst_71 = arith.constant dense<0.000000e+00> : vector<16x8xf32>
    %112 = tpu.matmul %4, %111, %cst_71 {dimension_numbers = #tpu.dot_dimension_numbers<[1], [0], [0], [1], [0, 0, 1, 1], [], []>} : vector<16x32xbf16>, vector<32x8xbf16>, vector<16x8xf32> -> vector<16x8xf32>
    %113 = vector.extract_strided_slice %10 {offsets = [2, 0], sizes = [1, 8], strides = [1, 1]} : vector<4x8xf32> to vector<1x8xf32>
    %114 = vector.broadcast %113 : vector<1x8xf32> to vector<16x8xf32>
    %115 = arith.addf %112, %114 : vector<16x8xf32>
    %116 = vector.shape_cast %103 : vector<16x8xf32> to vector<2x8x8xf32>
    %117 = arith.truncf %116 : vector<2x8x8xf32> to vector<2x8x8xbf16>
    %118 = vector.shape_cast %109 : vector<16x8xf32> to vector<2x8x8xf32>
    %119 = arith.truncf %118 : vector<2x8x8xf32> to vector<2x8x8xbf16>
    %120 = vector.shape_cast %115 : vector<16x8xf32> to vector<2x8x8xf32>
    %121 = arith.truncf %120 : vector<2x8x8xf32> to vector<2x8x8xbf16>
    "tpu.trace_start"() <{level = 10 : i32, message = "bqd,bkd->bqk"}> : () -> ()
    %cst_72 = arith.constant dense<0.000000e+00> : vector<2x8x8xf32>
    %122 = tpu.matmul %117, %119, %cst_72 {dimension_numbers = #tpu.dot_dimension_numbers<[2], [2], [1], [1], [0, 0, 0, 1, 1, 1], [0], [0]>} : vector<2x8x8xbf16>, vector<2x8x8xbf16>, vector<2x8x8xf32> -> vector<2x8x8xf32>
    "tpu.trace_stop"() : () -> ()
    %cst_73 = arith.constant dense<0xFF800000> : vector<2x8xf32>
    %123 = vector.multi_reduction <maximumf>, %122, %cst_73 [2] : vector<2x8x8xf32> to vector<2x8xf32>
    %124 = vector.shape_cast %123 : vector<2x8xf32> to vector<2x8x1xf32>
    %125 = vector.broadcast %124 : vector<2x8x1xf32> to vector<2x8x8xf32>
    %126 = arith.subf %122, %125 : vector<2x8x8xf32>
    %127 = math.exp %126 : vector<2x8x8xf32>
    %cst_74 = arith.constant dense<0.000000e+00> : vector<2x8xf32>
    %128 = vector.multi_reduction <add>, %127, %cst_74 [2] : vector<2x8x8xf32> to vector<2x8xf32>
    %129 = vector.shape_cast %128 : vector<2x8xf32> to vector<2x8x1xf32>
    %130 = tpu.reciprocal %129 {approx = true} : vector<2x8x1xf32> -> vector<2x8x1xf32>
    %131 = vector.broadcast %130 : vector<2x8x1xf32> to vector<2x8x8xf32>
    %132 = arith.mulf %127, %131 : vector<2x8x8xf32>
    %133 = arith.truncf %132 : vector<2x8x8xf32> to vector<2x8x8xbf16>
    "tpu.trace_start"() <{level = 10 : i32, message = "bqk,bkd->bqd"}> : () -> ()
    %cst_75 = arith.constant dense<0.000000e+00> : vector<2x8x8xf32>
    %134 = tpu.matmul %133, %121, %cst_75 {dimension_numbers = #tpu.dot_dimension_numbers<[2], [1], [1], [2], [0, 0, 0, 1, 1, 2], [0], [0]>} : vector<2x8x8xbf16>, vector<2x8x8xbf16>, vector<2x8x8xf32> -> vector<2x8x8xf32>
    "tpu.trace_stop"() : () -> ()
    %135 = vector.shape_cast %134 : vector<2x8x8xf32> to vector<16x8xf32>
    %136 = arith.truncf %135 : vector<16x8xf32> to vector<16x8xbf16>
    %c0_76 = arith.constant 0 : index
    %c2_77 = arith.constant 2 : index
    %c0_78 = arith.constant 0 : index
    %c0_79 = arith.constant 0 : index
    %137 = vector.load %arg8[%c0_76, %c2_77, %c0_78, %c0_79] : memref<1x4x8x32xbf16, #tpu.memory_space<vmem>>, vector<1x1x8x32xbf16>
    %138 = vector.shape_cast %137 : vector<1x1x8x32xbf16> to vector<8x32xbf16>
    %cst_80 = arith.constant dense<0.000000e+00> : vector<16x32xf32>
    %139 = tpu.matmul %136, %138, %cst_80 {dimension_numbers = #tpu.dot_dimension_numbers<[1], [0], [0], [1], [0, 0, 1, 1], [], []>} : vector<16x8xbf16>, vector<8x32xbf16>, vector<16x32xf32> -> vector<16x32xf32>
    %140 = arith.addf %97, %139 : vector<16x32xf32>
    %c0_81 = arith.constant 0 : index
    %c3 = arith.constant 3 : index
    %c0_82 = arith.constant 0 : index
    %c0_83 = arith.constant 0 : index
    %141 = vector.load %arg2[%c0_81, %c3, %c0_82, %c0_83] : memref<1x4x32x8xbf16, #tpu.memory_space<vmem>>, vector<1x1x32x8xbf16>
    %142 = vector.shape_cast %141 : vector<1x1x32x8xbf16> to vector<32x8xbf16>
    %cst_84 = arith.constant dense<0.000000e+00> : vector<16x8xf32>
    %143 = tpu.matmul %4, %142, %cst_84 {dimension_numbers = #tpu.dot_dimension_numbers<[1], [0], [0], [1], [0, 0, 1, 1], [], []>} : vector<16x32xbf16>, vector<32x8xbf16>, vector<16x8xf32> -> vector<16x8xf32>
    %144 = vector.extract_strided_slice %6 {offsets = [3, 0], sizes = [1, 8], strides = [1, 1]} : vector<4x8xf32> to vector<1x8xf32>
    %145 = vector.broadcast %144 : vector<1x8xf32> to vector<16x8xf32>
    %146 = arith.addf %143, %145 : vector<16x8xf32>
    %c0_85 = arith.constant 0 : index
    %c3_86 = arith.constant 3 : index
    %c0_87 = arith.constant 0 : index
    %c0_88 = arith.constant 0 : index
    %147 = vector.load %arg3[%c0_85, %c3_86, %c0_87, %c0_88] : memref<1x4x32x8xbf16, #tpu.memory_space<vmem>>, vector<1x1x32x8xbf16>
    %148 = vector.shape_cast %147 : vector<1x1x32x8xbf16> to vector<32x8xbf16>
    %cst_89 = arith.constant dense<0.000000e+00> : vector<16x8xf32>
    %149 = tpu.matmul %4, %148, %cst_89 {dimension_numbers = #tpu.dot_dimension_numbers<[1], [0], [0], [1], [0, 0, 1, 1], [], []>} : vector<16x32xbf16>, vector<32x8xbf16>, vector<16x8xf32> -> vector<16x8xf32>
    %150 = vector.extract_strided_slice %8 {offsets = [3, 0], sizes = [1, 8], strides = [1, 1]} : vector<4x8xf32> to vector<1x8xf32>
    %151 = vector.broadcast %150 : vector<1x8xf32> to vector<16x8xf32>
    %152 = arith.addf %149, %151 : vector<16x8xf32>
    %c0_90 = arith.constant 0 : index
    %c3_91 = arith.constant 3 : index
    %c0_92 = arith.constant 0 : index
    %c0_93 = arith.constant 0 : index
    %153 = vector.load %arg4[%c0_90, %c3_91, %c0_92, %c0_93] : memref<1x4x32x8xbf16, #tpu.memory_space<vmem>>, vector<1x1x32x8xbf16>
    %154 = vector.shape_cast %153 : vector<1x1x32x8xbf16> to vector<32x8xbf16>
    %cst_94 = arith.constant dense<0.000000e+00> : vector<16x8xf32>
    %155 = tpu.matmul %4, %154, %cst_94 {dimension_numbers = #tpu.dot_dimension_numbers<[1], [0], [0], [1], [0, 0, 1, 1], [], []>} : vector<16x32xbf16>, vector<32x8xbf16>, vector<16x8xf32> -> vector<16x8xf32>
    %156 = vector.extract_strided_slice %10 {offsets = [3, 0], sizes = [1, 8], strides = [1, 1]} : vector<4x8xf32> to vector<1x8xf32>
    %157 = vector.broadcast %156 : vector<1x8xf32> to vector<16x8xf32>
    %158 = arith.addf %155, %157 : vector<16x8xf32>
    %159 = vector.shape_cast %146 : vector<16x8xf32> to vector<2x8x8xf32>
    %160 = arith.truncf %159 : vector<2x8x8xf32> to vector<2x8x8xbf16>
    %161 = vector.shape_cast %152 : vector<16x8xf32> to vector<2x8x8xf32>
    %162 = arith.truncf %161 : vector<2x8x8xf32> to vector<2x8x8xbf16>
    %163 = vector.shape_cast %158 : vector<16x8xf32> to vector<2x8x8xf32>
    %164 = arith.truncf %163 : vector<2x8x8xf32> to vector<2x8x8xbf16>
    "tpu.trace_start"() <{level = 10 : i32, message = "bqd,bkd->bqk"}> : () -> ()
    %cst_95 = arith.constant dense<0.000000e+00> : vector<2x8x8xf32>
    %165 = tpu.matmul %160, %162, %cst_95 {dimension_numbers = #tpu.dot_dimension_numbers<[2], [2], [1], [1], [0, 0, 0, 1, 1, 1], [0], [0]>} : vector<2x8x8xbf16>, vector<2x8x8xbf16>, vector<2x8x8xf32> -> vector<2x8x8xf32>
    "tpu.trace_stop"() : () -> ()
    %cst_96 = arith.constant dense<0xFF800000> : vector<2x8xf32>
    %166 = vector.multi_reduction <maximumf>, %165, %cst_96 [2] : vector<2x8x8xf32> to vector<2x8xf32>
    %167 = vector.shape_cast %166 : vector<2x8xf32> to vector<2x8x1xf32>
    %168 = vector.broadcast %167 : vector<2x8x1xf32> to vector<2x8x8xf32>
    %169 = arith.subf %165, %168 : vector<2x8x8xf32>
    %170 = math.exp %169 : vector<2x8x8xf32>
    %cst_97 = arith.constant dense<0.000000e+00> : vector<2x8xf32>
    %171 = vector.multi_reduction <add>, %170, %cst_97 [2] : vector<2x8x8xf32> to vector<2x8xf32>
    %172 = vector.shape_cast %171 : vector<2x8xf32> to vector<2x8x1xf32>
    %173 = tpu.reciprocal %172 {approx = true} : vector<2x8x1xf32> -> vector<2x8x1xf32>
    %174 = vector.broadcast %173 : vector<2x8x1xf32> to vector<2x8x8xf32>
    %175 = arith.mulf %170, %174 : vector<2x8x8xf32>
    %176 = arith.truncf %175 : vector<2x8x8xf32> to vector<2x8x8xbf16>
    "tpu.trace_start"() <{level = 10 : i32, message = "bqk,bkd->bqd"}> : () -> ()
    %cst_98 = arith.constant dense<0.000000e+00> : vector<2x8x8xf32>
    %177 = tpu.matmul %176, %164, %cst_98 {dimension_numbers = #tpu.dot_dimension_numbers<[2], [1], [1], [2], [0, 0, 0, 1, 1, 2], [0], [0]>} : vector<2x8x8xbf16>, vector<2x8x8xbf16>, vector<2x8x8xf32> -> vector<2x8x8xf32>
    "tpu.trace_stop"() : () -> ()
    %178 = vector.shape_cast %177 : vector<2x8x8xf32> to vector<16x8xf32>
    %179 = arith.truncf %178 : vector<16x8xf32> to vector<16x8xbf16>
    %c0_99 = arith.constant 0 : index
    %c3_100 = arith.constant 3 : index
    %c0_101 = arith.constant 0 : index
    %c0_102 = arith.constant 0 : index
    %180 = vector.load %arg8[%c0_99, %c3_100, %c0_101, %c0_102] : memref<1x4x8x32xbf16, #tpu.memory_space<vmem>>, vector<1x1x8x32xbf16>
    %181 = vector.shape_cast %180 : vector<1x1x8x32xbf16> to vector<8x32xbf16>
    %cst_103 = arith.constant dense<0.000000e+00> : vector<16x32xf32>
    %182 = tpu.matmul %179, %181, %cst_103 {dimension_numbers = #tpu.dot_dimension_numbers<[1], [0], [0], [1], [0, 0, 1, 1], [], []>} : vector<16x8xbf16>, vector<8x32xbf16>, vector<16x32xf32> -> vector<16x32xf32>
    %183 = arith.addf %140, %182 : vector<16x32xf32>
    %c0_104 = arith.constant 0 : index
    %c0_105 = arith.constant 0 : index
    %c0_106 = arith.constant 0 : index
    %184 = vector.load %arg9[%c0_104, %c0_105, %c0_106] : memref<1x1x32xf32, #tpu.memory_space<vmem>>, vector<1x1x32xf32>
    %185 = vector.shape_cast %184 : vector<1x1x32xf32> to vector<1x32xf32>
    %186 = vector.broadcast %185 : vector<1x32xf32> to vector<16x32xf32>
    %187 = arith.addf %183, %186 : vector<16x32xf32>
    %188 = arith.addf %3, %187 : vector<16x32xf32>
    %c0_107 = arith.constant 0 : index
    %c0_108 = arith.constant 0 : index
    %c0_109 = arith.constant 0 : index
    %189 = vector.load %arg10[%c0_107, %c0_108, %c0_109] : memref<1x1x32xf32, #tpu.memory_space<vmem>>, vector<1x1x32xf32>
    %190 = vector.shape_cast %189 : vector<1x1x32xf32> to vector<1x32xf32>
    %c0_110 = arith.constant 0 : index
    %c0_111 = arith.constant 0 : index
    %c0_112 = arith.constant 0 : index
    %191 = vector.load %arg11[%c0_110, %c0_111, %c0_112] : memref<1x1x32xf32, #tpu.memory_space<vmem>>, vector<1x1x32xf32>
    %192 = vector.shape_cast %191 : vector<1x1x32xf32> to vector<1x32xf32>
    %cst_113 = arith.constant dense<0.000000e+00> : vector<16xf32>
    %193 = vector.multi_reduction <add>, %188, %cst_113 [1] : vector<16x32xf32> to vector<16xf32>
    %194 = vector.shape_cast %193 : vector<16xf32> to vector<16x1xf32>
    %cst_114 = arith.constant 3.200000e+01 : f32
    %195 = vector.broadcast %cst_114 : f32 to vector<16x1xf32>
    %196 = arith.divf %194, %195 : vector<16x1xf32>
    %197 = vector.broadcast %196 : vector<16x1xf32> to vector<16x32xf32>
    %198 = arith.subf %188, %197 : vector<16x32xf32>
    %199 = arith.mulf %198, %198 : vector<16x32xf32>
    %cst_115 = arith.constant dense<0.000000e+00> : vector<16xf32>
    %200 = vector.multi_reduction <add>, %199, %cst_115 [1] : vector<16x32xf32> to vector<16xf32>
    %201 = vector.shape_cast %200 : vector<16xf32> to vector<16x1xf32>
    %cst_116 = arith.constant 3.200000e+01 : f32
    %202 = vector.broadcast %cst_116 : f32 to vector<16x1xf32>
    %203 = arith.divf %201, %202 : vector<16x1xf32>
    %204 = vector.broadcast %196 : vector<16x1xf32> to vector<16x32xf32>
    %205 = arith.subf %188, %204 : vector<16x32xf32>
    %cst_117 = arith.constant 9.99999974E-6 : f32
    %206 = vector.broadcast %cst_117 : f32 to vector<16x1xf32>
    %207 = arith.addf %203, %206 : vector<16x1xf32>
    %208 = math.rsqrt %207 : vector<16x1xf32>
    %209 = vector.broadcast %208 : vector<16x1xf32> to vector<16x32xf32>
    %210 = arith.mulf %205, %209 : vector<16x32xf32>
    %211 = vector.broadcast %190 : vector<1x32xf32> to vector<16x32xf32>
    %212 = arith.mulf %210, %211 : vector<16x32xf32>
    %213 = vector.broadcast %192 : vector<1x32xf32> to vector<16x32xf32>
    %214 = arith.addf %212, %213 : vector<16x32xf32>
    %215 = arith.truncf %214 : vector<16x32xf32> to vector<16x32xbf16>
    %c0_118 = arith.constant 0 : index
    %c0_119 = arith.constant 0 : index
    %c0_120 = arith.constant 0 : index
    %216 = vector.load %arg12[%c0_118, %c0_119, %c0_120] : memref<1x32x64xbf16, #tpu.memory_space<vmem>>, vector<1x32x64xbf16>
    %217 = vector.shape_cast %216 : vector<1x32x64xbf16> to vector<32x64xbf16>
    %cst_121 = arith.constant dense<0.000000e+00> : vector<16x64xf32>
    %218 = tpu.matmul %215, %217, %cst_121 {dimension_numbers = #tpu.dot_dimension_numbers<[1], [0], [0], [1], [0, 0, 1, 1], [], []>} : vector<16x32xbf16>, vector<32x64xbf16>, vector<16x64xf32> -> vector<16x64xf32>
    %c0_122 = arith.constant 0 : index
    %c0_123 = arith.constant 0 : index
    %c0_124 = arith.constant 0 : index
    %219 = vector.load %arg13[%c0_122, %c0_123, %c0_124] : memref<1x1x64xf32, #tpu.memory_space<vmem>>, vector<1x1x64xf32>
    %220 = vector.shape_cast %219 : vector<1x1x64xf32> to vector<1x64xf32>
    %221 = vector.broadcast %220 : vector<1x64xf32> to vector<16x64xf32>
    %222 = arith.addf %218, %221 : vector<16x64xf32>
    %cst_125 = arith.constant 0.000000e+00 : f32
    %223 = vector.broadcast %cst_125 : f32 to vector<16x64xf32>
    %224 = arith.maximumf %222, %223 : vector<16x64xf32>
    %225 = arith.truncf %224 : vector<16x64xf32> to vector<16x64xbf16>
    %c0_126 = arith.constant 0 : index
    %c0_127 = arith.constant 0 : index
    %c0_128 = arith.constant 0 : index
    %226 = vector.load %arg14[%c0_126, %c0_127, %c0_128] : memref<1x64x32xbf16, #tpu.memory_space<vmem>>, vector<1x64x32xbf16>
    %227 = vector.shape_cast %226 : vector<1x64x32xbf16> to vector<64x32xbf16>
    %cst_129 = arith.constant dense<0.000000e+00> : vector<16x32xf32>
    %228 = tpu.matmul %225, %227, %cst_129 {dimension_numbers = #tpu.dot_dimension_numbers<[1], [0], [0], [1], [0, 0, 1, 1], [], []>} : vector<16x64xbf16>, vector<64x32xbf16>, vector<16x32xf32> -> vector<16x32xf32>
    %c0_130 = arith.constant 0 : index
    %c0_131 = arith.constant 0 : index
    %c0_132 = arith.constant 0 : index
    %229 = vector.load %arg15[%c0_130, %c0_131, %c0_132] : memref<1x1x32xf32, #tpu.memory_space<vmem>>, vector<1x1x32xf32>
    %230 = vector.shape_cast %229 : vector<1x1x32xf32> to vector<1x32xf32>
    %231 = vector.broadcast %230 : vector<1x32xf32> to vector<16x32xf32>
    %232 = arith.addf %228, %231 : vector<16x32xf32>
    %233 = arith.addf %214, %232 : vector<16x32xf32>
    %c0_133 = arith.constant 0 : index
    %c0_134 = arith.constant 0 : index
    %c0_135 = arith.constant 0 : index
    %234 = vector.load %arg16[%c0_133, %c0_134, %c0_135] : memref<1x1x32xf32, #tpu.memory_space<vmem>>, vector<1x1x32xf32>
    %235 = vector.shape_cast %234 : vector<1x1x32xf32> to vector<1x32xf32>
    %c0_136 = arith.constant 0 : index
    %c0_137 = arith.constant 0 : index
    %c0_138 = arith.constant 0 : index
    %236 = vector.load %arg17[%c0_136, %c0_137, %c0_138] : memref<1x1x32xf32, #tpu.memory_space<vmem>>, vector<1x1x32xf32>
    %237 = vector.shape_cast %236 : vector<1x1x32xf32> to vector<1x32xf32>
    %cst_139 = arith.constant dense<0.000000e+00> : vector<16xf32>
    %238 = vector.multi_reduction <add>, %233, %cst_139 [1] : vector<16x32xf32> to vector<16xf32>
    %239 = vector.shape_cast %238 : vector<16xf32> to vector<16x1xf32>
    %cst_140 = arith.constant 3.200000e+01 : f32
    %240 = vector.broadcast %cst_140 : f32 to vector<16x1xf32>
    %241 = arith.divf %239, %240 : vector<16x1xf32>
    %242 = vector.broadcast %241 : vector<16x1xf32> to vector<16x32xf32>
    %243 = arith.subf %233, %242 : vector<16x32xf32>
    %244 = arith.mulf %243, %243 : vector<16x32xf32>
    %cst_141 = arith.constant dense<0.000000e+00> : vector<16xf32>
    %245 = vector.multi_reduction <add>, %244, %cst_141 [1] : vector<16x32xf32> to vector<16xf32>
    %246 = vector.shape_cast %245 : vector<16xf32> to vector<16x1xf32>
    %cst_142 = arith.constant 3.200000e+01 : f32
    %247 = vector.broadcast %cst_142 : f32 to vector<16x1xf32>
    %248 = arith.divf %246, %247 : vector<16x1xf32>
    %249 = vector.broadcast %241 : vector<16x1xf32> to vector<16x32xf32>
    %250 = arith.subf %233, %249 : vector<16x32xf32>
    %cst_143 = arith.constant 9.99999974E-6 : f32
    %251 = vector.broadcast %cst_143 : f32 to vector<16x1xf32>
    %252 = arith.addf %248, %251 : vector<16x1xf32>
    %253 = math.rsqrt %252 : vector<16x1xf32>
    %254 = vector.broadcast %253 : vector<16x1xf32> to vector<16x32xf32>
    %255 = arith.mulf %250, %254 : vector<16x32xf32>
    %256 = vector.broadcast %235 : vector<1x32xf32> to vector<16x32xf32>
    %257 = arith.mulf %255, %256 : vector<16x32xf32>
    %258 = vector.broadcast %237 : vector<1x32xf32> to vector<16x32xf32>
    %259 = arith.addf %257, %258 : vector<16x32xf32>
    %c0_144 = arith.constant 0 : index
    %c0_145 = arith.constant 0 : index
    %260 = vector.load %arg23[%c0_144, %c0_145] : memref<16x32xf32, #tpu.memory_space<vmem>>, vector<16x32xf32>
    tpu.vector_store %arg23[%c0_144, %c0_145], %259 {strides = array<i32>} : memref<16x32xf32, #tpu.memory_space<vmem>>, vector<16x32xf32>,
    %c1_i32 = arith.constant 1 : i32
    %261 = arith.cmpi eq, %arg0, %c1_i32 : i32
    %262 = arith.extui %261 : i1 to i32
    %c0_i32_146 = arith.constant 0 : i32
    %263 = arith.cmpi ne, %262, %c0_i32_146 : i32
    scf.if %263 {
      %c0_147 = arith.constant 0 : index
      %c0_148 = arith.constant 0 : index
      %264 = vector.load %arg18[%c0_147, %c0_148] : memref<1x32xf32, #tpu.memory_space<vmem>>, vector<1x32xf32>
      %c0_149 = arith.constant 0 : index
      %c0_150 = arith.constant 0 : index
      %265 = vector.load %arg19[%c0_149, %c0_150] : memref<1x32xf32, #tpu.memory_space<vmem>>, vector<1x32xf32>
      %cst_151 = arith.constant dense<0.000000e+00> : vector<16xf32>
      %266 = vector.multi_reduction <add>, %259, %cst_151 [1] : vector<16x32xf32> to vector<16xf32>
      %267 = vector.shape_cast %266 : vector<16xf32> to vector<16x1xf32>
      %cst_152 = arith.constant 3.200000e+01 : f32
      %268 = vector.broadcast %cst_152 : f32 to vector<16x1xf32>
      %269 = arith.divf %267, %268 : vector<16x1xf32>
      %270 = vector.broadcast %269 : vector<16x1xf32> to vector<16x32xf32>
      %271 = arith.subf %259, %270 : vector<16x32xf32>
      %272 = arith.mulf %271, %271 : vector<16x32xf32>
      %cst_153 = arith.constant dense<0.000000e+00> : vector<16xf32>
      %273 = vector.multi_reduction <add>, %272, %cst_153 [1] : vector<16x32xf32> to vector<16xf32>
      %274 = vector.shape_cast %273 : vector<16xf32> to vector<16x1xf32>
      %cst_154 = arith.constant 3.200000e+01 : f32
      %275 = vector.broadcast %cst_154 : f32 to vector<16x1xf32>
      %276 = arith.divf %274, %275 : vector<16x1xf32>
      %277 = vector.broadcast %269 : vector<16x1xf32> to vector<16x32xf32>
      %278 = arith.subf %259, %277 : vector<16x32xf32>
      %cst_155 = arith.constant 9.99999974E-6 : f32
      %279 = vector.broadcast %cst_155 : f32 to vector<16x1xf32>
      %280 = arith.addf %276, %279 : vector<16x1xf32>
      %281 = math.rsqrt %280 : vector<16x1xf32>
      %282 = vector.broadcast %281 : vector<16x1xf32> to vector<16x32xf32>
      %283 = arith.mulf %278, %282 : vector<16x32xf32>
      %284 = vector.broadcast %264 : vector<1x32xf32> to vector<16x32xf32>
      %285 = arith.mulf %283, %284 : vector<16x32xf32>
      %286 = vector.broadcast %265 : vector<1x32xf32> to vector<16x32xf32>
      %287 = arith.addf %285, %286 : vector<16x32xf32>
      %288 = arith.truncf %287 : vector<16x32xf32> to vector<16x32xbf16>
      %c0_156 = arith.constant 0 : index
      %c0_157 = arith.constant 0 : index
      %289 = vector.load %arg20[%c0_156, %c0_157] : memref<32x128xbf16, #tpu.memory_space<vmem>>, vector<32x128xbf16>
      %cst_158 = arith.constant dense<0.000000e+00> : vector<16x128xf32>
      %290 = tpu.matmul %288, %289, %cst_158 {dimension_numbers = #tpu.dot_dimension_numbers<[1], [0], [0], [1], [0, 0, 1, 1], [], []>} : vector<16x32xbf16>, vector<32x128xbf16>, vector<16x128xf32> -> vector<16x128xf32>
      %c0_159 = arith.constant 0 : index
      %c0_160 = arith.constant 0 : index
      %291 = vector.load %arg21[%c0_159, %c0_160] : memref<1x128xf32, #tpu.memory_space<vmem>>, vector<1x128xf32>
      %292 = vector.broadcast %291 : vector<1x128xf32> to vector<16x128xf32>
      %293 = arith.addf %290, %292 : vector<16x128xf32>
      %c0_161 = arith.constant 0 : index
      %c0_162 = arith.constant 0 : index
      %294 = vector.load %arg22[%c0_161, %c0_162] : memref<16x128xf32, #tpu.memory_space<vmem>>, vector<16x128xf32>
      tpu.vector_store %arg22[%c0_161, %c0_162], %293 {strides = array<i32>} : memref<16x128xf32, #tpu.memory_space<vmem>>, vector<16x128xf32>,
    } else {
    }
    return
  }
  func.func @transform_0(%arg0: i32) -> (i32, i32) {
    %c0_i32 = arith.constant 0 : i32
    %c0_i32_0 = arith.constant 0 : i32
    %c0_i32_1 = arith.constant 0 : i32
    return %c0_i32, %c0_i32_0 : i32, i32
  }
  func.func @transform_1(%arg0: i32) -> (i32, i32, i32, i32) {
    %c0_i32 = arith.constant 0 : i32
    %c0_i32_0 = arith.constant 0 : i32
    %c0_i32_1 = arith.constant 0 : i32
    %c0_i32_2 = arith.constant 0 : i32
    return %arg0, %c0_i32, %c0_i32_0, %c0_i32_1 : i32, i32, i32, i32
  }
  func.func @transform_2(%arg0: i32) -> (i32, i32, i32, i32) {
    %c0_i32 = arith.constant 0 : i32
    %c0_i32_0 = arith.constant 0 : i32
    %c0_i32_1 = arith.constant 0 : i32
    %c0_i32_2 = arith.constant 0 : i32
    return %arg0, %c0_i32, %c0_i32_0, %c0_i32_1 : i32, i32, i32, i32
  }
  func.func @transform_3(%arg0: i32) -> (i32, i32, i32, i32) {
    %c0_i32 = arith.constant 0 : i32
    %c0_i32_0 = arith.constant 0 : i32
    %c0_i32_1 = arith.constant 0 : i32
    %c0_i32_2 = arith.constant 0 : i32
    return %arg0, %c0_i32, %c0_i32_0, %c0_i32_1 : i32, i32, i32, i32
  }
  func.func @transform_4(%arg0: i32) -> (i32, i32, i32) {
    %c0_i32 = arith.constant 0 : i32
    %c0_i32_0 = arith.constant 0 : i32
    %c0_i32_1 = arith.constant 0 : i32
    return %arg0, %c0_i32, %c0_i32_0 : i32, i32, i32
  }
  func.func @transform_5(%arg0: i32) -> (i32, i32, i32) {
    %c0_i32 = arith.constant 0 : i32
    %c0_i32_0 = arith.constant 0 : i32
    %c0_i32_1 = arith.constant 0 : i32
    return %arg0, %c0_i32, %c0_i32_0 : i32, i32, i32
  }
  func.func @transform_6(%arg0: i32) -> (i32, i32, i32) {
    %c0_i32 = arith.constant 0 : i32
    %c0_i32_0 = arith.constant 0 : i32
    %c0_i32_1 = arith.constant 0 : i32
    return %arg0, %c0_i32, %c0_i32_0 : i32, i32, i32
  }
  func.func @transform_7(%arg0: i32) -> (i32, i32, i32, i32) {
    %c0_i32 = arith.constant 0 : i32
    %c0_i32_0 = arith.constant 0 : i32
    %c0_i32_1 = arith.constant 0 : i32
    %c0_i32_2 = arith.constant 0 : i32
    return %arg0, %c0_i32, %c0_i32_0, %c0_i32_1 : i32, i32, i32, i32
  }
  func.func @transform_8(%arg0: i32) -> (i32, i32, i32) {
    %c0_i32 = arith.constant 0 : i32
    %c0_i32_0 = arith.constant 0 : i32
    %c0_i32_1 = arith.constant 0 : i32
    return %arg0, %c0_i32, %c0_i32_0 : i32, i32, i32
  }
  func.func @transform_9(%arg0: i32) -> (i32, i32, i32) {
    %c0_i32 = arith.constant 0 : i32
    %c0_i32_0 = arith.constant 0 : i32
    %c0_i32_1 = arith.constant 0 : i32
    return %arg0, %c0_i32, %c0_i32_0 : i32, i32, i32
  }
  func.func @transform_10(%arg0: i32) -> (i32, i32, i32) {
    %c0_i32 = arith.constant 0 : i32
    %c0_i32_0 = arith.constant 0 : i32
    %c0_i32_1 = arith.constant 0 : i32
    return %arg0, %c0_i32, %c0_i32_0 : i32, i32, i32
  }
  func.func @transform_11(%arg0: i32) -> (i32, i32, i32) {
    %c0_i32 = arith.constant 0 : i32
    %c0_i32_0 = arith.constant 0 : i32
    %c0_i32_1 = arith.constant 0 : i32
    return %arg0, %c0_i32, %c0_i32_0 : i32, i32, i32
  }
  func.func @transform_12(%arg0: i32) -> (i32, i32, i32) {
    %c0_i32 = arith.constant 0 : i32
    %c0_i32_0 = arith.constant 0 : i32
    %c0_i32_1 = arith.constant 0 : i32
    return %arg0, %c0_i32, %c0_i32_0 : i32, i32, i32
  }
  func.func @transform_13(%arg0: i32) -> (i32, i32, i32) {
    %c0_i32 = arith.constant 0 : i32
    %c0_i32_0 = arith.constant 0 : i32
    %c0_i32_1 = arith.constant 0 : i32
    return %arg0, %c0_i32, %c0_i32_0 : i32, i32, i32
  }
  func.func @transform_14(%arg0: i32) -> (i32, i32, i32) {
    %c0_i32 = arith.constant 0 : i32
    %c0_i32_0 = arith.constant 0 : i32
    %c0_i32_1 = arith.constant 0 : i32
    return %arg0, %c0_i32, %c0_i32_0 : i32, i32, i32
  }
  func.func @transform_15(%arg0: i32) -> (i32, i32, i32) {
    %c0_i32 = arith.constant 0 : i32
    %c0_i32_0 = arith.constant 0 : i32
    %c0_i32_1 = arith.constant 0 : i32
    return %arg0, %c0_i32, %c0_i32_0 : i32, i32, i32
  }
  func.func @transform_16(%arg0: i32) -> (i32, i32, i32) {
    %c0_i32 = arith.constant 0 : i32
    %c0_i32_0 = arith.constant 0 : i32
    %c0_i32_1 = arith.constant 0 : i32
    return %arg0, %c0_i32, %c0_i32_0 : i32, i32, i32
  }
  func.func @transform_17(%arg0: i32) -> (i32, i32) {
    %c0_i32 = arith.constant 0 : i32
    %c0_i32_0 = arith.constant 0 : i32
    %c0_i32_1 = arith.constant 0 : i32
    return %c0_i32, %c0_i32_0 : i32, i32
  }
  func.func @transform_18(%arg0: i32) -> (i32, i32) {
    %c0_i32 = arith.constant 0 : i32
    %c0_i32_0 = arith.constant 0 : i32
    %c0_i32_1 = arith.constant 0 : i32
    return %c0_i32, %c0_i32_0 : i32, i32
  }
  func.func @transform_19(%arg0: i32) -> (i32, i32) {
    %c0_i32 = arith.constant 0 : i32
    %c0_i32_0 = arith.constant 0 : i32
    %c0_i32_1 = arith.constant 0 : i32
    return %c0_i32, %c0_i32_0 : i32, i32
  }
  func.func @transform_20(%arg0: i32) -> (i32, i32) {
    %c0_i32 = arith.constant 0 : i32
    %c0_i32_0 = arith.constant 0 : i32
    %c0_i32_1 = arith.constant 0 : i32
    return %c0_i32, %c0_i32_0 : i32, i32
  }
  func.func @transform_21(%arg0: i32) -> (i32, i32) {
    %c0_i32 = arith.constant 0 : i32
    %c0_i32_0 = arith.constant 0 : i32
    %c0_i32_1 = arith.constant 0 : i32
    return %c0_i32, %c0_i32_0 : i32, i32
  }
}

</mosaic_0001>

<llo_original>
// kernel: transformer_forward.1
$region0: #{transformer_forward.1}
  #allocation0 [shape = 'u32[]', space=smem, size = 0x4, offset = 0x4, fixed_abs, tag = 'smem constant byte address 0x4 - core index']
  #allocation1 [shape = 'u32[144,128]{1,0:T(1,128)}', space=vmem, size = 0x12000, scoped, tag = 'internal scratch']
  #allocation2 [shape = 'f32[16,32]{1,0:T(8,128)}', space=vmem, size = 0x2000, scoped, tag = 'scratch operand']
  %s0 = inlined_call_operand.vmem [shape: f32[16,32], index: 0, kind: input, shape index: {}]
  %s1 = inlined_call_operand.vmem [shape: bf16[2,4,32,8], index: 1, kind: input, shape index: {}]
  %s2 = inlined_call_operand.vmem [shape: bf16[2,4,32,8], index: 2, kind: input, shape index: {}]
  %s3 = inlined_call_operand.vmem [shape: bf16[2,4,32,8], index: 3, kind: input, shape index: {}]
  %s4 = inlined_call_operand.vmem [shape: f32[2,4,8], index: 4, kind: input, shape index: {}]
  %s5 = inlined_call_operand.vmem [shape: f32[2,4,8], index: 5, kind: input, shape index: {}]
  %s6 = inlined_call_operand.vmem [shape: f32[2,4,8], index: 6, kind: input, shape index: {}]
  %s7 = inlined_call_operand.vmem [shape: bf16[2,4,8,32], index: 7, kind: input, shape index: {}]
  %s8 = inlined_call_operand.vmem [shape: f32[2,1,32], index: 8, kind: input, shape index: {}]
  %s9 = inlined_call_operand.vmem [shape: f32[2,1,32], index: 9, kind: input, shape index: {}]
  %s10 = inlined_call_operand.vmem [shape: f32[2,1,32], index: 10, kind: input, shape index: {}]
  %s11 = inlined_call_operand.vmem [shape: bf16[2,32,64], index: 11, kind: input, shape index: {}]
  %s12 = inlined_call_operand.vmem [shape: f32[2,1,64], index: 12, kind: input, shape index: {}]
  %s13 = inlined_call_operand.vmem [shape: bf16[2,64,32], index: 13, kind: input, shape index: {}]
  %s14 = inlined_call_operand.vmem [shape: f32[2,1,32], index: 14, kind: input, shape index: {}]
  %s15 = inlined_call_operand.vmem [shape: f32[2,1,32], index: 15, kind: input, shape index: {}]
  %s16 = inlined_call_operand.vmem [shape: f32[2,1,32], index: 16, kind: input, shape index: {}]
  %s17 = inlined_call_operand.vmem [shape: f32[1,32], index: 17, kind: input, shape index: {}]
  %s18 = inlined_call_operand.vmem [shape: f32[1,32], index: 18, kind: input, shape index: {}]
  %s19 = inlined_call_operand.vmem [shape: bf16[32,128], index: 19, kind: input, shape index: {}]
  %s20 = inlined_call_operand.vmem [shape: f32[1,128], index: 20, kind: input, shape index: {}]
  %s21 = inlined_call_operand.vmem [shape: f32[16,128], index: 21, kind: output, shape index: {}]
  %s22 = sld [smem:[#allocation0]]
  $region125: #{transformer_forward.1} parent=0
    _
  %s24 = ssub.s32 1, %s22
  %s25 = scalar_select 0, %s24, %s22
  loop: start=0, step=1, limit=4
  $region2: #{transformer_forward.1} parent=0 // loop_pre_header
    _
  $region3: #{transformer_forward.1} parent=0 // loop_header
    %s27 = sphi 0, %s31
    %p28 = scmp.ge.s32.totalorder %s27, 4
    %s35 = sphi 0, %s35
    %s37 = sphi 0, %s35
    %s38 = sphi 0, %s37
    %s52 = sphi 0, %s38
    %s58 = sphi 0, %s60
    %s61 = sphi 0, %s58
    %s62 = sphi 0, %s61
    %s78 = sphi 0, %s62
    %s84 = sphi 0, %s86
    %s87 = sphi 0, %s84
    %s88 = sphi 0, %s87
    %s104 = sphi 0, %s88
    %s110 = sphi 0, %s112
    %s113 = sphi 0, %s110
    %s114 = sphi 0, %s113
    %s130 = sphi 0, %s114
    %s136 = sphi 0, %s138
    %s139 = sphi 0, %s136
    %s140 = sphi 0, %s139
    %s156 = sphi 0, %s140
    %s162 = sphi 0, %s164
    %s165 = sphi 0, %s162
    %s166 = sphi 0, %s165
    %s182 = sphi 0, %s166
    %s188 = sphi 0, %s190
    %s191 = sphi 0, %s188
    %s192 = sphi 0, %s191
    %s208 = sphi 0, %s192
    %s214 = sphi 0, %s216
    %s217 = sphi 0, %s214
    %s218 = sphi 0, %s217
    %s234 = sphi 0, %s218
    %s240 = sphi 0, %s242
    %s243 = sphi 0, %s240
    %s244 = sphi 0, %s243
    %s260 = sphi 0, %s244
    %s266 = sphi 0, %s268
    %s269 = sphi 0, %s266
    %s270 = sphi 0, %s269
    %s286 = sphi 0, %s270
    %s292 = sphi 0, %s294
    %s295 = sphi 0, %s292
    %s296 = sphi 0, %s295
    %s312 = sphi 0, %s296
    %s318 = sphi 0, %s320
    %s321 = sphi 0, %s318
    %s322 = sphi 0, %s321
    %s338 = sphi 0, %s322
    %s344 = sphi 0, %s346
    %s347 = sphi 0, %s344
    %s348 = sphi 0, %s347
    %s364 = sphi 0, %s348
    %s370 = sphi 0, %s372
    %s373 = sphi 0, %s370
    %s374 = sphi 0, %s373
    %s390 = sphi 0, %s374
    %s396 = sphi 0, %s398
    %s399 = sphi 0, %s396
    %s400 = sphi 0, %s399
    %s416 = sphi 0, %s400
    %s422 = sphi 0, %s424
    %s425 = sphi 0, %s422
    %s426 = sphi 0, %s425
    %s442 = sphi 0, %s426
    %s448 = sphi 0, %s450
    %s451 = sphi 0, %s448
    %s452 = sphi 0, %s451
    %s468 = sphi 0, %s452
    %s472 = sphi 0, %s472
    %s474 = sphi 0, %s472
    %s475 = sphi 0, %s474
    %s489 = sphi 0, %s475
    %s493 = sphi 0, %s493
    %s495 = sphi 0, %s493
    %s496 = sphi 0, %s495
    %s510 = sphi 0, %s496
    %s514 = sphi 0, %s514
    %s516 = sphi 0, %s514
    %s517 = sphi 0, %s516
    %s531 = sphi 0, %s517
    %s535 = sphi 0, %s535
    %s537 = sphi 0, %s535
    %s538 = sphi 0, %s537
    %s552 = sphi 0, %s538
    %s556 = sphi 0, %s556
    %s558 = sphi 0, %s556
    %s559 = sphi 0, %s558
    %s573 = sphi 0, %s559
  $region4: #{transformer_forward.1} parent=0 // loop_header_branch
    %30 = sbr.rel (%p28) target = $region8
  $region5: #{transformer_forward.1} parent=0 // loop_body
    %s32 = ssub.s32 %s27, 1
    %s33 = ssub.s32 %s27, 2
    %s34 = sadd.s32 %s27, 1
    %s36 = sadd.s32 %s35, 1
    %p39 = scmp.eq.s32.totalorder %s27, 1
    %p40 = scmp.ne.s32.totalorder %s35, %s37
    %p41 = scmp.eq.s32.totalorder %s27, 0
    %p42 = por %p40, %p41
    %p43 = scmp.ne.s32.totalorder %s35, %s37
    %p44 = scmp.eq.s32.totalorder %s32, 1
    %p45 = por %p43, %p44
    %p46 = scmp.ne.s32.totalorder %s37, %s38
    %p47 = scmp.eq.s32.totalorder %s32, 0
    %p48 = por %p46, %p47
    %p49 = scmp.ne.s32.totalorder %s37, %s38
    %p50 = scmp.eq.s32.totalorder %s33, 1
    %p51 = por %p49, %p50
    %p53 = scmp.ne.s32.totalorder %s38, %s52
    %p54 = scmp.eq.s32.totalorder %s33, 0
    %p55 = por %p53, %p54
    %s56 = ssub.s32 %s27, %s34
    %p57 = scmp.eq.s32.totalorder %s56, 0
    %s59 = sadd.s32 %s58, 1
    %s60 = scalar_select %p57, %s58, %s59
    %p63 = pneg %p57
    %p64 = scmp.eq.s32.totalorder %s27, 1
    %p65 = por %p63, %p64
    %p66 = scmp.ne.s32.totalorder %s58, %s61
    %p67 = scmp.eq.s32.totalorder %s27, 0
    %p68 = por %p66, %p67
    %p69 = scmp.ne.s32.totalorder %s58, %s61
    %p70 = scmp.eq.s32.totalorder %s32, 1
    %p71 = por %p69, %p70
    %p72 = scmp.ne.s32.totalorder %s61, %s62
    %p73 = scmp.eq.s32.totalorder %s32, 0
    %p74 = por %p72, %p73
    %p75 = scmp.ne.s32.totalorder %s61, %s62
    %p76 = scmp.eq.s32.totalorder %s33, 1
    %p77 = por %p75, %p76
    %p79 = scmp.ne.s32.totalorder %s62, %s78
    %p80 = scmp.eq.s32.totalorder %s33, 0
    %p81 = por %p79, %p80
    %s82 = ssub.s32 %s27, %s34
    %p83 = scmp.eq.s32.totalorder %s82, 0
    %s85 = sadd.s32 %s84, 1
    %s86 = scalar_select %p83, %s84, %s85
    %p89 = pneg %p83
    %p90 = scmp.eq.s32.totalorder %s27, 1
    %p91 = por %p89, %p90
    %p92 = scmp.ne.s32.totalorder %s84, %s87
    %p93 = scmp.eq.s32.totalorder %s27, 0
    %p94 = por %p92, %p93
    %p95 = scmp.ne.s32.totalorder %s84, %s87
    %p96 = scmp.eq.s32.totalorder %s32, 1
    %p97 = por %p95, %p96
    %p98 = scmp.ne.s32.totalorder %s87, %s88
    %p99 = scmp.eq.s32.totalorder %s32, 0
    %p100 = por %p98, %p99
    %p101 = scmp.ne.s32.totalorder %s87, %s88
    %p102 = scmp.eq.s32.totalorder %s33, 1
    %p103 = por %p101, %p102
    %p105 = scmp.ne.s32.totalorder %s88, %s104
    %p106 = scmp.eq.s32.totalorder %s33, 0
    %p107 = por %p105, %p106
    %s108 = ssub.s32 %s27, %s34
    %p109 = scmp.eq.s32.totalorder %s108, 0
    %s111 = sadd.s32 %s110, 1
    %s112 = scalar_select %p109, %s110, %s111
    %p115 = pneg %p109
    %p116 = scmp.eq.s32.totalorder %s27, 1
    %p117 = por %p115, %p116
    %p118 = scmp.ne.s32.totalorder %s110, %s113
    %p119 = scmp.eq.s32.totalorder %s27, 0
    %p120 = por %p118, %p119
    %p121 = scmp.ne.s32.totalorder %s110, %s113
    %p122 = scmp.eq.s32.totalorder %s32, 1
    %p123 = por %p121, %p122
    %p124 = scmp.ne.s32.totalorder %s113, %s114
    %p125 = scmp.eq.s32.totalorder %s32, 0
    %p126 = por %p124, %p125
    %p127 = scmp.ne.s32.totalorder %s113, %s114
    %p128 = scmp.eq.s32.totalorder %s33, 1
    %p129 = por %p127, %p128
    %p131 = scmp.ne.s32.totalorder %s114, %s130
    %p132 = scmp.eq.s32.totalorder %s33, 0
    %p133 = por %p131, %p132
    %s134 = ssub.s32 %s27, %s34
    %p135 = scmp.eq.s32.totalorder %s134, 0
    %s137 = sadd.s32 %s136, 1
    %s138 = scalar_select %p135, %s136, %s137
    %p141 = pneg %p135
    %p142 = scmp.eq.s32.totalorder %s27, 1
    %p143 = por %p141, %p142
    %p144 = scmp.ne.s32.totalorder %s136, %s139
    %p145 = scmp.eq.s32.totalorder %s27, 0
    %p146 = por %p144, %p145
    %p147 = scmp.ne.s32.totalorder %s136, %s139
    %p148 = scmp.eq.s32.totalorder %s32, 1
    %p149 = por %p147, %p148
    %p150 = scmp.ne.s32.totalorder %s139, %s140
    %p151 = scmp.eq.s32.totalorder %s32, 0
    %p152 = por %p150, %p151
    %p153 = scmp.ne.s32.totalorder %s139, %s140
    %p154 = scmp.eq.s32.totalorder %s33, 1
    %p155 = por %p153, %p154
    %p157 = scmp.ne.s32.totalorder %s140, %s156
    %p158 = scmp.eq.s32.totalorder %s33, 0
    %p159 = por %p157, %p158
    %s160 = ssub.s32 %s27, %s34
    %p161 = scmp.eq.s32.totalorder %s160, 0
    %s163 = sadd.s32 %s162, 1
    %s164 = scalar_select %p161, %s162, %s163
    %p167 = pneg %p161
    %p168 = scmp.eq.s32.totalorder %s27, 1
    %p169 = por %p167, %p168
    %p170 = scmp.ne.s32.totalorder %s162, %s165
    %p171 = scmp.eq.s32.totalorder %s27, 0
    %p172 = por %p170, %p171
    %p173 = scmp.ne.s32.totalorder %s162, %s165
    %p174 = scmp.eq.s32.totalorder %s32, 1
    %p175 = por %p173, %p174
    %p176 = scmp.ne.s32.totalorder %s165, %s166
    %p177 = scmp.eq.s32.totalorder %s32, 0
    %p178 = por %p176, %p177
    %p179 = scmp.ne.s32.totalorder %s165, %s166
    %p180 = scmp.eq.s32.totalorder %s33, 1
    %p181 = por %p179, %p180
    %p183 = scmp.ne.s32.totalorder %s166, %s182
    %p184 = scmp.eq.s32.totalorder %s33, 0
    %p185 = por %p183, %p184
    %s186 = ssub.s32 %s27, %s34
    %p187 = scmp.eq.s32.totalorder %s186, 0
    %s189 = sadd.s32 %s188, 1
    %s190 = scalar_select %p187, %s188, %s189
    %p193 = pneg %p187
    %p194 = scmp.eq.s32.totalorder %s27, 1
    %p195 = por %p193, %p194
    %p196 = scmp.ne.s32.totalorder %s188, %s191
    %p197 = scmp.eq.s32.totalorder %s27, 0
    %p198 = por %p196, %p197
    %p199 = scmp.ne.s32.totalorder %s188, %s191
    %p200 = scmp.eq.s32.totalorder %s32, 1
    %p201 = por %p199, %p200
    %p202 = scmp.ne.s32.totalorder %s191, %s192
    %p203 = scmp.eq.s32.totalorder %s32, 0
    %p204 = por %p202, %p203
    %p205 = scmp.ne.s32.totalorder %s191, %s192
    %p206 = scmp.eq.s32.totalorder %s33, 1
    %p207 = por %p205, %p206
    %p209 = scmp.ne.s32.totalorder %s192, %s208
    %p210 = scmp.eq.s32.totalorder %s33, 0
    %p211 = por %p209, %p210
    %s212 = ssub.s32 %s27, %s34
    %p213 = scmp.eq.s32.totalorder %s212, 0
    %s215 = sadd.s32 %s214, 1
    %s216 = scalar_select %p213, %s214, %s215
    %p219 = pneg %p213
    %p220 = scmp.eq.s32.totalorder %s27, 1
    %p221 = por %p219, %p220
    %p222 = scmp.ne.s32.totalorder %s214, %s217
    %p223 = scmp.eq.s32.totalorder %s27, 0
    %p224 = por %p222, %p223
    %p225 = scmp.ne.s32.totalorder %s214, %s217
    %p226 = scmp.eq.s32.totalorder %s32, 1
    %p227 = por %p225, %p226
    %p228 = scmp.ne.s32.totalorder %s217, %s218
    %p229 = scmp.eq.s32.totalorder %s32, 0
    %p230 = por %p228, %p229
    %p231 = scmp.ne.s32.totalorder %s217, %s218
    %p232 = scmp.eq.s32.totalorder %s33, 1
    %p233 = por %p231, %p232
    %p235 = scmp.ne.s32.totalorder %s218, %s234
    %p236 = scmp.eq.s32.totalorder %s33, 0
    %p237 = por %p235, %p236
    %s238 = ssub.s32 %s27, %s34
    %p239 = scmp.eq.s32.totalorder %s238, 0
    %s241 = sadd.s32 %s240, 1
    %s242 = scalar_select %p239, %s240, %s241
    %p245 = pneg %p239
    %p246 = scmp.eq.s32.totalorder %s27, 1
    %p247 = por %p245, %p246
    %p248 = scmp.ne.s32.totalorder %s240, %s243
    %p249 = scmp.eq.s32.totalorder %s27, 0
    %p250 = por %p248, %p249
    %p251 = scmp.ne.s32.totalorder %s240, %s243
    %p252 = scmp.eq.s32.totalorder %s32, 1
    %p253 = por %p251, %p252
    %p254 = scmp.ne.s32.totalorder %s243, %s244
    %p255 = scmp.eq.s32.totalorder %s32, 0
    %p256 = por %p254, %p255
    %p257 = scmp.ne.s32.totalorder %s243, %s244
    %p258 = scmp.eq.s32.totalorder %s33, 1
    %p259 = por %p257, %p258
    %p261 = scmp.ne.s32.totalorder %s244, %s260
    %p262 = scmp.eq.s32.totalorder %s33, 0
    %p263 = por %p261, %p262
    %s264 = ssub.s32 %s27, %s34
    %p265 = scmp.eq.s32.totalorder %s264, 0
    %s267 = sadd.s32 %s266, 1
    %s268 = scalar_select %p265, %s266, %s267
    %p271 = pneg %p265
    %p272 = scmp.eq.s32.totalorder %s27, 1
    %p273 = por %p271, %p272
    %p274 = scmp.ne.s32.totalorder %s266, %s269
    %p275 = scmp.eq.s32.totalorder %s27, 0
    %p276 = por %p274, %p275
    %p277 = scmp.ne.s32.totalorder %s266, %s269
    %p278 = scmp.eq.s32.totalorder %s32, 1
    %p279 = por %p277, %p278
    %p280 = scmp.ne.s32.totalorder %s269, %s270
    %p281 = scmp.eq.s32.totalorder %s32, 0
    %p282 = por %p280, %p281
    %p283 = scmp.ne.s32.totalorder %s269, %s270
    %p284 = scmp.eq.s32.totalorder %s33, 1
    %p285 = por %p283, %p284
    %p287 = scmp.ne.s32.totalorder %s270, %s286
    %p288 = scmp.eq.s32.totalorder %s33, 0
    %p289 = por %p287, %p288
    %s290 = ssub.s32 %s27, %s34
    %p291 = scmp.eq.s32.totalorder %s290, 0
    %s293 = sadd.s32 %s292, 1
    %s294 = scalar_select %p291, %s292, %s293
    %p297 = pneg %p291
    %p298 = scmp.eq.s32.totalorder %s27, 1
    %p299 = por %p297, %p298
    %p300 = scmp.ne.s32.totalorder %s292, %s295
    %p301 = scmp.eq.s32.totalorder %s27, 0
    %p302 = por %p300, %p301
    %p303 = scmp.ne.s32.totalorder %s292, %s295
    %p304 = scmp.eq.s32.totalorder %s32, 1
    %p305 = por %p303, %p304
    %p306 = scmp.ne.s32.totalorder %s295, %s296
    %p307 = scmp.eq.s32.totalorder %s32, 0
    %p308 = por %p306, %p307
    %p309 = scmp.ne.s32.totalorder %s295, %s296
    %p310 = scmp.eq.s32.totalorder %s33, 1
    %p311 = por %p309, %p310
    %p313 = scmp.ne.s32.totalorder %s296, %s312
    %p314 = scmp.eq.s32.totalorder %s33, 0
    %p315 = por %p313, %p314
    %s316 = ssub.s32 %s27, %s34
    %p317 = scmp.eq.s32.totalorder %s316, 0
    %s319 = sadd.s32 %s318, 1
    %s320 = scalar_select %p317, %s318, %s319
    %p323 = pneg %p317
    %p324 = scmp.eq.s32.totalorder %s27, 1
    %p325 = por %p323, %p324
    %p326 = scmp.ne.s32.totalorder %s318, %s321
    %p327 = scmp.eq.s32.totalorder %s27, 0
    %p328 = por %p326, %p327
    %p329 = scmp.ne.s32.totalorder %s318, %s321
    %p330 = scmp.eq.s32.totalorder %s32, 1
    %p331 = por %p329, %p330
    %p332 = scmp.ne.s32.totalorder %s321, %s322
    %p333 = scmp.eq.s32.totalorder %s32, 0
    %p334 = por %p332, %p333
    %p335 = scmp.ne.s32.totalorder %s321, %s322
    %p336 = scmp.eq.s32.totalorder %s33, 1
    %p337 = por %p335, %p336
    %p339 = scmp.ne.s32.totalorder %s322, %s338
    %p340 = scmp.eq.s32.totalorder %s33, 0
    %p341 = por %p339, %p340
    %s342 = ssub.s32 %s27, %s34
    %p343 = scmp.eq.s32.totalorder %s342, 0
    %s345 = sadd.s32 %s344, 1
    %s346 = scalar_select %p343, %s344, %s345
    %p349 = pneg %p343
    %p350 = scmp.eq.s32.totalorder %s27, 1
    %p351 = por %p349, %p350
    %p352 = scmp.ne.s32.totalorder %s344, %s347
    %p353 = scmp.eq.s32.totalorder %s27, 0
    %p354 = por %p352, %p353
    %p355 = scmp.ne.s32.totalorder %s344, %s347
    %p356 = scmp.eq.s32.totalorder %s32, 1
    %p357 = por %p355, %p356
    %p358 = scmp.ne.s32.totalorder %s347, %s348
    %p359 = scmp.eq.s32.totalorder %s32, 0
    %p360 = por %p358, %p359
    %p361 = scmp.ne.s32.totalorder %s347, %s348
    %p362 = scmp.eq.s32.totalorder %s33, 1
    %p363 = por %p361, %p362
    %p365 = scmp.ne.s32.totalorder %s348, %s364
    %p366 = scmp.eq.s32.totalorder %s33, 0
    %p367 = por %p365, %p366
    %s368 = ssub.s32 %s27, %s34
    %p369 = scmp.eq.s32.totalorder %s368, 0
    %s371 = sadd.s32 %s370, 1
    %s372 = scalar_select %p369, %s370, %s371
    %p375 = pneg %p369
    %p376 = scmp.eq.s32.totalorder %s27, 1
    %p377 = por %p375, %p376
    %p378 = scmp.ne.s32.totalorder %s370, %s373
    %p379 = scmp.eq.s32.totalorder %s27, 0
    %p380 = por %p378, %p379
    %p381 = scmp.ne.s32.totalorder %s370, %s373
    %p382 = scmp.eq.s32.totalorder %s32, 1
    %p383 = por %p381, %p382
    %p384 = scmp.ne.s32.totalorder %s373, %s374
    %p385 = scmp.eq.s32.totalorder %s32, 0
    %p386 = por %p384, %p385
    %p387 = scmp.ne.s32.totalorder %s373, %s374
    %p388 = scmp.eq.s32.totalorder %s33, 1
    %p389 = por %p387, %p388
    %p391 = scmp.ne.s32.totalorder %s374, %s390
    %p392 = scmp.eq.s32.totalorder %s33, 0
    %p393 = por %p391, %p392
    %s394 = ssub.s32 %s27, %s34
    %p395 = scmp.eq.s32.totalorder %s394, 0
    %s397 = sadd.s32 %s396, 1
    %s398 = scalar_select %p395, %s396, %s397
    %p401 = pneg %p395
    %p402 = scmp.eq.s32.totalorder %s27, 1
    %p403 = por %p401, %p402
    %p404 = scmp.ne.s32.totalorder %s396, %s399
    %p405 = scmp.eq.s32.totalorder %s27, 0
    %p406 = por %p404, %p405
    %p407 = scmp.ne.s32.totalorder %s396, %s399
    %p408 = scmp.eq.s32.totalorder %s32, 1
    %p409 = por %p407, %p408
    %p410 = scmp.ne.s32.totalorder %s399, %s400
    %p411 = scmp.eq.s32.totalorder %s32, 0
    %p412 = por %p410, %p411
    %p413 = scmp.ne.s32.totalorder %s399, %s400
    %p414 = scmp.eq.s32.totalorder %s33, 1
    %p415 = por %p413, %p414
    %p417 = scmp.ne.s32.totalorder %s400, %s416
    %p418 = scmp.eq.s32.totalorder %s33, 0
    %p419 = por %p417, %p418
    %s420 = ssub.s32 %s27, %s34
    %p421 = scmp.eq.s32.totalorder %s420, 0
    %s423 = sadd.s32 %s422, 1
    %s424 = scalar_select %p421, %s422, %s423
    %p427 = pneg %p421
    %p428 = scmp.eq.s32.totalorder %s27, 1
    %p429 = por %p427, %p428
    %p430 = scmp.ne.s32.totalorder %s422, %s425
    %p431 = scmp.eq.s32.totalorder %s27, 0
    %p432 = por %p430, %p431
    %p433 = scmp.ne.s32.totalorder %s422, %s425
    %p434 = scmp.eq.s32.totalorder %s32, 1
    %p435 = por %p433, %p434
    %p436 = scmp.ne.s32.totalorder %s425, %s426
    %p437 = scmp.eq.s32.totalorder %s32, 0
    %p438 = por %p436, %p437
    %p439 = scmp.ne.s32.totalorder %s425, %s426
    %p440 = scmp.eq.s32.totalorder %s33, 1
    %p441 = por %p439, %p440
    %p443 = scmp.ne.s32.totalorder %s426, %s442
    %p444 = scmp.eq.s32.totalorder %s33, 0
    %p445 = por %p443, %p444
    %s446 = ssub.s32 %s27, %s34
    %p447 = scmp.eq.s32.totalorder %s446, 0
    %s449 = sadd.s32 %s448, 1
    %s450 = scalar_select %p447, %s448, %s449
    %p453 = pneg %p447
    %p454 = scmp.eq.s32.totalorder %s27, 1
    %p455 = por %p453, %p454
    %p456 = scmp.ne.s32.totalorder %s448, %s451
    %p457 = scmp.eq.s32.totalorder %s27, 0
    %p458 = por %p456, %p457
    %p459 = scmp.ne.s32.totalorder %s448, %s451
    %p460 = scmp.eq.s32.totalorder %s32, 1
    %p461 = por %p459, %p460
    %p462 = scmp.ne.s32.totalorder %s451, %s452
    %p463 = scmp.eq.s32.totalorder %s32, 0
    %p464 = por %p462, %p463
    %p465 = scmp.ne.s32.totalorder %s451, %s452
    %p466 = scmp.eq.s32.totalorder %s33, 1
    %p467 = por %p465, %p466
    %p469 = scmp.ne.s32.totalorder %s452, %s468
    %p470 = scmp.eq.s32.totalorder %s33, 0
    %p471 = por %p469, %p470
    %s473 = sadd.s32 %s472, 1
    %p476 = scmp.eq.s32.totalorder %s27, 1
    %p477 = scmp.ne.s32.totalorder %s472, %s474
    %p478 = scmp.eq.s32.totalorder %s27, 0
    %p479 = por %p477, %p478
    %p480 = scmp.ne.s32.totalorder %s472, %s474
    %p481 = scmp.eq.s32.totalorder %s32, 1
    %p482 = por %p480, %p481
    %p483 = scmp.ne.s32.totalorder %s474, %s475
    %p484 = scmp.eq.s32.totalorder %s32, 0
    %p485 = por %p483, %p484
    %p486 = scmp.ne.s32.totalorder %s474, %s475
    %p487 = scmp.eq.s32.totalorder %s33, 1
    %p488 = por %p486, %p487
    %p490 = scmp.ne.s32.totalorder %s475, %s489
    %p491 = scmp.eq.s32.totalorder %s33, 0
    %p492 = por %p490, %p491
    %s494 = sadd.s32 %s493, 1
    %p497 = scmp.eq.s32.totalorder %s27, 1
    %p498 = scmp.ne.s32.totalorder %s493, %s495
    %p499 = scmp.eq.s32.totalorder %s27, 0
    %p500 = por %p498, %p499
    %p501 = scmp.ne.s32.totalorder %s493, %s495
    %p502 = scmp.eq.s32.totalorder %s32, 1
    %p503 = por %p501, %p502
    %p504 = scmp.ne.s32.totalorder %s495, %s496
    %p505 = scmp.eq.s32.totalorder %s32, 0
    %p506 = por %p504, %p505
    %p507 = scmp.ne.s32.totalorder %s495, %s496
    %p508 = scmp.eq.s32.totalorder %s33, 1
    %p509 = por %p507, %p508
    %p511 = scmp.ne.s32.totalorder %s496, %s510
    %p512 = scmp.eq.s32.totalorder %s33, 0
    %p513 = por %p511, %p512
    %s515 = sadd.s32 %s514, 1
    %p518 = scmp.eq.s32.totalorder %s27, 1
    %p519 = scmp.ne.s32.totalorder %s514, %s516
    %p520 = scmp.eq.s32.totalorder %s27, 0
    %p521 = por %p519, %p520
    %p522 = scmp.ne.s32.totalorder %s514, %s516
    %p523 = scmp.eq.s32.totalorder %s32, 1
    %p524 = por %p522, %p523
    %p525 = scmp.ne.s32.totalorder %s516, %s517
    %p526 = scmp.eq.s32.totalorder %s32, 0
    %p527 = por %p525, %p526
    %p528 = scmp.ne.s32.totalorder %s516, %s517
    %p529 = scmp.eq.s32.totalorder %s33, 1
    %p530 = por %p528, %p529
    %p532 = scmp.ne.s32.totalorder %s517, %s531
    %p533 = scmp.eq.s32.totalorder %s33, 0
    %p534 = por %p532, %p533
    %s536 = sadd.s32 %s535, 1
    %p539 = scmp.eq.s32.totalorder %s27, 1
    %p540 = scmp.ne.s32.totalorder %s535, %s537
    %p541 = scmp.eq.s32.totalorder %s27, 0
    %p542 = por %p540, %p541
    %p543 = scmp.ne.s32.totalorder %s535, %s537
    %p544 = scmp.eq.s32.totalorder %s32, 1
    %p545 = por %p543, %p544
    %p546 = scmp.ne.s32.totalorder %s537, %s538
    %p547 = scmp.eq.s32.totalorder %s32, 0
    %p548 = por %p546, %p547
    %p549 = scmp.ne.s32.totalorder %s537, %s538
    %p550 = scmp.eq.s32.totalorder %s33, 1
    %p551 = por %p549, %p550
    %p553 = scmp.ne.s32.totalorder %s538, %s552
    %p554 = scmp.eq.s32.totalorder %s33, 0
    %p555 = por %p553, %p554
    %s557 = sadd.s32 %s556, 1
    %p560 = scmp.eq.s32.totalorder %s27, 1
    %p561 = scmp.ne.s32.totalorder %s556, %s558
    %p562 = scmp.eq.s32.totalorder %s27, 0
    %p563 = por %p561, %p562
    %p564 = scmp.ne.s32.totalorder %s556, %s558
    %p565 = scmp.eq.s32.totalorder %s32, 1
    %p566 = por %p564, %p565
    %p567 = scmp.ne.s32.totalorder %s558, %s559
    %p568 = scmp.eq.s32.totalorder %s32, 0
    %p569 = por %p567, %p568
    %p570 = scmp.ne.s32.totalorder %s558, %s559
    %p571 = scmp.eq.s32.totalorder %s33, 1
    %p572 = por %p570, %p571
    %p574 = scmp.ne.s32.totalorder %s559, %s573
    %p575 = scmp.eq.s32.totalorder %s33, 0
    %p576 = por %p574, %p575
    %p577 = scmp.le.s32.totalorder 1, %s27
    %p578 = scmp.lt.s32.totalorder %s27, 3
    %p579 = pnand %p577, %p578
    %p580 = pneg %p579
    // Predicated region
    $region9: #{transformer_forward.1} parent=5 // pred_check
      _
    $region10: #{transformer_forward.1} parent=5 // pred_check_branch
      %582 = sbr.rel (%p579) target = $region12
    $region11: #{transformer_forward.1} parent=5 // pred_region
      %s583 = ssub.s32 %s27, 1
      // Predicated region
      $region13: #{transformer_forward.1} parent=11 // pred_check
        %p584 = pneg %p48
      $region14: #{transformer_forward.1} parent=11 // pred_check_branch
        %586 = sbr.rel (%p584) target = $region16
      $region15: #{transformer_forward.1} parent=11 // pred_region
        _
      $region16: #{transformer_forward.1} parent=11 // pred_fallthru
        _
      // Predicated region
      $region17: #{transformer_forward.1} parent=11 // pred_check
        %p587 = pneg %p485
      $region18: #{transformer_forward.1} parent=11 // pred_check_branch
        %589 = sbr.rel (%p587) target = $region20
      $region19: #{transformer_forward.1} parent=11 // pred_region
        _
      $region20: #{transformer_forward.1} parent=11 // pred_fallthru
        _
      // Predicated region
      $region21: #{transformer_forward.1} parent=11 // pred_check
        %p590 = pneg %p506
      $region22: #{transformer_forward.1} parent=11 // pred_check_branch
        %592 = sbr.rel (%p590) target = $region24
      $region23: #{transformer_forward.1} parent=11 // pred_region
        _
      $region24: #{transformer_forward.1} parent=11 // pred_fallthru
        _
      // Predicated region
      $region25: #{transformer_forward.1} parent=11 // pred_check
        %p593 = pneg %p527
      $region26: #{transformer_forward.1} parent=11 // pred_check_branch
        %595 = sbr.rel (%p593) target = $region28
      $region27: #{transformer_forward.1} parent=11 // pred_region
        _
      $region28: #{transformer_forward.1} parent=11 // pred_fallthru
        _
      // Predicated region
      $region29: #{transformer_forward.1} parent=11 // pred_check
        %p596 = pneg %p548
      $region30: #{transformer_forward.1} parent=11 // pred_check_branch
        %598 = sbr.rel (%p596) target = $region32
      $region31: #{transformer_forward.1} parent=11 // pred_region
        _
      $region32: #{transformer_forward.1} parent=11 // pred_fallthru
        _
    $region12: #{transformer_forward.1} parent=5 // pred_fallthru
      _
    %p599 = scmp.lt.s32.totalorder %s27, 2
    // Predicated region
    $region33: #{transformer_forward.1} parent=5 // pred_check
      %p600 = pneg %p599
    $region34: #{transformer_forward.1} parent=5 // pred_check_branch
      %602 = sbr.rel (%p600) target = $region36
    $region35: #{transformer_forward.1} parent=5 // pred_region
      // Predicated region
      $region37: #{transformer_forward.1} parent=35 // pred_check
        %p603 = pneg %p68
      $region38: #{transformer_forward.1} parent=35 // pred_check_branch
        %605 = sbr.rel (%p603) target = $region40
      $region39: #{transformer_forward.1} parent=35 // pred_region
        %p606 = scmp.lt.s32.totalorder %s27, 1
        %s607 = scalar_select %p606, %s27, 1
        %s608 = smul.addr %s607, 16
        %s609 = smul.addr %s608, 4
        %s610 = scalar_lea.vmem %s1, %s609
      $region40: #{transformer_forward.1} parent=35 // pred_fallthru
        _
      // Predicated region
      $region41: #{transformer_forward.1} parent=35 // pred_check
        %p611 = pneg %p94
      $region42: #{transformer_forward.1} parent=35 // pred_check_branch
        %613 = sbr.rel (%p611) target = $region44
      $region43: #{transformer_forward.1} parent=35 // pred_region
        %p614 = scmp.lt.s32.totalorder %s27, 1
        %s615 = scalar_select %p614, %s27, 1
        %s616 = smul.addr %s615, 16
        %s617 = smul.addr %s616, 4
        %s618 = scalar_lea.vmem %s2, %s617
      $region44: #{transformer_forward.1} parent=35 // pred_fallthru
        _
      // Predicated region
      $region45: #{transformer_forward.1} parent=35 // pred_check
        %p619 = pneg %p120
      $region46: #{transformer_forward.1} parent=35 // pred_check_branch
        %621 = sbr.rel (%p619) target = $region48
      $region47: #{transformer_forward.1} parent=35 // pred_region
        %p622 = scmp.lt.s32.totalorder %s27, 1
        %s623 = scalar_select %p622, %s27, 1
        %s624 = smul.addr %s623, 16
        %s625 = smul.addr %s624, 4
        %s626 = scalar_lea.vmem %s3, %s625
      $region48: #{transformer_forward.1} parent=35 // pred_fallthru
        _
      // Predicated region
      $region49: #{transformer_forward.1} parent=35 // pred_check
        %p627 = pneg %p146
      $region50: #{transformer_forward.1} parent=35 // pred_check_branch
        %629 = sbr.rel (%p627) target = $region52
      $region51: #{transformer_forward.1} parent=35 // pred_region
        %p630 = scmp.lt.s32.totalorder %s27, 1
        %s631 = scalar_select %p630, %s27, 1
        %s632 = smul.addr %s631, 4
        %s633 = scalar_lea.vmem %s4, %s632
      $region52: #{transformer_forward.1} parent=35 // pred_fallthru
        _
      // Predicated region
      $region53: #{transformer_forward.1} parent=35 // pred_check
        %p634 = pneg %p172
      $region54: #{transformer_forward.1} parent=35 // pred_check_branch
        %636 = sbr.rel (%p634) target = $region56
      $region55: #{transformer_forward.1} parent=35 // pred_region
        %p637 = scmp.lt.s32.totalorder %s27, 1
        %s638 = scalar_select %p637, %s27, 1
        %s639 = smul.addr %s638, 4
        %s640 = scalar_lea.vmem %s5, %s639
      $region56: #{transformer_forward.1} parent=35 // pred_fallthru
        _
      // Predicated region
      $region57: #{transformer_forward.1} parent=35 // pred_check
        %p641 = pneg %p198
      $region58: #{transformer_forward.1} parent=35 // pred_check_branch
        %643 = sbr.rel (%p641) target = $region60
      $region59: #{transformer_forward.1} parent=35 // pred_region
        %p644 = scmp.lt.s32.totalorder %s27, 1
        %s645 = scalar_select %p644, %s27, 1
        %s646 = smul.addr %s645, 4
        %s647 = scalar_lea.vmem %s6, %s646
      $region60: #{transformer_forward.1} parent=35 // pred_fallthru
        _
      // Predicated region
      $region61: #{transformer_forward.1} parent=35 // pred_check
        %p648 = pneg %p224
      $region62: #{transformer_forward.1} parent=35 // pred_check_branch
        %650 = sbr.rel (%p648) target = $region64
      $region63: #{transformer_forward.1} parent=35 // pred_region
        %p651 = scmp.lt.s32.totalorder %s27, 1
        %s652 = scalar_select %p651, %s27, 1
        %s653 = smul.addr %s652, 4
        %s654 = smul.addr %s653, 4
        %s655 = scalar_lea.vmem %s7, %s654
      $region64: #{transformer_forward.1} parent=35 // pred_fallthru
        _
      // Predicated region
      $region65: #{transformer_forward.1} parent=35 // pred_check
        %p656 = pneg %p250
      $region66: #{transformer_forward.1} parent=35 // pred_check_branch
        %658 = sbr.rel (%p656) target = $region68
      $region67: #{transformer_forward.1} parent=35 // pred_region
        %p659 = scmp.lt.s32.totalorder %s27, 1
        %s660 = scalar_select %p659, %s27, 1
        %s661 = scalar_lea.vmem %s8, %s660
      $region68: #{transformer_forward.1} parent=35 // pred_fallthru
        _
      // Predicated region
      $region69: #{transformer_forward.1} parent=35 // pred_check
        %p662 = pneg %p276
      $region70: #{transformer_forward.1} parent=35 // pred_check_branch
        %664 = sbr.rel (%p662) target = $region72
      $region71: #{transformer_forward.1} parent=35 // pred_region
        %p665 = scmp.lt.s32.totalorder %s27, 1
        %s666 = scalar_select %p665, %s27, 1
        %s667 = scalar_lea.vmem %s9, %s666
      $region72: #{transformer_forward.1} parent=35 // pred_fallthru
        _
      // Predicated region
      $region73: #{transformer_forward.1} parent=35 // pred_check
        %p668 = pneg %p302
      $region74: #{transformer_forward.1} parent=35 // pred_check_branch
        %670 = sbr.rel (%p668) target = $region76
      $region75: #{transformer_forward.1} parent=35 // pred_region
        %p671 = scmp.lt.s32.totalorder %s27, 1
        %s672 = scalar_select %p671, %s27, 1
        %s673 = scalar_lea.vmem %s10, %s672
      $region76: #{transformer_forward.1} parent=35 // pred_fallthru
        _
      // Predicated region
      $region77: #{transformer_forward.1} parent=35 // pred_check
        %p674 = pneg %p328
      $region78: #{transformer_forward.1} parent=35 // pred_check_branch
        %676 = sbr.rel (%p674) target = $region80
      $region79: #{transformer_forward.1} parent=35 // pred_region
        %p677 = scmp.lt.s32.totalorder %s27, 1
        %s678 = scalar_select %p677, %s27, 1
        %s679 = smul.addr %s678, 4
        %s680 = smul.addr %s679, 4
        %s681 = scalar_lea.vmem %s11, %s680
      $region80: #{transformer_forward.1} parent=35 // pred_fallthru
        _
      // Predicated region
      $region81: #{transformer_forward.1} parent=35 // pred_check
        %p682 = pneg %p354
      $region82: #{transformer_forward.1} parent=35 // pred_check_branch
        %684 = sbr.rel (%p682) target = $region84
      $region83: #{transformer_forward.1} parent=35 // pred_region
        %p685 = scmp.lt.s32.totalorder %s27, 1
        %s686 = scalar_select %p685, %s27, 1
        %s687 = scalar_lea.vmem %s12, %s686
      $region84: #{transformer_forward.1} parent=35 // pred_fallthru
        _
      // Predicated region
      $region85: #{transformer_forward.1} parent=35 // pred_check
        %p688 = pneg %p380
      $region86: #{transformer_forward.1} parent=35 // pred_check_branch
        %690 = sbr.rel (%p688) target = $region88
      $region87: #{transformer_forward.1} parent=35 // pred_region
        %p691 = scmp.lt.s32.totalorder %s27, 1
        %s692 = scalar_select %p691, %s27, 1
        %s693 = smul.addr %s692, 8
        %s694 = smul.addr %s693, 4
        %s695 = scalar_lea.vmem %s13, %s694
      $region88: #{transformer_forward.1} parent=35 // pred_fallthru
        _
      // Predicated region
      $region89: #{transformer_forward.1} parent=35 // pred_check
        %p696 = pneg %p406
      $region90: #{transformer_forward.1} parent=35 // pred_check_branch
        %698 = sbr.rel (%p696) target = $region92
      $region91: #{transformer_forward.1} parent=35 // pred_region
        %p699 = scmp.lt.s32.totalorder %s27, 1
        %s700 = scalar_select %p699, %s27, 1
        %s701 = scalar_lea.vmem %s14, %s700
      $region92: #{transformer_forward.1} parent=35 // pred_fallthru
        _
      // Predicated region
      $region93: #{transformer_forward.1} parent=35 // pred_check
        %p702 = pneg %p432
      $region94: #{transformer_forward.1} parent=35 // pred_check_branch
        %704 = sbr.rel (%p702) target = $region96
      $region95: #{transformer_forward.1} parent=35 // pred_region
        %p705 = scmp.lt.s32.totalorder %s27, 1
        %s706 = scalar_select %p705, %s27, 1
        %s707 = scalar_lea.vmem %s15, %s706
      $region96: #{transformer_forward.1} parent=35 // pred_fallthru
        _
      // Predicated region
      $region97: #{transformer_forward.1} parent=35 // pred_check
        %p708 = pneg %p458
      $region98: #{transformer_forward.1} parent=35 // pred_check_branch
        %710 = sbr.rel (%p708) target = $region100
      $region99: #{transformer_forward.1} parent=35 // pred_region
        %p711 = scmp.lt.s32.totalorder %s27, 1
        %s712 = scalar_select %p711, %s27, 1
        %s713 = scalar_lea.vmem %s16, %s712
      $region100: #{transformer_forward.1} parent=35 // pred_fallthru
        _
    $region36: #{transformer_forward.1} parent=5 // pred_fallthru
      _
    %p714 = scmp.le.s32.totalorder 1, %s27
    %p715 = scmp.lt.s32.totalorder %s27, 3
    %p716 = pnand %p714, %p715
    %p717 = pneg %p716
    // Predicated region
    $region101: #{transformer_forward.1} parent=5 // pred_check
      _
    $region102: #{transformer_forward.1} parent=5 // pred_check_branch
      %719 = sbr.rel (%p716) target = $region104
    $region103: #{transformer_forward.1} parent=5 // pred_region
      %s720 = ssub.s32 %s27, 1
      %p721 = pneg %p48
      %p722 = pneg %p45
      %p723 = scmp.lt.s32.totalorder %s32, 1
      %s724 = scalar_select %p723, %s32, 1
      %s725 = smul.addr %s724, 16
      %s726 = smul.addr %s725, 4
      %s727 = scalar_lea.vmem %s1, %s726
      %p728 = pneg %p74
      %p729 = pneg %p71
      %p730 = scmp.lt.s32.totalorder %s32, 1
      %s731 = scalar_select %p730, %s32, 1
      %s732 = smul.addr %s731, 16
      %s733 = smul.addr %s732, 4
      %s734 = scalar_lea.vmem %s2, %s733
      %p735 = pneg %p100
      %p736 = pneg %p97
      %p737 = scmp.lt.s32.totalorder %s32, 1
      %s738 = scalar_select %p737, %s32, 1
      %s739 = smul.addr %s738, 16
      %s740 = smul.addr %s739, 4
      %s741 = scalar_lea.vmem %s3, %s740
      %p742 = pneg %p126
      %p743 = pneg %p123
      %p744 = scmp.lt.s32.totalorder %s32, 1
      %s745 = scalar_select %p744, %s32, 1
      %s746 = smul.addr %s745, 4
      %s747 = scalar_lea.vmem %s4, %s746
      %p748 = pneg %p152
      %p749 = pneg %p149
      %p750 = scmp.lt.s32.totalorder %s32, 1
      %s751 = scalar_select %p750, %s32, 1
      %s752 = smul.addr %s751, 4
      %s753 = scalar_lea.vmem %s5, %s752
      %p754 = pneg %p178
      %p755 = pneg %p175
      %p756 = scmp.lt.s32.totalorder %s32, 1
      %s757 = scalar_select %p756, %s32, 1
      %s758 = smul.addr %s757, 4
      %s759 = scalar_lea.vmem %s6, %s758
      %p760 = pneg %p204
      %p761 = pneg %p201
      %p762 = scmp.lt.s32.totalorder %s32, 1
      %s763 = scalar_select %p762, %s32, 1
      %s764 = smul.addr %s763, 4
      %s765 = smul.addr %s764, 4
      %s766 = scalar_lea.vmem %s7, %s765
      %p767 = pneg %p230
      %p768 = pneg %p227
      %p769 = scmp.lt.s32.totalorder %s32, 1
      %s770 = scalar_select %p769, %s32, 1
      %s771 = scalar_lea.vmem %s8, %s770
      %p772 = pneg %p256
      %p773 = pneg %p253
      %p774 = scmp.lt.s32.totalorder %s32, 1
      %s775 = scalar_select %p774, %s32, 1
      %s776 = scalar_lea.vmem %s9, %s775
      %p777 = pneg %p282
      %p778 = pneg %p279
      %p779 = scmp.lt.s32.totalorder %s32, 1
      %s780 = scalar_select %p779, %s32, 1
      %s781 = scalar_lea.vmem %s10, %s780
      %p782 = pneg %p308
      %p783 = pneg %p305
      %p784 = scmp.lt.s32.totalorder %s32, 1
      %s785 = scalar_select %p784, %s32, 1
      %s786 = smul.addr %s785, 4
      %s787 = smul.addr %s786, 4
      %s788 = scalar_lea.vmem %s11, %s787
      %p789 = pneg %p334
      %p790 = pneg %p331
      %p791 = scmp.lt.s32.totalorder %s32, 1
      %s792 = scalar_select %p791, %s32, 1
      %s793 = scalar_lea.vmem %s12, %s792
      %p794 = pneg %p360
      %p795 = pneg %p357
      %p796 = scmp.lt.s32.totalorder %s32, 1
      %s797 = scalar_select %p796, %s32, 1
      %s798 = smul.addr %s797, 8
      %s799 = smul.addr %s798, 4
      %s800 = scalar_lea.vmem %s13, %s799
      %p801 = pneg %p386
      %p802 = pneg %p383
      %p803 = scmp.lt.s32.totalorder %s32, 1
      %s804 = scalar_select %p803, %s32, 1
      %s805 = scalar_lea.vmem %s14, %s804
      %p806 = pneg %p412
      %p807 = pneg %p409
      %p808 = scmp.lt.s32.totalorder %s32, 1
      %s809 = scalar_select %p808, %s32, 1
      %s810 = scalar_lea.vmem %s15, %s809
      %p811 = pneg %p438
      %p812 = pneg %p435
      %p813 = scmp.lt.s32.totalorder %s32, 1
      %s814 = scalar_select %p813, %s32, 1
      %s815 = scalar_lea.vmem %s16, %s814
      %p816 = pneg %p464
      %p817 = pneg %p461
      %p818 = pneg %p485
      %p819 = pneg %p482
      %p820 = pneg %p506
      %p821 = pneg %p503
      %p822 = pneg %p527
      %p823 = pneg %p524
      %p824 = pneg %p548
      %p825 = pneg %p545
      %p826 = pneg %p569
      %p827 = pneg %p566
      %p828 = scmp.lt.s32.totalorder %s32, 1
      %s829 = scalar_select %p828, %s32, 1
      %s830 = smul.addr %s829, 16
      %s831 = smul.addr %s830, 4
      %s832 = scalar_lea.vmem %s1, %s831
      %p833 = scmp.lt.s32.totalorder %s32, 1
      %s834 = scalar_select %p833, %s32, 1
      %s835 = smul.addr %s834, 16
      %s836 = smul.addr %s835, 4
      %s837 = scalar_lea.vmem %s2, %s836
      %p838 = scmp.lt.s32.totalorder %s32, 1
      %s839 = scalar_select %p838, %s32, 1
      %s840 = smul.addr %s839, 16
      %s841 = smul.addr %s840, 4
      %s842 = scalar_lea.vmem %s3, %s841
      %p843 = scmp.lt.s32.totalorder %s32, 1
      %s844 = scalar_select %p843, %s32, 1
      %s845 = smul.addr %s844, 4
      %s846 = scalar_lea.vmem %s4, %s845
      %p847 = scmp.lt.s32.totalorder %s32, 1
      %s848 = scalar_select %p847, %s32, 1
      %s849 = smul.addr %s848, 4
      %s850 = scalar_lea.vmem %s5, %s849
      %p851 = scmp.lt.s32.totalorder %s32, 1
      %s852 = scalar_select %p851, %s32, 1
      %s853 = smul.addr %s852, 4
      %s854 = scalar_lea.vmem %s6, %s853
      %p855 = scmp.lt.s32.totalorder %s32, 1
      %s856 = scalar_select %p855, %s32, 1
      %s857 = smul.addr %s856, 4
      %s858 = smul.addr %s857, 4
      %s859 = scalar_lea.vmem %s7, %s858
      %p860 = scmp.lt.s32.totalorder %s32, 1
      %s861 = scalar_select %p860, %s32, 1
      %s862 = scalar_lea.vmem %s8, %s861
      %p863 = scmp.lt.s32.totalorder %s32, 1
      %s864 = scalar_select %p863, %s32, 1
      %s865 = scalar_lea.vmem %s9, %s864
      %p866 = scmp.lt.s32.totalorder %s32, 1
      %s867 = scalar_select %p866, %s32, 1
      %s868 = scalar_lea.vmem %s10, %s867
      %p869 = scmp.lt.s32.totalorder %s32, 1
      %s870 = scalar_select %p869, %s32, 1
      %s871 = smul.addr %s870, 4
      %s872 = smul.addr %s871, 4
      %s873 = scalar_lea.vmem %s11, %s872
      %p874 = scmp.lt.s32.totalorder %s32, 1
      %s875 = scalar_select %p874, %s32, 1
      %s876 = scalar_lea.vmem %s12, %s875
      %p877 = scmp.lt.s32.totalorder %s32, 1
      %s878 = scalar_select %p877, %s32, 1
      %s879 = smul.addr %s878, 8
      %s880 = smul.addr %s879, 4
      %s881 = scalar_lea.vmem %s13, %s880
      %p882 = scmp.lt.s32.totalorder %s32, 1
      %s883 = scalar_select %p882, %s32, 1
      %s884 = scalar_lea.vmem %s14, %s883
      %p885 = scmp.lt.s32.totalorder %s32, 1
      %s886 = scalar_select %p885, %s32, 1
      %s887 = scalar_lea.vmem %s15, %s886
      %p888 = scmp.lt.s32.totalorder %s32, 1
      %s889 = scalar_select %p888, %s32, 1
      %s890 = scalar_lea.vmem %s16, %s889
      %p892 = scmp.eq.s32.totalorder %s32, 0
      // Predicated region
      $region105: #{transformer_forward.1} parent=103 // pred_check
        %p893 = pneg %p892
      $region106: #{transformer_forward.1} parent=103 // pred_check_branch
        %895 = sbr.rel (%p893) target = $region108
      $region107: #{transformer_forward.1} parent=103 // pred_region
        %v896 = vld [vmem:[%s0] sm:$0xff]
        %v897 = vld [vmem:[%s0 + $0x8] sm:$0xff]
        %vm898 = vcmask 261120
        %899 = vst.msk [vmem:[#allocation2] sm:$0xff] %vm898, %v896
        %900 = vst.msk [vmem:[#allocation2 + $0x8] sm:$0xff] %vm898, %v897
      $region108: #{transformer_forward.1} parent=103 // pred_fallthru
        _
      %v901 = vld [vmem:[#allocation2] sm:$0xff]
      %v902 = vld [vmem:[#allocation2 + $0x8] sm:$0xff]
      %v903 = vpack.c.bf16 %v902, %v901
      %v904 = vld [vmem:[%s846] sm:$0xf]
      %v905 = vld [vmem:[%s850] sm:$0xf]
      %v906 = vld [vmem:[%s854] sm:$0xf]
      %v907 = vld [vmem:[%s832] sm:$0xf]
      %v908 = vld [vmem:[%s832 + $0x4] sm:$0xf]
      %v909 = vld [vmem:[%s832 + $0x8] sm:$0xf]
      %v910 = vld [vmem:[%s832 + $0xc] sm:$0xf]
      %v911 = vlaneseq
      %v912 = vshrl.u32 %v911, 7
      %v913 = vsub.s32 0, %v912
      %v914 = vrot.slane %v904, %v913
      %v919 = vunpack.c.l.b16 %v907
      %v920 = vunpack.c.l.b16 %v908
      %v921 = vunpack.c.l.b16 %v909
      %v922 = vunpack.c.l.b16 %v910
      %v923 = vpack.c.b16 %v920, %v919
      %v924 = vpack.c.b16 %v922, %v921
      %vm927 = vcmask 261120
      %v929 = vsel %vm927, %v903, 0
      %931 = vmatprep.subr.bf16.mxu0 0
      %932 = vmatpush1.bf16.msra.mxu0 %v923
      %933 = vmatprep.subr.bf16.mxu0 0
      %934 = vmatpush1.bf16.msra.mxu0 %v924
      %935 = vmatprep.subr.bf16.mxu0 0
      %936 = vmatpush1.bf16.msra.mxu0 0
      %937 = vmatprep.subr.bf16.mxu0 0
      %938 = vmatpush1.bf16.msra.mxu0 0
      %939 = vmatprep.subr.bf16.mxu0 0
      %940 = vmatpush1.bf16.msra.mxu0 0
      %941 = vmatprep.subr.bf16.mxu0 0
      %942 = vmatpush1.bf16.msra.mxu0 0
      %943 = vmatprep.subr.bf16.mxu0 0
      %944 = vmatpush1.bf16.msra.mxu0 0
      %945 = vmatprep.subr.bf16.mxu0 0
      %946 = vmatpush1.bf16.msra.mxu0 0
      %947 = vmatprep.subr.bf16.mxu0 0
      %948 = vmatpush1.bf16.msra.mxu0 0
      %949 = vmatprep.subr.bf16.mxu0 0
      %950 = vmatpush1.bf16.msra.mxu0 0
      %951 = vmatprep.subr.bf16.mxu0 0
      %952 = vmatpush1.bf16.msra.mxu0 0
      %953 = vmatprep.subr.bf16.mxu0 0
      %954 = vmatpush1.bf16.msra.mxu0 0
      %955 = vmatprep.subr.bf16.mxu0 0
      %956 = vmatpush1.bf16.msra.mxu0 0
      %957 = vmatprep.subr.bf16.mxu0 0
      %958 = vmatpush1.bf16.msra.mxu0 0
      %959 = vmatprep.subr.bf16.mxu0 0
      %960 = vmatpush1.bf16.msra.mxu0 0
      %961 = vmatprep.subr.bf16.mxu0 0
      %962 = vmatpush1.bf16.msra.mxu0 0
      %963 = vmatprep.mubr.bf16.mxu0 0
      %964 = vmatmul.mubr.bf16.gmra.mrb[0].mxu0 %v929
      %v965 = vpop.f32.mrb[0].mxu0
      %v966 = vadd.f32 %v914, %v965
      %v967 = vpop.f32.mrb[0].mxu0
      %v968 = vpop.f32.mrb[0].mxu0
      %v969 = vadd.f32 %v914, %v968
      %v970 = vpop.f32.mrb[0].mxu0
      %971 = vdwg.mxu0
      %v972 = vld [vmem:[%s837] sm:$0xf]
      %v973 = vld [vmem:[%s837 + $0x4] sm:$0xf]
      %v974 = vld [vmem:[%s837 + $0x8] sm:$0xf]
      %v975 = vld [vmem:[%s837 + $0xc] sm:$0xf]
      %v976 = vlaneseq
      %v977 = vshrl.u32 %v976, 7
      %v978 = vsub.s32 0, %v977
      %v979 = vrot.slane %v905, %v978
      %v984 = vunpack.c.l.b16 %v972
      %v985 = vunpack.c.l.b16 %v973
      %v986 = vunpack.c.l.b16 %v974
      %v987 = vunpack.c.l.b16 %v975
      %v988 = vpack.c.b16 %v985, %v984
      %v989 = vpack.c.b16 %v987, %v986
      %992 = vmatprep.subr.bf16.mxu0 0
      %993 = vmatpush1.bf16.msra.mxu0 %v988
      %994 = vmatprep.subr.bf16.mxu0 0
      %995 = vmatpush1.bf16.msra.mxu0 %v989
      %996 = vmatprep.subr.bf16.mxu0 0
      %997 = vmatpush1.bf16.msra.mxu0 0
      %998 = vmatprep.subr.bf16.mxu0 0
      %999 = vmatpush1.bf16.msra.mxu0 0
      %1000 = vmatprep.subr.bf16.mxu0 0
      %1001 = vmatpush1.bf16.msra.mxu0 0
      %1002 = vmatprep.subr.bf16.mxu0 0
      %1003 = vmatpush1.bf16.msra.mxu0 0
      %1004 = vmatprep.subr.bf16.mxu0 0
      %1005 = vmatpush1.bf16.msra.mxu0 0
      %1006 = vmatprep.subr.bf16.mxu0 0
      %1007 = vmatpush1.bf16.msra.mxu0 0
      %1008 = vmatprep.subr.bf16.mxu0 0
      %1009 = vmatpush1.bf16.msra.mxu0 0
      %1010 = vmatprep.subr.bf16.mxu0 0
      %1011 = vmatpush1.bf16.msra.mxu0 0
      %1012 = vmatprep.subr.bf16.mxu0 0
      %1013 = vmatpush1.bf16.msra.mxu0 0
      %1014 = vmatprep.subr.bf16.mxu0 0
      %1015 = vmatpush1.bf16.msra.mxu0 0
      %1016 = vmatprep.subr.bf16.mxu0 0
      %1017 = vmatpush1.bf16.msra.mxu0 0
      %1018 = vmatprep.subr.bf16.mxu0 0
      %1019 = vmatpush1.bf16.msra.mxu0 0
      %1020 = vmatprep.subr.bf16.mxu0 0
      %1021 = vmatpush1.bf16.msra.mxu0 0
      %1022 = vmatprep.subr.bf16.mxu0 0
      %1023 = vmatpush1.bf16.msra.mxu0 0
      %1024 = vmatprep.mubr.bf16.mxu0 0
      %1025 = vmatmul.mubr.bf16.gmra.mrb[0].mxu0 %v929
      %v1026 = vpop.f32.mrb[0].mxu0
      %v1027 = vadd.f32 %v979, %v1026
      %v1028 = vpop.f32.mrb[0].mxu0
      %v1029 = vpop.f32.mrb[0].mxu0
      %v1030 = vadd.f32 %v979, %v1029
      %v1031 = vpop.f32.mrb[0].mxu0
      %1032 = vdwg.mxu0
      %v1033 = vld [vmem:[%s842] sm:$0xf]
      %v1034 = vld [vmem:[%s842 + $0x4] sm:$0xf]
      %v1035 = vld [vmem:[%s842 + $0x8] sm:$0xf]
      %v1036 = vld [vmem:[%s842 + $0xc] sm:$0xf]
      %v1037 = vlaneseq
      %v1038 = vshrl.u32 %v1037, 7
      %v1039 = vsub.s32 0, %v1038
      %v1040 = vrot.slane %v906, %v1039
      %v1045 = vunpack.c.l.b16 %v1033
      %v1046 = vunpack.c.l.b16 %v1034
      %v1047 = vunpack.c.l.b16 %v1035
      %v1048 = vunpack.c.l.b16 %v1036
      %v1049 = vpack.c.b16 %v1046, %v1045
      %v1050 = vpack.c.b16 %v1048, %v1047
      %1053 = vmatprep.subr.bf16.mxu0 0
      %1054 = vmatpush1.bf16.msra.mxu0 %v1049
      %1055 = vmatprep.subr.bf16.mxu0 0
      %1056 = vmatpush1.bf16.msra.mxu0 %v1050
      %1057 = vmatprep.subr.bf16.mxu0 0
      %1058 = vmatpush1.bf16.msra.mxu0 0
      %1059 = vmatprep.subr.bf16.mxu0 0
      %1060 = vmatpush1.bf16.msra.mxu0 0
      %1061 = vmatprep.subr.bf16.mxu0 0
      %1062 = vmatpush1.bf16.msra.mxu0 0
      %1063 = vmatprep.subr.bf16.mxu0 0
      %1064 = vmatpush1.bf16.msra.mxu0 0
      %1065 = vmatprep.subr.bf16.mxu0 0
      %1066 = vmatpush1.bf16.msra.mxu0 0
      %1067 = vmatprep.subr.bf16.mxu0 0
      %1068 = vmatpush1.bf16.msra.mxu0 0
      %1069 = vmatprep.subr.bf16.mxu0 0
      %1070 = vmatpush1.bf16.msra.mxu0 0
      %1071 = vmatprep.subr.bf16.mxu0 0
      %1072 = vmatpush1.bf16.msra.mxu0 0
      %1073 = vmatprep.subr.bf16.mxu0 0
      %1074 = vmatpush1.bf16.msra.mxu0 0
      %1075 = vmatprep.subr.bf16.mxu0 0
      %1076 = vmatpush1.bf16.msra.mxu0 0
      %1077 = vmatprep.subr.bf16.mxu0 0
      %1078 = vmatpush1.bf16.msra.mxu0 0
      %1079 = vmatprep.subr.bf16.mxu0 0
      %1080 = vmatpush1.bf16.msra.mxu0 0
      %1081 = vmatprep.subr.bf16.mxu0 0
      %1082 = vmatpush1.bf16.msra.mxu0 0
      %1083 = vmatprep.subr.bf16.mxu0 0
      %1084 = vmatpush1.bf16.msra.mxu0 0
      %1085 = vmatprep.mubr.bf16.mxu0 0
      %1086 = vmatmul.mubr.bf16.gmra.mrb[0].mxu0 %v929
      %v1087 = vpop.f32.mrb[0].mxu0
      %v1088 = vadd.f32 %v1040, %v1087
      %v1089 = vpop.f32.mrb[0].mxu0
      %v1090 = vpop.f32.mrb[0].mxu0
      %v1091 = vadd.f32 %v1040, %v1090
      %v1092 = vpop.f32.mrb[0].mxu0
      %1093 = vdwg.mxu0
      %v1094 = vpack.c.bf16 %v966, %v966
      %v1095 = vpack.c.bf16 %v969, %v969
      %v1096 = vpack.c.bf16 %v1027, %v1027
      %v1097 = vpack.c.bf16 %v1030, %v1030
      %v1098 = vpack.c.bf16 %v1088, %v1088
      %v1099 = vpack.c.bf16 %v1091, %v1091
      %vm1100 = vcmask 64512
      %v1102 = vsel %vm1100, %v1094, 0
      %v1105 = vsel %vm1100, %v1096, 0
      %1107 = vmatprep.subr.bf16.mxu0 0
      %1108 = vmatpush1.bf16.xpose.msra.mxu0 %v1105
      %1109 = vmatprep.subr.bf16.mxu0 0
      %1110 = vmatpush1.bf16.xpose.msra.mxu0 0
      %1111 = vmatprep.subr.bf16.mxu0 0
      %1112 = vmatpush1.bf16.xpose.msra.mxu0 0
      %1113 = vmatprep.subr.bf16.mxu0 0
      %1114 = vmatpush1.bf16.xpose.msra.mxu0 0
      %1115 = vmatprep.subr.bf16.mxu0 0
      %1116 = vmatpush1.bf16.xpose.msra.mxu0 0
      %1117 = vmatprep.subr.bf16.mxu0 0
      %1118 = vmatpush1.bf16.xpose.msra.mxu0 0
      %1119 = vmatprep.subr.bf16.mxu0 0
      %1120 = vmatpush1.bf16.xpose.msra.mxu0 0
      %1121 = vmatprep.subr.bf16.mxu0 0
      %1122 = vmatpush1.bf16.xpose.msra.mxu0 0
      %1123 = vmatprep.subr.bf16.mxu0 0
      %1124 = vmatpush1.bf16.xpose.msra.mxu0 0
      %1125 = vmatprep.subr.bf16.mxu0 0
      %1126 = vmatpush1.bf16.xpose.msra.mxu0 0
      %1127 = vmatprep.subr.bf16.mxu0 0
      %1128 = vmatpush1.bf16.xpose.msra.mxu0 0
      %1129 = vmatprep.subr.bf16.mxu0 0
      %1130 = vmatpush1.bf16.xpose.msra.mxu0 0
      %1131 = vmatprep.subr.bf16.mxu0 0
      %1132 = vmatpush1.bf16.xpose.msra.mxu0 0
      %1133 = vmatprep.subr.bf16.mxu0 0
      %1134 = vmatpush1.bf16.xpose.msra.mxu0 0
      %1135 = vmatprep.subr.bf16.mxu0 0
      %1136 = vmatpush1.bf16.xpose.msra.mxu0 0
      %1137 = vmatprep.subr.bf16.mxu0 0
      %1138 = vmatpush1.bf16.xpose.msra.mxu0 0
      %1139 = vmatprep.mubr.bf16.mxu0 0
      %1140 = vmatmul.mubr.bf16.gmra.mrb[0].mxu0 %v1102
      %v1141 = vpop.f32.mrb[0].mxu0
      %v1142 = vadd.f32 0.0, %v1141
      %v1143 = vpop.f32.mrb[0].mxu0
      %v1144 = vpop.f32.mrb[0].mxu0
      %v1145 = vpop.f32.mrb[0].mxu0
      %1146 = vdwg.mxu0
      %v1148 = vsel %vm1100, %v1095, 0
      %v1151 = vsel %vm1100, %v1097, 0
      %1153 = vmatprep.subr.bf16.mxu0 0
      %1154 = vmatpush1.bf16.xpose.msra.mxu0 %v1151
      %1155 = vmatprep.subr.bf16.mxu0 0
      %1156 = vmatpush1.bf16.xpose.msra.mxu0 0
      %1157 = vmatprep.subr.bf16.mxu0 0
      %1158 = vmatpush1.bf16.xpose.msra.mxu0 0
      %1159 = vmatprep.subr.bf16.mxu0 0
      %1160 = vmatpush1.bf16.xpose.msra.mxu0 0
      %1161 = vmatprep.subr.bf16.mxu0 0
      %1162 = vmatpush1.bf16.xpose.msra.mxu0 0
      %1163 = vmatprep.subr.bf16.mxu0 0
      %1164 = vmatpush1.bf16.xpose.msra.mxu0 0
      %1165 = vmatprep.subr.bf16.mxu0 0
      %1166 = vmatpush1.bf16.xpose.msra.mxu0 0
      %1167 = vmatprep.subr.bf16.mxu0 0
      %1168 = vmatpush1.bf16.xpose.msra.mxu0 0
      %1169 = vmatprep.subr.bf16.mxu0 0
      %1170 = vmatpush1.bf16.xpose.msra.mxu0 0
      %1171 = vmatprep.subr.bf16.mxu0 0
      %1172 = vmatpush1.bf16.xpose.msra.mxu0 0
      %1173 = vmatprep.subr.bf16.mxu0 0
      %1174 = vmatpush1.bf16.xpose.msra.mxu0 0
      %1175 = vmatprep.subr.bf16.mxu0 0
      %1176 = vmatpush1.bf16.xpose.msra.mxu0 0
      %1177 = vmatprep.subr.bf16.mxu0 0
      %1178 = vmatpush1.bf16.xpose.msra.mxu0 0
      %1179 = vmatprep.subr.bf16.mxu0 0
      %1180 = vmatpush1.bf16.xpose.msra.mxu0 0
      %1181 = vmatprep.subr.bf16.mxu0 0
      %1182 = vmatpush1.bf16.xpose.msra.mxu0 0
      %1183 = vmatprep.subr.bf16.mxu0 0
      %1184 = vmatpush1.bf16.xpose.msra.mxu0 0
      %1185 = vmatprep.mubr.bf16.mxu0 0
      %1186 = vmatmul.mubr.bf16.gmra.mrb[0].mxu0 %v1148
      %v1187 = vpop.f32.mrb[0].mxu0
      %v1188 = vadd.f32 0.0, %v1187
      %v1189 = vpop.f32.mrb[0].mxu0
      %v1190 = vpop.f32.mrb[0].mxu0
      %v1191 = vpop.f32.mrb[0].mxu0
      %1192 = vdwg.mxu0
      %v1193 = vsel %vm1100, %v1142, -inf
      %1194 = vmax.xlane.f32.xlu0 %v1193
      %v1195 = vpop.xlane.xlu0 %1194
      %v1196 = vsel %vm1100, %v1188, -inf
      %1197 = vmax.xlane.f32.xlu0 %v1196
      %v1198 = vpop.xlane.xlu0 %1197
      %v1199 = vsub.f32 %v1142, %v1195
      %v1200 = vsub.f32 %v1188, %v1198
      %v1201 = vmul.f32 %v1199, 1.442695
      %v1202 = vpow.pop %v1201
      %v1203 = vmul.f32 %v1200, 1.442695
      %v1204 = vpow.pop %v1203
      %v1205 = vsel %vm1100, %v1202, 0.0
      %1206 = vadd.xlane.f32.xlu0 %v1205
      %v1207 = vpop.xlane.xlu0 %1206
      %v1208 = vsel %vm1100, %v1204, 0.0
      %1209 = vadd.xlane.f32.xlu0 %v1208
      %v1210 = vpop.xlane.xlu0 %1209
      %v1211 = vrcp.pop %v1207
      %v1212 = vrcp.pop %v1210
      %v1213 = vmul.f32 %v1202, %v1211
      %v1214 = vmul.f32 %v1204, %v1212
      %v1215 = vpack.c.bf16 %v1213, %v1213
      %v1216 = vpack.c.bf16 %v1214, %v1214
      %v1218 = vsel %vm1100, %v1215, 0
      %vm1220 = vcmask 1043456
      %v1222 = vsel %vm1220, %v1098, 0
      %1224 = vmatprep.subr.bf16.mxu0 0
      %1225 = vmatpush1.bf16.msra.mxu0 %v1222
      %1226 = vmatprep.subr.bf16.mxu0 0
      %1227 = vmatpush1.bf16.msra.mxu0 0
      %1228 = vmatprep.subr.bf16.mxu0 0
      %1229 = vmatpush1.bf16.msra.mxu0 0
      %1230 = vmatprep.subr.bf16.mxu0 0
      %1231 = vmatpush1.bf16.msra.mxu0 0
      %1232 = vmatprep.subr.bf16.mxu0 0
      %1233 = vmatpush1.bf16.msra.mxu0 0
      %1234 = vmatprep.subr.bf16.mxu0 0
      %1235 = vmatpush1.bf16.msra.mxu0 0
      %1236 = vmatprep.subr.bf16.mxu0 0
      %1237 = vmatpush1.bf16.msra.mxu0 0
      %1238 = vmatprep.subr.bf16.mxu0 0
      %1239 = vmatpush1.bf16.msra.mxu0 0
      %1240 = vmatprep.subr.bf16.mxu0 0
      %1241 = vmatpush1.bf16.msra.mxu0 0
      %1242 = vmatprep.subr.bf16.mxu0 0
      %1243 = vmatpush1.bf16.msra.mxu0 0
      %1244 = vmatprep.subr.bf16.mxu0 0
      %1245 = vmatpush1.bf16.msra.mxu0 0
      %1246 = vmatprep.subr.bf16.mxu0 0
      %1247 = vmatpush1.bf16.msra.mxu0 0
      %1248 = vmatprep.subr.bf16.mxu0 0
      %1249 = vmatpush1.bf16.msra.mxu0 0
      %1250 = vmatprep.subr.bf16.mxu0 0
      %1251 = vmatpush1.bf16.msra.mxu0 0
      %1252 = vmatprep.subr.bf16.mxu0 0
      %1253 = vmatpush1.bf16.msra.mxu0 0
      %1254 = vmatprep.subr.bf16.mxu0 0
      %1255 = vmatpush1.bf16.msra.mxu0 0
      %1256 = vmatprep.mubr.bf16.mxu0 0
      %1257 = vmatmul.mubr.bf16.gmra.mrb[0].mxu0 %v1218
      %v1258 = vpop.f32.mrb[0].mxu0
      %v1259 = vadd.f32 0.0, %v1258
      %v1260 = vpop.f32.mrb[0].mxu0
      %v1261 = vpop.f32.mrb[0].mxu0
      %v1262 = vpop.f32.mrb[0].mxu0
      %1263 = vdwg.mxu0
      %v1265 = vsel %vm1100, %v1216, 0
      %v1268 = vsel %vm1220, %v1099, 0
      %1270 = vmatprep.subr.bf16.mxu0 0
      %1271 = vmatpush1.bf16.msra.mxu0 %v1268
      %1272 = vmatprep.subr.bf16.mxu0 0
      %1273 = vmatpush1.bf16.msra.mxu0 0
      %1274 = vmatprep.subr.bf16.mxu0 0
      %1275 = vmatpush1.bf16.msra.mxu0 0
      %1276 = vmatprep.subr.bf16.mxu0 0
      %1277 = vmatpush1.bf16.msra.mxu0 0
      %1278 = vmatprep.subr.bf16.mxu0 0
      %1279 = vmatpush1.bf16.msra.mxu0 0
      %1280 = vmatprep.subr.bf16.mxu0 0
      %1281 = vmatpush1.bf16.msra.mxu0 0
      %1282 = vmatprep.subr.bf16.mxu0 0
      %1283 = vmatpush1.bf16.msra.mxu0 0
      %1284 = vmatprep.subr.bf16.mxu0 0
      %1285 = vmatpush1.bf16.msra.mxu0 0
      %1286 = vmatprep.subr.bf16.mxu0 0
      %1287 = vmatpush1.bf16.msra.mxu0 0
      %1288 = vmatprep.subr.bf16.mxu0 0
      %1289 = vmatpush1.bf16.msra.mxu0 0
      %1290 = vmatprep.subr.bf16.mxu0 0
      %1291 = vmatpush1.bf16.msra.mxu0 0
      %1292 = vmatprep.subr.bf16.mxu0 0
      %1293 = vmatpush1.bf16.msra.mxu0 0
      %1294 = vmatprep.subr.bf16.mxu0 0
      %1295 = vmatpush1.bf16.msra.mxu0 0
      %1296 = vmatprep.subr.bf16.mxu0 0
      %1297 = vmatpush1.bf16.msra.mxu0 0
      %1298 = vmatprep.subr.bf16.mxu0 0
      %1299 = vmatpush1.bf16.msra.mxu0 0
      %1300 = vmatprep.subr.bf16.mxu0 0
      %1301 = vmatpush1.bf16.msra.mxu0 0
      %1302 = vmatprep.mubr.bf16.mxu0 0
      %1303 = vmatmul.mubr.bf16.gmra.mrb[0].mxu0 %v1265
      %v1304 = vpop.f32.mrb[0].mxu0
      %v1305 = vadd.f32 0.0, %v1304
      %v1306 = vpop.f32.mrb[0].mxu0
      %v1307 = vpop.f32.mrb[0].mxu0
      %v1308 = vpop.f32.mrb[0].mxu0
      %1309 = vdwg.mxu0
      %v1310 = vpack.c.bf16 %v1305, %v1259
      %v1311 = vld [vmem:[%s859] sm:$0xf]
      %s1312 = scalar_lea.vmem %s832, 16
      %v1313 = vld [vmem:[%s1312] sm:$0xf]
      %v1314 = vld [vmem:[%s1312 + $0x4] sm:$0xf]
      %v1315 = vld [vmem:[%s1312 + $0x8] sm:$0xf]
      %v1316 = vld [vmem:[%s1312 + $0xc] sm:$0xf]
      %v1317 = vlaneseq
      %v1318 = vshrl.u32 %v1317, 7
      %v1319 = vsub.s32 1, %v1318
      %v1320 = vrot.slane %v904, %v1319
      %v1325 = vunpack.c.l.b16 %v1313
      %v1326 = vunpack.c.l.b16 %v1314
      %v1327 = vunpack.c.l.b16 %v1315
      %v1328 = vunpack.c.l.b16 %v1316
      %v1329 = vpack.c.b16 %v1326, %v1325
      %v1330 = vpack.c.b16 %v1328, %v1327
      %1333 = vmatprep.subr.bf16.mxu0 0
      %1334 = vmatpush1.bf16.msra.mxu0 %v1329
      %1335 = vmatprep.subr.bf16.mxu0 0
      %1336 = vmatpush1.bf16.msra.mxu0 %v1330
      %1337 = vmatprep.subr.bf16.mxu0 0
      %1338 = vmatpush1.bf16.msra.mxu0 0
      %1339 = vmatprep.subr.bf16.mxu0 0
      %1340 = vmatpush1.bf16.msra.mxu0 0
      %1341 = vmatprep.subr.bf16.mxu0 0
      %1342 = vmatpush1.bf16.msra.mxu0 0
      %1343 = vmatprep.subr.bf16.mxu0 0
      %1344 = vmatpush1.bf16.msra.mxu0 0
      %1345 = vmatprep.subr.bf16.mxu0 0
      %1346 = vmatpush1.bf16.msra.mxu0 0
      %1347 = vmatprep.subr.bf16.mxu0 0
      %1348 = vmatpush1.bf16.msra.mxu0 0
      %1349 = vmatprep.subr.bf16.mxu0 0
      %1350 = vmatpush1.bf16.msra.mxu0 0
      %1351 = vmatprep.subr.bf16.mxu0 0
      %1352 = vmatpush1.bf16.msra.mxu0 0
      %1353 = vmatprep.subr.bf16.mxu0 0
      %1354 = vmatpush1.bf16.msra.mxu0 0
      %1355 = vmatprep.subr.bf16.mxu0 0
      %1356 = vmatpush1.bf16.msra.mxu0 0
      %1357 = vmatprep.subr.bf16.mxu0 0
      %1358 = vmatpush1.bf16.msra.mxu0 0
      %1359 = vmatprep.subr.bf16.mxu0 0
      %1360 = vmatpush1.bf16.msra.mxu0 0
      %1361 = vmatprep.subr.bf16.mxu0 0
      %1362 = vmatpush1.bf16.msra.mxu0 0
      %1363 = vmatprep.subr.bf16.mxu0 0
      %1364 = vmatpush1.bf16.msra.mxu0 0
      %1365 = vmatprep.mubr.bf16.mxu0 0
      %1366 = vmatmul.mubr.bf16.gmra.mrb[0].mxu0 %v929
      %v1367 = vpop.f32.mrb[0].mxu0
      %v1368 = vadd.f32 %v1320, %v1367
      %v1369 = vpop.f32.mrb[0].mxu0
      %v1370 = vpop.f32.mrb[0].mxu0
      %v1371 = vadd.f32 %v1320, %v1370
      %v1372 = vpop.f32.mrb[0].mxu0
      %1373 = vdwg.mxu0
      %s1374 = scalar_lea.vmem %s837, 16
      %v1375 = vld [vmem:[%s1374] sm:$0xf]
      %v1376 = vld [vmem:[%s1374 + $0x4] sm:$0xf]
      %v1377 = vld [vmem:[%s1374 + $0x8] sm:$0xf]
      %v1378 = vld [vmem:[%s1374 + $0xc] sm:$0xf]
      %v1379 = vlaneseq
      %v1380 = vshrl.u32 %v1379, 7
      %v1381 = vsub.s32 1, %v1380
      %v1382 = vrot.slane %v905, %v1381
      %v1387 = vunpack.c.l.b16 %v1375
      %v1388 = vunpack.c.l.b16 %v1376
      %v1389 = vunpack.c.l.b16 %v1377
      %v1390 = vunpack.c.l.b16 %v1378
      %v1391 = vpack.c.b16 %v1388, %v1387
      %v1392 = vpack.c.b16 %v1390, %v1389
      %1395 = vmatprep.subr.bf16.mxu0 0
      %1396 = vmatpush1.bf16.msra.mxu0 %v1391
      %1397 = vmatprep.subr.bf16.mxu0 0
      %1398 = vmatpush1.bf16.msra.mxu0 %v1392
      %1399 = vmatprep.subr.bf16.mxu0 0
      %1400 = vmatpush1.bf16.msra.mxu0 0
      %1401 = vmatprep.subr.bf16.mxu0 0
      %1402 = vmatpush1.bf16.msra.mxu0 0
      %1403 = vmatprep.subr.bf16.mxu0 0
      %1404 = vmatpush1.bf16.msra.mxu0 0
      %1405 = vmatprep.subr.bf16.mxu0 0
      %1406 = vmatpush1.bf16.msra.mxu0 0
      %1407 = vmatprep.subr.bf16.mxu0 0
      %1408 = vmatpush1.bf16.msra.mxu0 0
      %1409 = vmatprep.subr.bf16.mxu0 0
      %1410 = vmatpush1.bf16.msra.mxu0 0
      %1411 = vmatprep.subr.bf16.mxu0 0
      %1412 = vmatpush1.bf16.msra.mxu0 0
      %1413 = vmatprep.subr.bf16.mxu0 0
      %1414 = vmatpush1.bf16.msra.mxu0 0
      %1415 = vmatprep.subr.bf16.mxu0 0
      %1416 = vmatpush1.bf16.msra.mxu0 0
      %1417 = vmatprep.subr.bf16.mxu0 0
      %1418 = vmatpush1.bf16.msra.mxu0 0
      %1419 = vmatprep.subr.bf16.mxu0 0
      %1420 = vmatpush1.bf16.msra.mxu0 0
      %1421 = vmatprep.subr.bf16.mxu0 0
      %1422 = vmatpush1.bf16.msra.mxu0 0
      %1423 = vmatprep.subr.bf16.mxu0 0
      %1424 = vmatpush1.bf16.msra.mxu0 0
      %1425 = vmatprep.subr.bf16.mxu0 0
      %1426 = vmatpush1.bf16.msra.mxu0 0
      %1427 = vmatprep.mubr.bf16.mxu0 0
      %1428 = vmatmul.mubr.bf16.gmra.mrb[0].mxu0 %v929
      %v1429 = vpop.f32.mrb[0].mxu0
      %v1430 = vadd.f32 %v1382, %v1429
      %v1431 = vpop.f32.mrb[0].mxu0
      %v1432 = vpop.f32.mrb[0].mxu0
      %v1433 = vadd.f32 %v1382, %v1432
      %v1434 = vpop.f32.mrb[0].mxu0
      %1435 = vdwg.mxu0
      %s1436 = scalar_lea.vmem %s842, 16
      %v1437 = vld [vmem:[%s1436] sm:$0xf]
      %v1438 = vld [vmem:[%s1436 + $0x4] sm:$0xf]
      %v1439 = vld [vmem:[%s1436 + $0x8] sm:$0xf]
      %v1440 = vld [vmem:[%s1436 + $0xc] sm:$0xf]
      %v1441 = vlaneseq
      %v1442 = vshrl.u32 %v1441, 7
      %v1443 = vsub.s32 1, %v1442
      %v1444 = vrot.slane %v906, %v1443
      %v1449 = vunpack.c.l.b16 %v1437
      %v1450 = vunpack.c.l.b16 %v1438
      %v1451 = vunpack.c.l.b16 %v1439
      %v1452 = vunpack.c.l.b16 %v1440
      %v1453 = vpack.c.b16 %v1450, %v1449
      %v1454 = vpack.c.b16 %v1452, %v1451
      %1457 = vmatprep.subr.bf16.mxu0 0
      %1458 = vmatpush1.bf16.msra.mxu0 %v1453
      %1459 = vmatprep.subr.bf16.mxu0 0
      %1460 = vmatpush1.bf16.msra.mxu0 %v1454
      %1461 = vmatprep.subr.bf16.mxu0 0
      %1462 = vmatpush1.bf16.msra.mxu0 0
      %1463 = vmatprep.subr.bf16.mxu0 0
      %1464 = vmatpush1.bf16.msra.mxu0 0
      %1465 = vmatprep.subr.bf16.mxu0 0
      %1466 = vmatpush1.bf16.msra.mxu0 0
      %1467 = vmatprep.subr.bf16.mxu0 0
      %1468 = vmatpush1.bf16.msra.mxu0 0
      %1469 = vmatprep.subr.bf16.mxu0 0
      %1470 = vmatpush1.bf16.msra.mxu0 0
      %1471 = vmatprep.subr.bf16.mxu0 0
      %1472 = vmatpush1.bf16.msra.mxu0 0
      %1473 = vmatprep.subr.bf16.mxu0 0
      %1474 = vmatpush1.bf16.msra.mxu0 0
      %1475 = vmatprep.subr.bf16.mxu0 0
      %1476 = vmatpush1.bf16.msra.mxu0 0
      %1477 = vmatprep.subr.bf16.mxu0 0
      %1478 = vmatpush1.bf16.msra.mxu0 0
      %1479 = vmatprep.subr.bf16.mxu0 0
      %1480 = vmatpush1.bf16.msra.mxu0 0
      %1481 = vmatprep.subr.bf16.mxu0 0
      %1482 = vmatpush1.bf16.msra.mxu0 0
      %1483 = vmatprep.subr.bf16.mxu0 0
      %1484 = vmatpush1.bf16.msra.mxu0 0
      %1485 = vmatprep.subr.bf16.mxu0 0
      %1486 = vmatpush1.bf16.msra.mxu0 0
      %1487 = vmatprep.subr.bf16.mxu0 0
      %1488 = vmatpush1.bf16.msra.mxu0 0
      %1489 = vmatprep.mubr.bf16.mxu0 0
      %1490 = vmatmul.mubr.bf16.gmra.mrb[0].mxu0 %v929
      %v1491 = vpop.f32.mrb[0].mxu0
      %v1492 = vadd.f32 %v1444, %v1491
      %v1493 = vpop.f32.mrb[0].mxu0
      %v1494 = vpop.f32.mrb[0].mxu0
      %v1495 = vadd.f32 %v1444, %v1494
      %v1496 = vpop.f32.mrb[0].mxu0
      %1497 = vdwg.mxu0
      %v1498 = vpack.c.bf16 %v1368, %v1368
      %v1499 = vpack.c.bf16 %v1371, %v1371
      %v1500 = vpack.c.bf16 %v1430, %v1430
      %v1501 = vpack.c.bf16 %v1433, %v1433
      %v1502 = vpack.c.bf16 %v1492, %v1492
      %v1503 = vpack.c.bf16 %v1495, %v1495
      %v1505 = vsel %vm1100, %v1498, 0
      %v1508 = vsel %vm1100, %v1500, 0
      %1510 = vmatprep.subr.bf16.mxu0 0
      %1511 = vmatpush1.bf16.xpose.msra.mxu0 %v1508
      %1512 = vmatprep.subr.bf16.mxu0 0
      %1513 = vmatpush1.bf16.xpose.msra.mxu0 0
      %1514 = vmatprep.subr.bf16.mxu0 0
      %1515 = vmatpush1.bf16.xpose.msra.mxu0 0
      %1516 = vmatprep.subr.bf16.mxu0 0
      %1517 = vmatpush1.bf16.xpose.msra.mxu0 0
      %1518 = vmatprep.subr.bf16.mxu0 0
      %1519 = vmatpush1.bf16.xpose.msra.mxu0 0
      %1520 = vmatprep.subr.bf16.mxu0 0
      %1521 = vmatpush1.bf16.xpose.msra.mxu0 0
      %1522 = vmatprep.subr.bf16.mxu0 0
      %1523 = vmatpush1.bf16.xpose.msra.mxu0 0
      %1524 = vmatprep.subr.bf16.mxu0 0
      %1525 = vmatpush1.bf16.xpose.msra.mxu0 0
      %1526 = vmatprep.subr.bf16.mxu0 0
      %1527 = vmatpush1.bf16.xpose.msra.mxu0 0
      %1528 = vmatprep.subr.bf16.mxu0 0
      %1529 = vmatpush1.bf16.xpose.msra.mxu0 0
      %1530 = vmatprep.subr.bf16.mxu0 0
      %1531 = vmatpush1.bf16.xpose.msra.mxu0 0
      %1532 = vmatprep.subr.bf16.mxu0 0
      %1533 = vmatpush1.bf16.xpose.msra.mxu0 0
      %1534 = vmatprep.subr.bf16.mxu0 0
      %1535 = vmatpush1.bf16.xpose.msra.mxu0 0
      %1536 = vmatprep.subr.bf16.mxu0 0
      %1537 = vmatpush1.bf16.xpose.msra.mxu0 0
      %1538 = vmatprep.subr.bf16.mxu0 0
      %1539 = vmatpush1.bf16.xpose.msra.mxu0 0
      %1540 = vmatprep.subr.bf16.mxu0 0
      %1541 = vmatpush1.bf16.xpose.msra.mxu0 0
      %1542 = vmatprep.mubr.bf16.mxu0 0
      %1543 = vmatmul.mubr.bf16.gmra.mrb[0].mxu0 %v1505
      %v1544 = vpop.f32.mrb[0].mxu0
      %v1545 = vadd.f32 0.0, %v1544
      %v1546 = vpop.f32.mrb[0].mxu0
      %v1547 = vpop.f32.mrb[0].mxu0
      %v1548 = vpop.f32.mrb[0].mxu0
      %1549 = vdwg.mxu0
      %v1551 = vsel %vm1100, %v1499, 0
      %v1554 = vsel %vm1100, %v1501, 0
      %1556 = vmatprep.subr.bf16.mxu0 0
      %1557 = vmatpush1.bf16.xpose.msra.mxu0 %v1554
      %1558 = vmatprep.subr.bf16.mxu0 0
      %1559 = vmatpush1.bf16.xpose.msra.mxu0 0
      %1560 = vmatprep.subr.bf16.mxu0 0
      %1561 = vmatpush1.bf16.xpose.msra.mxu0 0
      %1562 = vmatprep.subr.bf16.mxu0 0
      %1563 = vmatpush1.bf16.xpose.msra.mxu0 0
      %1564 = vmatprep.subr.bf16.mxu0 0
      %1565 = vmatpush1.bf16.xpose.msra.mxu0 0
      %1566 = vmatprep.subr.bf16.mxu0 0
      %1567 = vmatpush1.bf16.xpose.msra.mxu0 0
      %1568 = vmatprep.subr.bf16.mxu0 0
      %1569 = vmatpush1.bf16.xpose.msra.mxu0 0
      %1570 = vmatprep.subr.bf16.mxu0 0
      %1571 = vmatpush1.bf16.xpose.msra.mxu0 0
      %1572 = vmatprep.subr.bf16.mxu0 0
      %1573 = vmatpush1.bf16.xpose.msra.mxu0 0
      %1574 = vmatprep.subr.bf16.mxu0 0
      %1575 = vmatpush1.bf16.xpose.msra.mxu0 0
      %1576 = vmatprep.subr.bf16.mxu0 0
      %1577 = vmatpush1.bf16.xpose.msra.mxu0 0
      %1578 = vmatprep.subr.bf16.mxu0 0
      %1579 = vmatpush1.bf16.xpose.msra.mxu0 0
      %1580 = vmatprep.subr.bf16.mxu0 0
      %1581 = vmatpush1.bf16.xpose.msra.mxu0 0
      %1582 = vmatprep.subr.bf16.mxu0 0
      %1583 = vmatpush1.bf16.xpose.msra.mxu0 0
      %1584 = vmatprep.subr.bf16.mxu0 0
      %1585 = vmatpush1.bf16.xpose.msra.mxu0 0
      %1586 = vmatprep.subr.bf16.mxu0 0
      %1587 = vmatpush1.bf16.xpose.msra.mxu0 0
      %1588 = vmatprep.mubr.bf16.mxu0 0
      %1589 = vmatmul.mubr.bf16.gmra.mrb[0].mxu0 %v1551
      %v1590 = vpop.f32.mrb[0].mxu0
      %v1591 = vadd.f32 0.0, %v1590
      %v1592 = vpop.f32.mrb[0].mxu0
      %v1593 = vpop.f32.mrb[0].mxu0
      %v1594 = vpop.f32.mrb[0].mxu0
      %1595 = vdwg.mxu0
      %v1596 = vsel %vm1100, %v1545, -inf
      %1597 = vmax.xlane.f32.xlu0 %v1596
      %v1598 = vpop.xlane.xlu0 %1597
      %v1599 = vsel %vm1100, %v1591, -inf
      %1600 = vmax.xlane.f32.xlu0 %v1599
      %v1601 = vpop.xlane.xlu0 %1600
      %v1602 = vsub.f32 %v1545, %v1598
      %v1603 = vsub.f32 %v1591, %v1601
      %v1604 = vmul.f32 %v1602, 1.442695
      %v1605 = vpow.pop %v1604
      %v1606 = vmul.f32 %v1603, 1.442695
      %v1607 = vpow.pop %v1606
      %v1608 = vsel %vm1100, %v1605, 0.0
      %1609 = vadd.xlane.f32.xlu0 %v1608
      %v1610 = vpop.xlane.xlu0 %1609
      %v1611 = vsel %vm1100, %v1607, 0.0
      %1612 = vadd.xlane.f32.xlu0 %v1611
      %v1613 = vpop.xlane.xlu0 %1612
      %v1614 = vrcp.pop %v1610
      %v1615 = vrcp.pop %v1613
      %v1616 = vmul.f32 %v1605, %v1614
      %v1617 = vmul.f32 %v1607, %v1615
      %v1618 = vpack.c.bf16 %v1616, %v1616
      %v1619 = vpack.c.bf16 %v1617, %v1617
      %v1621 = vsel %vm1100, %v1618, 0
      %v1624 = vsel %vm1220, %v1502, 0
      %1626 = vmatprep.subr.bf16.mxu0 0
      %1627 = vmatpush1.bf16.msra.mxu0 %v1624
      %1628 = vmatprep.subr.bf16.mxu0 0
      %1629 = vmatpush1.bf16.msra.mxu0 0
      %1630 = vmatprep.subr.bf16.mxu0 0
      %1631 = vmatpush1.bf16.msra.mxu0 0
      %1632 = vmatprep.subr.bf16.mxu0 0
      %1633 = vmatpush1.bf16.msra.mxu0 0
      %1634 = vmatprep.subr.bf16.mxu0 0
      %1635 = vmatpush1.bf16.msra.mxu0 0
      %1636 = vmatprep.subr.bf16.mxu0 0
      %1637 = vmatpush1.bf16.msra.mxu0 0
      %1638 = vmatprep.subr.bf16.mxu0 0
      %1639 = vmatpush1.bf16.msra.mxu0 0
      %1640 = vmatprep.subr.bf16.mxu0 0
      %1641 = vmatpush1.bf16.msra.mxu0 0
      %1642 = vmatprep.subr.bf16.mxu0 0
      %1643 = vmatpush1.bf16.msra.mxu0 0
      %1644 = vmatprep.subr.bf16.mxu0 0
      %1645 = vmatpush1.bf16.msra.mxu0 0
      %1646 = vmatprep.subr.bf16.mxu0 0
      %1647 = vmatpush1.bf16.msra.mxu0 0
      %1648 = vmatprep.subr.bf16.mxu0 0
      %1649 = vmatpush1.bf16.msra.mxu0 0
      %1650 = vmatprep.subr.bf16.mxu0 0
      %1651 = vmatpush1.bf16.msra.mxu0 0
      %1652 = vmatprep.subr.bf16.mxu0 0
      %1653 = vmatpush1.bf16.msra.mxu0 0
      %1654 = vmatprep.subr.bf16.mxu0 0
      %1655 = vmatpush1.bf16.msra.mxu0 0
      %1656 = vmatprep.subr.bf16.mxu0 0
      %1657 = vmatpush1.bf16.msra.mxu0 0
      %1658 = vmatprep.mubr.bf16.mxu0 0
      %1659 = vmatmul.mubr.bf16.gmra.mrb[0].mxu0 %v1621
      %v1660 = vpop.f32.mrb[0].mxu0
      %v1661 = vadd.f32 0.0, %v1660
      %v1662 = vpop.f32.mrb[0].mxu0
      %v1663 = vpop.f32.mrb[0].mxu0
      %v1664 = vpop.f32.mrb[0].mxu0
      %1665 = vdwg.mxu0
      %v1667 = vsel %vm1100, %v1619, 0
      %v1670 = vsel %vm1220, %v1503, 0
      %1672 = vmatprep.subr.bf16.mxu0 0
      %1673 = vmatpush1.bf16.msra.mxu0 %v1670
      %1674 = vmatprep.subr.bf16.mxu0 0
      %1675 = vmatpush1.bf16.msra.mxu0 0
      %1676 = vmatprep.subr.bf16.mxu0 0
      %1677 = vmatpush1.bf16.msra.mxu0 0
      %1678 = vmatprep.subr.bf16.mxu0 0
      %1679 = vmatpush1.bf16.msra.mxu0 0
      %1680 = vmatprep.subr.bf16.mxu0 0
      %1681 = vmatpush1.bf16.msra.mxu0 0
      %1682 = vmatprep.subr.bf16.mxu0 0
      %1683 = vmatpush1.bf16.msra.mxu0 0
      %1684 = vmatprep.subr.bf16.mxu0 0
      %1685 = vmatpush1.bf16.msra.mxu0 0
      %1686 = vmatprep.subr.bf16.mxu0 0
      %1687 = vmatpush1.bf16.msra.mxu0 0
      %1688 = vmatprep.subr.bf16.mxu0 0
      %1689 = vmatpush1.bf16.msra.mxu0 0
      %1690 = vmatprep.subr.bf16.mxu0 0
      %1691 = vmatpush1.bf16.msra.mxu0 0
      %1692 = vmatprep.subr.bf16.mxu0 0
      %1693 = vmatpush1.bf16.msra.mxu0 0
      %1694 = vmatprep.subr.bf16.mxu0 0
      %1695 = vmatpush1.bf16.msra.mxu0 0
      %1696 = vmatprep.subr.bf16.mxu0 0
      %1697 = vmatpush1.bf16.msra.mxu0 0
      %1698 = vmatprep.subr.bf16.mxu0 0
      %1699 = vmatpush1.bf16.msra.mxu0 0
      %1700 = vmatprep.subr.bf16.mxu0 0
      %1701 = vmatpush1.bf16.msra.mxu0 0
      %1702 = vmatprep.subr.bf16.mxu0 0
      %1703 = vmatpush1.bf16.msra.mxu0 0
      %1704 = vmatprep.mubr.bf16.mxu0 0
      %1705 = vmatmul.mubr.bf16.gmra.mrb[0].mxu0 %v1667
      %v1706 = vpop.f32.mrb[0].mxu0
      %v1707 = vadd.f32 0.0, %v1706
      %v1708 = vpop.f32.mrb[0].mxu0
      %v1709 = vpop.f32.mrb[0].mxu0
      %v1710 = vpop.f32.mrb[0].mxu0
      %1711 = vdwg.mxu0
      %v1712 = vpack.c.bf16 %v1707, %v1661
      %s1713 = scalar_lea.vmem %s859, 4
      %v1714 = vld [vmem:[%s1713] sm:$0xf]
      %v1716 = vsel %vm1100, %v1712, 0
      %v1719 = vsel %vm1220, %v1714, 0
      %1721 = vmatprep.subr.bf16.mxu0 0
      %1722 = vmatpush1.bf16.msra.mxu0 %v1719
      %1723 = vmatprep.subr.bf16.mxu0 0
      %1724 = vmatpush1.bf16.msra.mxu0 0
      %1725 = vmatprep.subr.bf16.mxu0 0
      %1726 = vmatpush1.bf16.msra.mxu0 0
      %1727 = vmatprep.subr.bf16.mxu0 0
      %1728 = vmatpush1.bf16.msra.mxu0 0
      %1729 = vmatprep.subr.bf16.mxu0 0
      %1730 = vmatpush1.bf16.msra.mxu0 0
      %1731 = vmatprep.subr.bf16.mxu0 0
      %1732 = vmatpush1.bf16.msra.mxu0 0
      %1733 = vmatprep.subr.bf16.mxu0 0
      %1734 = vmatpush1.bf16.msra.mxu0 0
      %1735 = vmatprep.subr.bf16.mxu0 0
      %1736 = vmatpush1.bf16.msra.mxu0 0
      %1737 = vmatprep.subr.bf16.mxu0 0
      %1738 = vmatpush1.bf16.msra.mxu0 0
      %1739 = vmatprep.subr.bf16.mxu0 0
      %1740 = vmatpush1.bf16.msra.mxu0 0
      %1741 = vmatprep.subr.bf16.mxu0 0
      %1742 = vmatpush1.bf16.msra.mxu0 0
      %1743 = vmatprep.subr.bf16.mxu0 0
      %1744 = vmatpush1.bf16.msra.mxu0 0
      %1745 = vmatprep.subr.bf16.mxu0 0
      %1746 = vmatpush1.bf16.msra.mxu0 0
      %1747 = vmatprep.subr.bf16.mxu0 0
      %1748 = vmatpush1.bf16.msra.mxu0 0
      %1749 = vmatprep.subr.bf16.mxu0 0
      %1750 = vmatpush1.bf16.msra.mxu0 0
      %1751 = vmatprep.subr.bf16.mxu0 0
      %1752 = vmatpush1.bf16.msra.mxu0 0
      %1753 = vmatprep.mubr.bf16.mxu0 0
      %1754 = vmatmul.mubr.bf16.gmra.mrb[0].mxu0 %v1716
      %v1755 = vpop.f32.mrb[0].mxu0
      %v1756 = vadd.f32 0.0, %v1755
      %v1757 = vpop.f32.mrb[0].mxu0
      %v1758 = vpop.f32.mrb[0].mxu0
      %v1759 = vadd.f32 0.0, %v1758
      %v1760 = vpop.f32.mrb[0].mxu0
      %1761 = vdwg.mxu0
      %v1763 = vsel %vm1100, %v1310, 0
      %v1766 = vsel %vm1220, %v1311, 0
      %1768 = vmatprep.subr.bf16.mxu0 0
      %1769 = vmatpush1.bf16.msra.mxu0 %v1766
      %1770 = vmatprep.subr.bf16.mxu0 0
      %1771 = vmatpush1.bf16.msra.mxu0 0
      %1772 = vmatprep.subr.bf16.mxu0 0
      %1773 = vmatpush1.bf16.msra.mxu0 0
      %1774 = vmatprep.subr.bf16.mxu0 0
      %1775 = vmatpush1.bf16.msra.mxu0 0
      %1776 = vmatprep.subr.bf16.mxu0 0
      %1777 = vmatpush1.bf16.msra.mxu0 0
      %1778 = vmatprep.subr.bf16.mxu0 0
      %1779 = vmatpush1.bf16.msra.mxu0 0
      %1780 = vmatprep.subr.bf16.mxu0 0
      %1781 = vmatpush1.bf16.msra.mxu0 0
      %1782 = vmatprep.subr.bf16.mxu0 0
      %1783 = vmatpush1.bf16.msra.mxu0 0
      %1784 = vmatprep.subr.bf16.mxu0 0
      %1785 = vmatpush1.bf16.msra.mxu0 0
      %1786 = vmatprep.subr.bf16.mxu0 0
      %1787 = vmatpush1.bf16.msra.mxu0 0
      %1788 = vmatprep.subr.bf16.mxu0 0
      %1789 = vmatpush1.bf16.msra.mxu0 0
      %1790 = vmatprep.subr.bf16.mxu0 0
      %1791 = vmatpush1.bf16.msra.mxu0 0
      %1792 = vmatprep.subr.bf16.mxu0 0
      %1793 = vmatpush1.bf16.msra.mxu0 0
      %1794 = vmatprep.subr.bf16.mxu0 0
      %1795 = vmatpush1.bf16.msra.mxu0 0
      %1796 = vmatprep.subr.bf16.mxu0 0
      %1797 = vmatpush1.bf16.msra.mxu0 0
      %1798 = vmatprep.subr.bf16.mxu0 0
      %1799 = vmatpush1.bf16.msra.mxu0 0
      %1800 = vmatprep.mubr.bf16.mxu0 0
      %1801 = vmatmul.mubr.bf16.gmra.mrb[0].mxu0 %v1763
      %v1802 = vpop.f32.mrb[0].mxu0
      %v1803 = vadd.f32 %v1756, %v1802
      %v1804 = vpop.f32.mrb[0].mxu0
      %v1805 = vpop.f32.mrb[0].mxu0
      %v1806 = vadd.f32 %v1759, %v1805
      %v1807 = vpop.f32.mrb[0].mxu0
      %1808 = vdwg.mxu0
      %s1809 = scalar_lea.vmem %s832, 32
      %v1810 = vld [vmem:[%s1809] sm:$0xf]
      %v1811 = vld [vmem:[%s1809 + $0x4] sm:$0xf]
      %v1812 = vld [vmem:[%s1809 + $0x8] sm:$0xf]
      %v1813 = vld [vmem:[%s1809 + $0xc] sm:$0xf]
      %v1814 = vlaneseq
      %v1815 = vshrl.u32 %v1814, 7
      %v1816 = vsub.s32 2, %v1815
      %v1817 = vrot.slane %v904, %v1816
      %v1822 = vunpack.c.l.b16 %v1810
      %v1823 = vunpack.c.l.b16 %v1811
      %v1824 = vunpack.c.l.b16 %v1812
      %v1825 = vunpack.c.l.b16 %v1813
      %v1826 = vpack.c.b16 %v1823, %v1822
      %v1827 = vpack.c.b16 %v1825, %v1824
      %1830 = vmatprep.subr.bf16.mxu0 0
      %1831 = vmatpush1.bf16.msra.mxu0 %v1826
      %1832 = vmatprep.subr.bf16.mxu0 0
      %1833 = vmatpush1.bf16.msra.mxu0 %v1827
      %1834 = vmatprep.subr.bf16.mxu0 0
      %1835 = vmatpush1.bf16.msra.mxu0 0
      %1836 = vmatprep.subr.bf16.mxu0 0
      %1837 = vmatpush1.bf16.msra.mxu0 0
      %1838 = vmatprep.subr.bf16.mxu0 0
      %1839 = vmatpush1.bf16.msra.mxu0 0
      %1840 = vmatprep.subr.bf16.mxu0 0
      %1841 = vmatpush1.bf16.msra.mxu0 0
      %1842 = vmatprep.subr.bf16.mxu0 0
      %1843 = vmatpush1.bf16.msra.mxu0 0
      %1844 = vmatprep.subr.bf16.mxu0 0
      %1845 = vmatpush1.bf16.msra.mxu0 0
      %1846 = vmatprep.subr.bf16.mxu0 0
      %1847 = vmatpush1.bf16.msra.mxu0 0
      %1848 = vmatprep.subr.bf16.mxu0 0
      %1849 = vmatpush1.bf16.msra.mxu0 0
      %1850 = vmatprep.subr.bf16.mxu0 0
      %1851 = vmatpush1.bf16.msra.mxu0 0
      %1852 = vmatprep.subr.bf16.mxu0 0
      %1853 = vmatpush1.bf16.msra.mxu0 0
      %1854 = vmatprep.subr.bf16.mxu0 0
      %1855 = vmatpush1.bf16.msra.mxu0 0
      %1856 = vmatprep.subr.bf16.mxu0 0
      %1857 = vmatpush1.bf16.msra.mxu0 0
      %1858 = vmatprep.subr.bf16.mxu0 0
      %1859 = vmatpush1.bf16.msra.mxu0 0
      %1860 = vmatprep.subr.bf16.mxu0 0
      %1861 = vmatpush1.bf16.msra.mxu0 0
      %1862 = vmatprep.mubr.bf16.mxu0 0
      %1863 = vmatmul.mubr.bf16.gmra.mrb[0].mxu0 %v929
      %v1864 = vpop.f32.mrb[0].mxu0
      %v1865 = vadd.f32 %v1817, %v1864
      %v1866 = vpop.f32.mrb[0].mxu0
      %v1867 = vpop.f32.mrb[0].mxu0
      %v1868 = vadd.f32 %v1817, %v1867
      %v1869 = vpop.f32.mrb[0].mxu0
      %1870 = vdwg.mxu0
      %s1871 = scalar_lea.vmem %s837, 32
      %v1872 = vld [vmem:[%s1871] sm:$0xf]
      %v1873 = vld [vmem:[%s1871 + $0x4] sm:$0xf]
      %v1874 = vld [vmem:[%s1871 + $0x8] sm:$0xf]
      %v1875 = vld [vmem:[%s1871 + $0xc] sm:$0xf]
      %v1876 = vlaneseq
      %v1877 = vshrl.u32 %v1876, 7
      %v1878 = vsub.s32 2, %v1877
      %v1879 = vrot.slane %v905, %v1878
      %v1884 = vunpack.c.l.b16 %v1872
      %v1885 = vunpack.c.l.b16 %v1873
      %v1886 = vunpack.c.l.b16 %v1874
      %v1887 = vunpack.c.l.b16 %v1875
      %v1888 = vpack.c.b16 %v1885, %v1884
      %v1889 = vpack.c.b16 %v1887, %v1886
      %1892 = vmatprep.subr.bf16.mxu0 0
      %1893 = vmatpush1.bf16.msra.mxu0 %v1888
      %1894 = vmatprep.subr.bf16.mxu0 0
      %1895 = vmatpush1.bf16.msra.mxu0 %v1889
      %1896 = vmatprep.subr.bf16.mxu0 0
      %1897 = vmatpush1.bf16.msra.mxu0 0
      %1898 = vmatprep.subr.bf16.mxu0 0
      %1899 = vmatpush1.bf16.msra.mxu0 0
      %1900 = vmatprep.subr.bf16.mxu0 0
      %1901 = vmatpush1.bf16.msra.mxu0 0
      %1902 = vmatprep.subr.bf16.mxu0 0
      %1903 = vmatpush1.bf16.msra.mxu0 0
      %1904 = vmatprep.subr.bf16.mxu0 0
      %1905 = vmatpush1.bf16.msra.mxu0 0
      %1906 = vmatprep.subr.bf16.mxu0 0
      %1907 = vmatpush1.bf16.msra.mxu0 0
      %1908 = vmatprep.subr.bf16.mxu0 0
      %1909 = vmatpush1.bf16.msra.mxu0 0
      %1910 = vmatprep.subr.bf16.mxu0 0
      %1911 = vmatpush1.bf16.msra.mxu0 0
      %1912 = vmatprep.subr.bf16.mxu0 0
      %1913 = vmatpush1.bf16.msra.mxu0 0
      %1914 = vmatprep.subr.bf16.mxu0 0
      %1915 = vmatpush1.bf16.msra.mxu0 0
      %1916 = vmatprep.subr.bf16.mxu0 0
      %1917 = vmatpush1.bf16.msra.mxu0 0
      %1918 = vmatprep.subr.bf16.mxu0 0
      %1919 = vmatpush1.bf16.msra.mxu0 0
      %1920 = vmatprep.subr.bf16.mxu0 0
      %1921 = vmatpush1.bf16.msra.mxu0 0
      %1922 = vmatprep.subr.bf16.mxu0 0
      %1923 = vmatpush1.bf16.msra.mxu0 0
      %1924 = vmatprep.mubr.bf16.mxu0 0
      %1925 = vmatmul.mubr.bf16.gmra.mrb[0].mxu0 %v929
      %v1926 = vpop.f32.mrb[0].mxu0
      %v1927 = vadd.f32 %v1879, %v1926
      %v1928 = vpop.f32.mrb[0].mxu0
      %v1929 = vpop.f32.mrb[0].mxu0
      %v1930 = vadd.f32 %v1879, %v1929
      %v1931 = vpop.f32.mrb[0].mxu0
      %1932 = vdwg.mxu0
      %s1933 = scalar_lea.vmem %s842, 32
      %v1934 = vld [vmem:[%s1933] sm:$0xf]
      %v1935 = vld [vmem:[%s1933 + $0x4] sm:$0xf]
      %v1936 = vld [vmem:[%s1933 + $0x8] sm:$0xf]
      %v1937 = vld [vmem:[%s1933 + $0xc] sm:$0xf]
      %v1938 = vlaneseq
      %v1939 = vshrl.u32 %v1938, 7
      %v1940 = vsub.s32 2, %v1939
      %v1941 = vrot.slane %v906, %v1940
      %v1946 = vunpack.c.l.b16 %v1934
      %v1947 = vunpack.c.l.b16 %v1935
      %v1948 = vunpack.c.l.b16 %v1936
      %v1949 = vunpack.c.l.b16 %v1937
      %v1950 = vpack.c.b16 %v1947, %v1946
      %v1951 = vpack.c.b16 %v1949, %v1948
      %1954 = vmatprep.subr.bf16.mxu0 0
      %1955 = vmatpush1.bf16.msra.mxu0 %v1950
      %1956 = vmatprep.subr.bf16.mxu0 0
      %1957 = vmatpush1.bf16.msra.mxu0 %v1951
      %1958 = vmatprep.subr.bf16.mxu0 0
      %1959 = vmatpush1.bf16.msra.mxu0 0
      %1960 = vmatprep.subr.bf16.mxu0 0
      %1961 = vmatpush1.bf16.msra.mxu0 0
      %1962 = vmatprep.subr.bf16.mxu0 0
      %1963 = vmatpush1.bf16.msra.mxu0 0
      %1964 = vmatprep.subr.bf16.mxu0 0
      %1965 = vmatpush1.bf16.msra.mxu0 0
      %1966 = vmatprep.subr.bf16.mxu0 0
      %1967 = vmatpush1.bf16.msra.mxu0 0
      %1968 = vmatprep.subr.bf16.mxu0 0
      %1969 = vmatpush1.bf16.msra.mxu0 0
      %1970 = vmatprep.subr.bf16.mxu0 0
      %1971 = vmatpush1.bf16.msra.mxu0 0
      %1972 = vmatprep.subr.bf16.mxu0 0
      %1973 = vmatpush1.bf16.msra.mxu0 0
      %1974 = vmatprep.subr.bf16.mxu0 0
      %1975 = vmatpush1.bf16.msra.mxu0 0
      %1976 = vmatprep.subr.bf16.mxu0 0
      %1977 = vmatpush1.bf16.msra.mxu0 0
      %1978 = vmatprep.subr.bf16.mxu0 0
      %1979 = vmatpush1.bf16.msra.mxu0 0
      %1980 = vmatprep.subr.bf16.mxu0 0
      %1981 = vmatpush1.bf16.msra.mxu0 0
      %1982 = vmatprep.subr.bf16.mxu0 0
      %1983 = vmatpush1.bf16.msra.mxu0 0
      %1984 = vmatprep.subr.bf16.mxu0 0
      %1985 = vmatpush1.bf16.msra.mxu0 0
      %1986 = vmatprep.mubr.bf16.mxu0 0
      %1987 = vmatmul.mubr.bf16.gmra.mrb[0].mxu0 %v929
      %v1988 = vpop.f32.mrb[0].mxu0
      %v1989 = vadd.f32 %v1941, %v1988
      %v1990 = vpop.f32.mrb[0].mxu0
      %v1991 = vpop.f32.mrb[0].mxu0
      %v1992 = vadd.f32 %v1941, %v1991
      %v1993 = vpop.f32.mrb[0].mxu0
      %1994 = vdwg.mxu0
      %v1995 = vpack.c.bf16 %v1865, %v1865
      %v1996 = vpack.c.bf16 %v1868, %v1868
      %v1997 = vpack.c.bf16 %v1927, %v1927
      %v1998 = vpack.c.bf16 %v1930, %v1930
      %v1999 = vpack.c.bf16 %v1989, %v1989
      %v2000 = vpack.c.bf16 %v1992, %v1992
      %v2002 = vsel %vm1100, %v1995, 0
      %v2005 = vsel %vm1100, %v1997, 0
      %2007 = vmatprep.subr.bf16.mxu0 0
      %2008 = vmatpush1.bf16.xpose.msra.mxu0 %v2005
      %2009 = vmatprep.subr.bf16.mxu0 0
      %2010 = vmatpush1.bf16.xpose.msra.mxu0 0
      %2011 = vmatprep.subr.bf16.mxu0 0
      %2012 = vmatpush1.bf16.xpose.msra.mxu0 0
      %2013 = vmatprep.subr.bf16.mxu0 0
      %2014 = vmatpush1.bf16.xpose.msra.mxu0 0
      %2015 = vmatprep.subr.bf16.mxu0 0
      %2016 = vmatpush1.bf16.xpose.msra.mxu0 0
      %2017 = vmatprep.subr.bf16.mxu0 0
      %2018 = vmatpush1.bf16.xpose.msra.mxu0 0
      %2019 = vmatprep.subr.bf16.mxu0 0
      %2020 = vmatpush1.bf16.xpose.msra.mxu0 0
      %2021 = vmatprep.subr.bf16.mxu0 0
      %2022 = vmatpush1.bf16.xpose.msra.mxu0 0
      %2023 = vmatprep.subr.bf16.mxu0 0
      %2024 = vmatpush1.bf16.xpose.msra.mxu0 0
      %2025 = vmatprep.subr.bf16.mxu0 0
      %2026 = vmatpush1.bf16.xpose.msra.mxu0 0
      %2027 = vmatprep.subr.bf16.mxu0 0
      %2028 = vmatpush1.bf16.xpose.msra.mxu0 0
      %2029 = vmatprep.subr.bf16.mxu0 0
      %2030 = vmatpush1.bf16.xpose.msra.mxu0 0
      %2031 = vmatprep.subr.bf16.mxu0 0
      %2032 = vmatpush1.bf16.xpose.msra.mxu0 0
      %2033 = vmatprep.subr.bf16.mxu0 0
      %2034 = vmatpush1.bf16.xpose.msra.mxu0 0
      %2035 = vmatprep.subr.bf16.mxu0 0
      %2036 = vmatpush1.bf16.xpose.msra.mxu0 0
      %2037 = vmatprep.subr.bf16.mxu0 0
      %2038 = vmatpush1.bf16.xpose.msra.mxu0 0
      %2039 = vmatprep.mubr.bf16.mxu0 0
      %2040 = vmatmul.mubr.bf16.gmra.mrb[0].mxu0 %v2002
      %v2041 = vpop.f32.mrb[0].mxu0
      %v2042 = vadd.f32 0.0, %v2041
      %v2043 = vpop.f32.mrb[0].mxu0
      %v2044 = vpop.f32.mrb[0].mxu0
      %v2045 = vpop.f32.mrb[0].mxu0
      %2046 = vdwg.mxu0
      %v2048 = vsel %vm1100, %v1996, 0
      %v2051 = vsel %vm1100, %v1998, 0
      %2053 = vmatprep.subr.bf16.mxu0 0
      %2054 = vmatpush1.bf16.xpose.msra.mxu0 %v2051
      %2055 = vmatprep.subr.bf16.mxu0 0
      %2056 = vmatpush1.bf16.xpose.msra.mxu0 0
      %2057 = vmatprep.subr.bf16.mxu0 0
      %2058 = vmatpush1.bf16.xpose.msra.mxu0 0
      %2059 = vmatprep.subr.bf16.mxu0 0
      %2060 = vmatpush1.bf16.xpose.msra.mxu0 0
      %2061 = vmatprep.subr.bf16.mxu0 0
      %2062 = vmatpush1.bf16.xpose.msra.mxu0 0
      %2063 = vmatprep.subr.bf16.mxu0 0
      %2064 = vmatpush1.bf16.xpose.msra.mxu0 0
      %2065 = vmatprep.subr.bf16.mxu0 0
      %2066 = vmatpush1.bf16.xpose.msra.mxu0 0
      %2067 = vmatprep.subr.bf16.mxu0 0
      %2068 = vmatpush1.bf16.xpose.msra.mxu0 0
      %2069 = vmatprep.subr.bf16.mxu0 0
      %2070 = vmatpush1.bf16.xpose.msra.mxu0 0
      %2071 = vmatprep.subr.bf16.mxu0 0
      %2072 = vmatpush1.bf16.xpose.msra.mxu0 0
      %2073 = vmatprep.subr.bf16.mxu0 0
      %2074 = vmatpush1.bf16.xpose.msra.mxu0 0
      %2075 = vmatprep.subr.bf16.mxu0 0
      %2076 = vmatpush1.bf16.xpose.msra.mxu0 0
      %2077 = vmatprep.subr.bf16.mxu0 0
      %2078 = vmatpush1.bf16.xpose.msra.mxu0 0
      %2079 = vmatprep.subr.bf16.mxu0 0
      %2080 = vmatpush1.bf16.xpose.msra.mxu0 0
      %2081 = vmatprep.subr.bf16.mxu0 0
      %2082 = vmatpush1.bf16.xpose.msra.mxu0 0
      %2083 = vmatprep.subr.bf16.mxu0 0
      %2084 = vmatpush1.bf16.xpose.msra.mxu0 0
      %2085 = vmatprep.mubr.bf16.mxu0 0
      %2086 = vmatmul.mubr.bf16.gmra.mrb[0].mxu0 %v2048
      %v2087 = vpop.f32.mrb[0].mxu0
      %v2088 = vadd.f32 0.0, %v2087
      %v2089 = vpop.f32.mrb[0].mxu0
      %v2090 = vpop.f32.mrb[0].mxu0
      %v2091 = vpop.f32.mrb[0].mxu0
      %2092 = vdwg.mxu0
      %v2093 = vsel %vm1100, %v2042, -inf
      %2094 = vmax.xlane.f32.xlu0 %v2093
      %v2095 = vpop.xlane.xlu0 %2094
      %v2096 = vsel %vm1100, %v2088, -inf
      %2097 = vmax.xlane.f32.xlu0 %v2096
      %v2098 = vpop.xlane.xlu0 %2097
      %v2099 = vsub.f32 %v2042, %v2095
      %v2100 = vsub.f32 %v2088, %v2098
      %v2101 = vmul.f32 %v2099, 1.442695
      %v2102 = vpow.pop %v2101
      %v2103 = vmul.f32 %v2100, 1.442695
      %v2104 = vpow.pop %v2103
      %v2105 = vsel %vm1100, %v2102, 0.0
      %2106 = vadd.xlane.f32.xlu0 %v2105
      %v2107 = vpop.xlane.xlu0 %2106
      %v2108 = vsel %vm1100, %v2104, 0.0
      %2109 = vadd.xlane.f32.xlu0 %v2108
      %v2110 = vpop.xlane.xlu0 %2109
      %v2111 = vrcp.pop %v2107
      %v2112 = vrcp.pop %v2110
      %v2113 = vmul.f32 %v2102, %v2111
      %v2114 = vmul.f32 %v2104, %v2112
      %v2115 = vpack.c.bf16 %v2113, %v2113
      %v2116 = vpack.c.bf16 %v2114, %v2114
      %v2118 = vsel %vm1100, %v2115, 0
      %v2121 = vsel %vm1220, %v1999, 0
      %2123 = vmatprep.subr.bf16.mxu0 0
      %2124 = vmatpush1.bf16.msra.mxu0 %v2121
      %2125 = vmatprep.subr.bf16.mxu0 0
      %2126 = vmatpush1.bf16.msra.mxu0 0
      %2127 = vmatprep.subr.bf16.mxu0 0
      %2128 = vmatpush1.bf16.msra.mxu0 0
      %2129 = vmatprep.subr.bf16.mxu0 0
      %2130 = vmatpush1.bf16.msra.mxu0 0
      %2131 = vmatprep.subr.bf16.mxu0 0
      %2132 = vmatpush1.bf16.msra.mxu0 0
      %2133 = vmatprep.subr.bf16.mxu0 0
      %2134 = vmatpush1.bf16.msra.mxu0 0
      %2135 = vmatprep.subr.bf16.mxu0 0
      %2136 = vmatpush1.bf16.msra.mxu0 0
      %2137 = vmatprep.subr.bf16.mxu0 0
      %2138 = vmatpush1.bf16.msra.mxu0 0
      %2139 = vmatprep.subr.bf16.mxu0 0
      %2140 = vmatpush1.bf16.msra.mxu0 0
      %2141 = vmatprep.subr.bf16.mxu0 0
      %2142 = vmatpush1.bf16.msra.mxu0 0
      %2143 = vmatprep.subr.bf16.mxu0 0
      %2144 = vmatpush1.bf16.msra.mxu0 0
      %2145 = vmatprep.subr.bf16.mxu0 0
      %2146 = vmatpush1.bf16.msra.mxu0 0
      %2147 = vmatprep.subr.bf16.mxu0 0
      %2148 = vmatpush1.bf16.msra.mxu0 0
      %2149 = vmatprep.subr.bf16.mxu0 0
      %2150 = vmatpush1.bf16.msra.mxu0 0
      %2151 = vmatprep.subr.bf16.mxu0 0
      %2152 = vmatpush1.bf16.msra.mxu0 0
      %2153 = vmatprep.subr.bf16.mxu0 0
      %2154 = vmatpush1.bf16.msra.mxu0 0
      %2155 = vmatprep.mubr.bf16.mxu0 0
      %2156 = vmatmul.mubr.bf16.gmra.mrb[0].mxu0 %v2118
      %v2157 = vpop.f32.mrb[0].mxu0
      %v2158 = vadd.f32 0.0, %v2157
      %v2159 = vpop.f32.mrb[0].mxu0
      %v2160 = vpop.f32.mrb[0].mxu0
      %v2161 = vpop.f32.mrb[0].mxu0
      %2162 = vdwg.mxu0
      %v2164 = vsel %vm1100, %v2116, 0
      %v2167 = vsel %vm1220, %v2000, 0
      %2169 = vmatprep.subr.bf16.mxu0 0
      %2170 = vmatpush1.bf16.msra.mxu0 %v2167
      %2171 = vmatprep.subr.bf16.mxu0 0
      %2172 = vmatpush1.bf16.msra.mxu0 0
      %2173 = vmatprep.subr.bf16.mxu0 0
      %2174 = vmatpush1.bf16.msra.mxu0 0
      %2175 = vmatprep.subr.bf16.mxu0 0
      %2176 = vmatpush1.bf16.msra.mxu0 0
      %2177 = vmatprep.subr.bf16.mxu0 0
      %2178 = vmatpush1.bf16.msra.mxu0 0
      %2179 = vmatprep.subr.bf16.mxu0 0
      %2180 = vmatpush1.bf16.msra.mxu0 0
      %2181 = vmatprep.subr.bf16.mxu0 0
      %2182 = vmatpush1.bf16.msra.mxu0 0
      %2183 = vmatprep.subr.bf16.mxu0 0
      %2184 = vmatpush1.bf16.msra.mxu0 0
      %2185 = vmatprep.subr.bf16.mxu0 0
      %2186 = vmatpush1.bf16.msra.mxu0 0
      %2187 = vmatprep.subr.bf16.mxu0 0
      %2188 = vmatpush1.bf16.msra.mxu0 0
      %2189 = vmatprep.subr.bf16.mxu0 0
      %2190 = vmatpush1.bf16.msra.mxu0 0
      %2191 = vmatprep.subr.bf16.mxu0 0
      %2192 = vmatpush1.bf16.msra.mxu0 0
      %2193 = vmatprep.subr.bf16.mxu0 0
      %2194 = vmatpush1.bf16.msra.mxu0 0
      %2195 = vmatprep.subr.bf16.mxu0 0
      %2196 = vmatpush1.bf16.msra.mxu0 0
      %2197 = vmatprep.subr.bf16.mxu0 0
      %2198 = vmatpush1.bf16.msra.mxu0 0
      %2199 = vmatprep.subr.bf16.mxu0 0
      %2200 = vmatpush1.bf16.msra.mxu0 0
      %2201 = vmatprep.mubr.bf16.mxu0 0
      %2202 = vmatmul.mubr.bf16.gmra.mrb[0].mxu0 %v2164
      %v2203 = vpop.f32.mrb[0].mxu0
      %v2204 = vadd.f32 0.0, %v2203
      %v2205 = vpop.f32.mrb[0].mxu0
      %v2206 = vpop.f32.mrb[0].mxu0
      %v2207 = vpop.f32.mrb[0].mxu0
      %2208 = vdwg.mxu0
      %v2209 = vpack.c.bf16 %v2204, %v2158
      %s2210 = scalar_lea.vmem %s859, 8
      %v2211 = vld [vmem:[%s2210] sm:$0xf]
      %v2213 = vsel %vm1100, %v2209, 0
      %v2216 = vsel %vm1220, %v2211, 0
      %2218 = vmatprep.subr.bf16.mxu0 0
      %2219 = vmatpush1.bf16.msra.mxu0 %v2216
      %2220 = vmatprep.subr.bf16.mxu0 0
      %2221 = vmatpush1.bf16.msra.mxu0 0
      %2222 = vmatprep.subr.bf16.mxu0 0
      %2223 = vmatpush1.bf16.msra.mxu0 0
      %2224 = vmatprep.subr.bf16.mxu0 0
      %2225 = vmatpush1.bf16.msra.mxu0 0
      %2226 = vmatprep.subr.bf16.mxu0 0
      %2227 = vmatpush1.bf16.msra.mxu0 0
      %2228 = vmatprep.subr.bf16.mxu0 0
      %2229 = vmatpush1.bf16.msra.mxu0 0
      %2230 = vmatprep.subr.bf16.mxu0 0
      %2231 = vmatpush1.bf16.msra.mxu0 0
      %2232 = vmatprep.subr.bf16.mxu0 0
      %2233 = vmatpush1.bf16.msra.mxu0 0
      %2234 = vmatprep.subr.bf16.mxu0 0
      %2235 = vmatpush1.bf16.msra.mxu0 0
      %2236 = vmatprep.subr.bf16.mxu0 0
      %2237 = vmatpush1.bf16.msra.mxu0 0
      %2238 = vmatprep.subr.bf16.mxu0 0
      %2239 = vmatpush1.bf16.msra.mxu0 0
      %2240 = vmatprep.subr.bf16.mxu0 0
      %2241 = vmatpush1.bf16.msra.mxu0 0
      %2242 = vmatprep.subr.bf16.mxu0 0
      %2243 = vmatpush1.bf16.msra.mxu0 0
      %2244 = vmatprep.subr.bf16.mxu0 0
      %2245 = vmatpush1.bf16.msra.mxu0 0
      %2246 = vmatprep.subr.bf16.mxu0 0
      %2247 = vmatpush1.bf16.msra.mxu0 0
      %2248 = vmatprep.subr.bf16.mxu0 0
      %2249 = vmatpush1.bf16.msra.mxu0 0
      %2250 = vmatprep.mubr.bf16.mxu0 0
      %2251 = vmatmul.mubr.bf16.gmra.mrb[0].mxu0 %v2213
      %v2252 = vpop.f32.mrb[0].mxu0
      %v2253 = vadd.f32 0.0, %v2252
      %v2254 = vpop.f32.mrb[0].mxu0
      %v2255 = vpop.f32.mrb[0].mxu0
      %v2256 = vadd.f32 0.0, %v2255
      %v2257 = vpop.f32.mrb[0].mxu0
      %2258 = vdwg.mxu0
      %v2259 = vadd.f32 %v1803, %v2253
      %v2260 = vadd.f32 %v1806, %v2256
      %s2261 = scalar_lea.vmem %s832, 48
      %v2262 = vld [vmem:[%s2261] sm:$0xf]
      %v2263 = vld [vmem:[%s2261 + $0x4] sm:$0xf]
      %v2264 = vld [vmem:[%s2261 + $0x8] sm:$0xf]
      %v2265 = vld [vmem:[%s2261 + $0xc] sm:$0xf]
      %v2266 = vlaneseq
      %v2267 = vshrl.u32 %v2266, 7
      %v2268 = vsub.s32 3, %v2267
      %v2269 = vrot.slane %v904, %v2268
      %v2274 = vunpack.c.l.b16 %v2262
      %v2275 = vunpack.c.l.b16 %v2263
      %v2276 = vunpack.c.l.b16 %v2264
      %v2277 = vunpack.c.l.b16 %v2265
      %v2278 = vpack.c.b16 %v2275, %v2274
      %v2279 = vpack.c.b16 %v2277, %v2276
      %2282 = vmatprep.subr.bf16.mxu0 0
      %2283 = vmatpush1.bf16.msra.mxu0 %v2278
      %2284 = vmatprep.subr.bf16.mxu0 0
      %2285 = vmatpush1.bf16.msra.mxu0 %v2279
      %2286 = vmatprep.subr.bf16.mxu0 0
      %2287 = vmatpush1.bf16.msra.mxu0 0
      %2288 = vmatprep.subr.bf16.mxu0 0
      %2289 = vmatpush1.bf16.msra.mxu0 0
      %2290 = vmatprep.subr.bf16.mxu0 0
      %2291 = vmatpush1.bf16.msra.mxu0 0
      %2292 = vmatprep.subr.bf16.mxu0 0
      %2293 = vmatpush1.bf16.msra.mxu0 0
      %2294 = vmatprep.subr.bf16.mxu0 0
      %2295 = vmatpush1.bf16.msra.mxu0 0
      %2296 = vmatprep.subr.bf16.mxu0 0
      %2297 = vmatpush1.bf16.msra.mxu0 0
      %2298 = vmatprep.subr.bf16.mxu0 0
      %2299 = vmatpush1.bf16.msra.mxu0 0
      %2300 = vmatprep.subr.bf16.mxu0 0
      %2301 = vmatpush1.bf16.msra.mxu0 0
      %2302 = vmatprep.subr.bf16.mxu0 0
      %2303 = vmatpush1.bf16.msra.mxu0 0
      %2304 = vmatprep.subr.bf16.mxu0 0
      %2305 = vmatpush1.bf16.msra.mxu0 0
      %2306 = vmatprep.subr.bf16.mxu0 0
      %2307 = vmatpush1.bf16.msra.mxu0 0
      %2308 = vmatprep.subr.bf16.mxu0 0
      %2309 = vmatpush1.bf16.msra.mxu0 0
      %2310 = vmatprep.subr.bf16.mxu0 0
      %2311 = vmatpush1.bf16.msra.mxu0 0
      %2312 = vmatprep.subr.bf16.mxu0 0
      %2313 = vmatpush1.bf16.msra.mxu0 0
      %2314 = vmatprep.mubr.bf16.mxu0 0
      %2315 = vmatmul.mubr.bf16.gmra.mrb[0].mxu0 %v929
      %v2316 = vpop.f32.mrb[0].mxu0
      %v2317 = vadd.f32 %v2269, %v2316
      %v2318 = vpop.f32.mrb[0].mxu0
      %v2319 = vpop.f32.mrb[0].mxu0
      %v2320 = vadd.f32 %v2269, %v2319
      %v2321 = vpop.f32.mrb[0].mxu0
      %2322 = vdwg.mxu0
      %s2323 = scalar_lea.vmem %s837, 48
      %v2324 = vld [vmem:[%s2323] sm:$0xf]
      %v2325 = vld [vmem:[%s2323 + $0x4] sm:$0xf]
      %v2326 = vld [vmem:[%s2323 + $0x8] sm:$0xf]
      %v2327 = vld [vmem:[%s2323 + $0xc] sm:$0xf]
      %v2328 = vlaneseq
      %v2329 = vshrl.u32 %v2328, 7
      %v2330 = vsub.s32 3, %v2329
      %v2331 = vrot.slane %v905, %v2330
      %v2336 = vunpack.c.l.b16 %v2324
      %v2337 = vunpack.c.l.b16 %v2325
      %v2338 = vunpack.c.l.b16 %v2326
      %v2339 = vunpack.c.l.b16 %v2327
      %v2340 = vpack.c.b16 %v2337, %v2336
      %v2341 = vpack.c.b16 %v2339, %v2338
      %2344 = vmatprep.subr.bf16.mxu0 0
      %2345 = vmatpush1.bf16.msra.mxu0 %v2340
      %2346 = vmatprep.subr.bf16.mxu0 0
      %2347 = vmatpush1.bf16.msra.mxu0 %v2341
      %2348 = vmatprep.subr.bf16.mxu0 0
      %2349 = vmatpush1.bf16.msra.mxu0 0
      %2350 = vmatprep.subr.bf16.mxu0 0
      %2351 = vmatpush1.bf16.msra.mxu0 0
      %2352 = vmatprep.subr.bf16.mxu0 0
      %2353 = vmatpush1.bf16.msra.mxu0 0
      %2354 = vmatprep.subr.bf16.mxu0 0
      %2355 = vmatpush1.bf16.msra.mxu0 0
      %2356 = vmatprep.subr.bf16.mxu0 0
      %2357 = vmatpush1.bf16.msra.mxu0 0
      %2358 = vmatprep.subr.bf16.mxu0 0
      %2359 = vmatpush1.bf16.msra.mxu0 0
      %2360 = vmatprep.subr.bf16.mxu0 0
      %2361 = vmatpush1.bf16.msra.mxu0 0
      %2362 = vmatprep.subr.bf16.mxu0 0
      %2363 = vmatpush1.bf16.msra.mxu0 0
      %2364 = vmatprep.subr.bf16.mxu0 0
      %2365 = vmatpush1.bf16.msra.mxu0 0
      %2366 = vmatprep.subr.bf16.mxu0 0
      %2367 = vmatpush1.bf16.msra.mxu0 0
      %2368 = vmatprep.subr.bf16.mxu0 0
      %2369 = vmatpush1.bf16.msra.mxu0 0
      %2370 = vmatprep.subr.bf16.mxu0 0
      %2371 = vmatpush1.bf16.msra.mxu0 0
      %2372 = vmatprep.subr.bf16.mxu0 0
      %2373 = vmatpush1.bf16.msra.mxu0 0
      %2374 = vmatprep.subr.bf16.mxu0 0
      %2375 = vmatpush1.bf16.msra.mxu0 0
      %2376 = vmatprep.mubr.bf16.mxu0 0
      %2377 = vmatmul.mubr.bf16.gmra.mrb[0].mxu0 %v929
      %v2378 = vpop.f32.mrb[0].mxu0
      %v2379 = vadd.f32 %v2331, %v2378
      %v2380 = vpop.f32.mrb[0].mxu0
      %v2381 = vpop.f32.mrb[0].mxu0
      %v2382 = vadd.f32 %v2331, %v2381
      %v2383 = vpop.f32.mrb[0].mxu0
      %2384 = vdwg.mxu0
      %s2385 = scalar_lea.vmem %s842, 48
      %v2386 = vld [vmem:[%s2385] sm:$0xf]
      %v2387 = vld [vmem:[%s2385 + $0x4] sm:$0xf]
      %v2388 = vld [vmem:[%s2385 + $0x8] sm:$0xf]
      %v2389 = vld [vmem:[%s2385 + $0xc] sm:$0xf]
      %v2390 = vlaneseq
      %v2391 = vshrl.u32 %v2390, 7
      %v2392 = vsub.s32 3, %v2391
      %v2393 = vrot.slane %v906, %v2392
      %v2398 = vunpack.c.l.b16 %v2386
      %v2399 = vunpack.c.l.b16 %v2387
      %v2400 = vunpack.c.l.b16 %v2388
      %v2401 = vunpack.c.l.b16 %v2389
      %v2402 = vpack.c.b16 %v2399, %v2398
      %v2403 = vpack.c.b16 %v2401, %v2400
      %2406 = vmatprep.subr.bf16.mxu0 0
      %2407 = vmatpush1.bf16.msra.mxu0 %v2402
      %2408 = vmatprep.subr.bf16.mxu0 0
      %2409 = vmatpush1.bf16.msra.mxu0 %v2403
      %2410 = vmatprep.subr.bf16.mxu0 0
      %2411 = vmatpush1.bf16.msra.mxu0 0
      %2412 = vmatprep.subr.bf16.mxu0 0
      %2413 = vmatpush1.bf16.msra.mxu0 0
      %2414 = vmatprep.subr.bf16.mxu0 0
      %2415 = vmatpush1.bf16.msra.mxu0 0
      %2416 = vmatprep.subr.bf16.mxu0 0
      %2417 = vmatpush1.bf16.msra.mxu0 0
      %2418 = vmatprep.subr.bf16.mxu0 0
      %2419 = vmatpush1.bf16.msra.mxu0 0
      %2420 = vmatprep.subr.bf16.mxu0 0
      %2421 = vmatpush1.bf16.msra.mxu0 0
      %2422 = vmatprep.subr.bf16.mxu0 0
      %2423 = vmatpush1.bf16.msra.mxu0 0
      %2424 = vmatprep.subr.bf16.mxu0 0
      %2425 = vmatpush1.bf16.msra.mxu0 0
      %2426 = vmatprep.subr.bf16.mxu0 0
      %2427 = vmatpush1.bf16.msra.mxu0 0
      %2428 = vmatprep.subr.bf16.mxu0 0
      %2429 = vmatpush1.bf16.msra.mxu0 0
      %2430 = vmatprep.subr.bf16.mxu0 0
      %2431 = vmatpush1.bf16.msra.mxu0 0
      %2432 = vmatprep.subr.bf16.mxu0 0
      %2433 = vmatpush1.bf16.msra.mxu0 0
      %2434 = vmatprep.subr.bf16.mxu0 0
      %2435 = vmatpush1.bf16.msra.mxu0 0
      %2436 = vmatprep.subr.bf16.mxu0 0
      %2437 = vmatpush1.bf16.msra.mxu0 0
      %2438 = vmatprep.mubr.bf16.mxu0 0
      %2439 = vmatmul.mubr.bf16.gmra.mrb[0].mxu0 %v929
      %v2440 = vpop.f32.mrb[0].mxu0
      %v2441 = vadd.f32 %v2393, %v2440
      %v2442 = vpop.f32.mrb[0].mxu0
      %v2443 = vpop.f32.mrb[0].mxu0
      %v2444 = vadd.f32 %v2393, %v2443
      %v2445 = vpop.f32.mrb[0].mxu0
      %2446 = vdwg.mxu0
      %v2447 = vpack.c.bf16 %v2317, %v2317
      %v2448 = vpack.c.bf16 %v2320, %v2320
      %v2449 = vpack.c.bf16 %v2379, %v2379
      %v2450 = vpack.c.bf16 %v2382, %v2382
      %v2451 = vpack.c.bf16 %v2441, %v2441
      %v2452 = vpack.c.bf16 %v2444, %v2444
      %v2454 = vsel %vm1100, %v2447, 0
      %v2457 = vsel %vm1100, %v2449, 0
      %2459 = vmatprep.subr.bf16.mxu0 0
      %2460 = vmatpush1.bf16.xpose.msra.mxu0 %v2457
      %2461 = vmatprep.subr.bf16.mxu0 0
      %2462 = vmatpush1.bf16.xpose.msra.mxu0 0
      %2463 = vmatprep.subr.bf16.mxu0 0
      %2464 = vmatpush1.bf16.xpose.msra.mxu0 0
      %2465 = vmatprep.subr.bf16.mxu0 0
      %2466 = vmatpush1.bf16.xpose.msra.mxu0 0
      %2467 = vmatprep.subr.bf16.mxu0 0
      %2468 = vmatpush1.bf16.xpose.msra.mxu0 0
      %2469 = vmatprep.subr.bf16.mxu0 0
      %2470 = vmatpush1.bf16.xpose.msra.mxu0 0
      %2471 = vmatprep.subr.bf16.mxu0 0
      %2472 = vmatpush1.bf16.xpose.msra.mxu0 0
      %2473 = vmatprep.subr.bf16.mxu0 0
      %2474 = vmatpush1.bf16.xpose.msra.mxu0 0
      %2475 = vmatprep.subr.bf16.mxu0 0
      %2476 = vmatpush1.bf16.xpose.msra.mxu0 0
      %2477 = vmatprep.subr.bf16.mxu0 0
      %2478 = vmatpush1.bf16.xpose.msra.mxu0 0
      %2479 = vmatprep.subr.bf16.mxu0 0
      %2480 = vmatpush1.bf16.xpose.msra.mxu0 0
      %2481 = vmatprep.subr.bf16.mxu0 0
      %2482 = vmatpush1.bf16.xpose.msra.mxu0 0
      %2483 = vmatprep.subr.bf16.mxu0 0
      %2484 = vmatpush1.bf16.xpose.msra.mxu0 0
      %2485 = vmatprep.subr.bf16.mxu0 0
      %2486 = vmatpush1.bf16.xpose.msra.mxu0 0
      %2487 = vmatprep.subr.bf16.mxu0 0
      %2488 = vmatpush1.bf16.xpose.msra.mxu0 0
      %2489 = vmatprep.subr.bf16.mxu0 0
      %2490 = vmatpush1.bf16.xpose.msra.mxu0 0
      %2491 = vmatprep.mubr.bf16.mxu0 0
      %2492 = vmatmul.mubr.bf16.gmra.mrb[0].mxu0 %v2454
      %v2493 = vpop.f32.mrb[0].mxu0
      %v2494 = vadd.f32 0.0, %v2493
      %v2495 = vpop.f32.mrb[0].mxu0
      %v2496 = vpop.f32.mrb[0].mxu0
      %v2497 = vpop.f32.mrb[0].mxu0
      %2498 = vdwg.mxu0
      %v2500 = vsel %vm1100, %v2448, 0
      %v2503 = vsel %vm1100, %v2450, 0
      %2505 = vmatprep.subr.bf16.mxu0 0
      %2506 = vmatpush1.bf16.xpose.msra.mxu0 %v2503
      %2507 = vmatprep.subr.bf16.mxu0 0
      %2508 = vmatpush1.bf16.xpose.msra.mxu0 0
      %2509 = vmatprep.subr.bf16.mxu0 0
      %2510 = vmatpush1.bf16.xpose.msra.mxu0 0
      %2511 = vmatprep.subr.bf16.mxu0 0
      %2512 = vmatpush1.bf16.xpose.msra.mxu0 0
      %2513 = vmatprep.subr.bf16.mxu0 0
      %2514 = vmatpush1.bf16.xpose.msra.mxu0 0
      %2515 = vmatprep.subr.bf16.mxu0 0
      %2516 = vmatpush1.bf16.xpose.msra.mxu0 0
      %2517 = vmatprep.subr.bf16.mxu0 0
      %2518 = vmatpush1.bf16.xpose.msra.mxu0 0
      %2519 = vmatprep.subr.bf16.mxu0 0
      %2520 = vmatpush1.bf16.xpose.msra.mxu0 0
      %2521 = vmatprep.subr.bf16.mxu0 0
      %2522 = vmatpush1.bf16.xpose.msra.mxu0 0
      %2523 = vmatprep.subr.bf16.mxu0 0
      %2524 = vmatpush1.bf16.xpose.msra.mxu0 0
      %2525 = vmatprep.subr.bf16.mxu0 0
      %2526 = vmatpush1.bf16.xpose.msra.mxu0 0
      %2527 = vmatprep.subr.bf16.mxu0 0
      %2528 = vmatpush1.bf16.xpose.msra.mxu0 0
      %2529 = vmatprep.subr.bf16.mxu0 0
      %2530 = vmatpush1.bf16.xpose.msra.mxu0 0
      %2531 = vmatprep.subr.bf16.mxu0 0
      %2532 = vmatpush1.bf16.xpose.msra.mxu0 0
      %2533 = vmatprep.subr.bf16.mxu0 0
      %2534 = vmatpush1.bf16.xpose.msra.mxu0 0
      %2535 = vmatprep.subr.bf16.mxu0 0
      %2536 = vmatpush1.bf16.xpose.msra.mxu0 0
      %2537 = vmatprep.mubr.bf16.mxu0 0
      %2538 = vmatmul.mubr.bf16.gmra.mrb[0].mxu0 %v2500
      %v2539 = vpop.f32.mrb[0].mxu0
      %v2540 = vadd.f32 0.0, %v2539
      %v2541 = vpop.f32.mrb[0].mxu0
      %v2542 = vpop.f32.mrb[0].mxu0
      %v2543 = vpop.f32.mrb[0].mxu0
      %2544 = vdwg.mxu0
      %v2545 = vsel %vm1100, %v2494, -inf
      %2546 = vmax.xlane.f32.xlu0 %v2545
      %v2547 = vpop.xlane.xlu0 %2546
      %v2548 = vsel %vm1100, %v2540, -inf
      %2549 = vmax.xlane.f32.xlu0 %v2548
      %v2550 = vpop.xlane.xlu0 %2549
      %v2551 = vsub.f32 %v2494, %v2547
      %v2552 = vsub.f32 %v2540, %v2550
      %v2553 = vmul.f32 %v2551, 1.442695
      %v2554 = vpow.pop %v2553
      %v2555 = vmul.f32 %v2552, 1.442695
      %v2556 = vpow.pop %v2555
      %v2557 = vsel %vm1100, %v2554, 0.0
      %2558 = vadd.xlane.f32.xlu0 %v2557
      %v2559 = vpop.xlane.xlu0 %2558
      %v2560 = vsel %vm1100, %v2556, 0.0
      %2561 = vadd.xlane.f32.xlu0 %v2560
      %v2562 = vpop.xlane.xlu0 %2561
      %v2563 = vrcp.pop %v2559
      %v2564 = vrcp.pop %v2562
      %v2565 = vmul.f32 %v2554, %v2563
      %v2566 = vmul.f32 %v2556, %v2564
      %v2567 = vpack.c.bf16 %v2565, %v2565
      %v2568 = vpack.c.bf16 %v2566, %v2566
      %v2570 = vsel %vm1100, %v2567, 0
      %v2573 = vsel %vm1220, %v2451, 0
      %2575 = vmatprep.subr.bf16.mxu0 0
      %2576 = vmatpush1.bf16.msra.mxu0 %v2573
      %2577 = vmatprep.subr.bf16.mxu0 0
      %2578 = vmatpush1.bf16.msra.mxu0 0
      %2579 = vmatprep.subr.bf16.mxu0 0
      %2580 = vmatpush1.bf16.msra.mxu0 0
      %2581 = vmatprep.subr.bf16.mxu0 0
      %2582 = vmatpush1.bf16.msra.mxu0 0
      %2583 = vmatprep.subr.bf16.mxu0 0
      %2584 = vmatpush1.bf16.msra.mxu0 0
      %2585 = vmatprep.subr.bf16.mxu0 0
      %2586 = vmatpush1.bf16.msra.mxu0 0
      %2587 = vmatprep.subr.bf16.mxu0 0
      %2588 = vmatpush1.bf16.msra.mxu0 0
      %2589 = vmatprep.subr.bf16.mxu0 0
      %2590 = vmatpush1.bf16.msra.mxu0 0
      %2591 = vmatprep.subr.bf16.mxu0 0
      %2592 = vmatpush1.bf16.msra.mxu0 0
      %2593 = vmatprep.subr.bf16.mxu0 0
      %2594 = vmatpush1.bf16.msra.mxu0 0
      %2595 = vmatprep.subr.bf16.mxu0 0
      %2596 = vmatpush1.bf16.msra.mxu0 0
      %2597 = vmatprep.subr.bf16.mxu0 0
      %2598 = vmatpush1.bf16.msra.mxu0 0
      %2599 = vmatprep.subr.bf16.mxu0 0
      %2600 = vmatpush1.bf16.msra.mxu0 0
      %2601 = vmatprep.subr.bf16.mxu0 0
      %2602 = vmatpush1.bf16.msra.mxu0 0
      %2603 = vmatprep.subr.bf16.mxu0 0
      %2604 = vmatpush1.bf16.msra.mxu0 0
      %2605 = vmatprep.subr.bf16.mxu0 0
      %2606 = vmatpush1.bf16.msra.mxu0 0
      %2607 = vmatprep.mubr.bf16.mxu0 0
      %2608 = vmatmul.mubr.bf16.gmra.mrb[0].mxu0 %v2570
      %v2609 = vpop.f32.mrb[0].mxu0
      %v2610 = vadd.f32 0.0, %v2609
      %v2611 = vpop.f32.mrb[0].mxu0
      %v2612 = vpop.f32.mrb[0].mxu0
      %v2613 = vpop.f32.mrb[0].mxu0
      %2614 = vdwg.mxu0
      %v2616 = vsel %vm1100, %v2568, 0
      %v2619 = vsel %vm1220, %v2452, 0
      %2621 = vmatprep.subr.bf16.mxu0 0
      %2622 = vmatpush1.bf16.msra.mxu0 %v2619
      %2623 = vmatprep.subr.bf16.mxu0 0
      %2624 = vmatpush1.bf16.msra.mxu0 0
      %2625 = vmatprep.subr.bf16.mxu0 0
      %2626 = vmatpush1.bf16.msra.mxu0 0
      %2627 = vmatprep.subr.bf16.mxu0 0
      %2628 = vmatpush1.bf16.msra.mxu0 0
      %2629 = vmatprep.subr.bf16.mxu0 0
      %2630 = vmatpush1.bf16.msra.mxu0 0
      %2631 = vmatprep.subr.bf16.mxu0 0
      %2632 = vmatpush1.bf16.msra.mxu0 0
      %2633 = vmatprep.subr.bf16.mxu0 0
      %2634 = vmatpush1.bf16.msra.mxu0 0
      %2635 = vmatprep.subr.bf16.mxu0 0
      %2636 = vmatpush1.bf16.msra.mxu0 0
      %2637 = vmatprep.subr.bf16.mxu0 0
      %2638 = vmatpush1.bf16.msra.mxu0 0
      %2639 = vmatprep.subr.bf16.mxu0 0
      %2640 = vmatpush1.bf16.msra.mxu0 0
      %2641 = vmatprep.subr.bf16.mxu0 0
      %2642 = vmatpush1.bf16.msra.mxu0 0
      %2643 = vmatprep.subr.bf16.mxu0 0
      %2644 = vmatpush1.bf16.msra.mxu0 0
      %2645 = vmatprep.subr.bf16.mxu0 0
      %2646 = vmatpush1.bf16.msra.mxu0 0
      %2647 = vmatprep.subr.bf16.mxu0 0
      %2648 = vmatpush1.bf16.msra.mxu0 0
      %2649 = vmatprep.subr.bf16.mxu0 0
      %2650 = vmatpush1.bf16.msra.mxu0 0
      %2651 = vmatprep.subr.bf16.mxu0 0
      %2652 = vmatpush1.bf16.msra.mxu0 0
      %2653 = vmatprep.mubr.bf16.mxu0 0
      %2654 = vmatmul.mubr.bf16.gmra.mrb[0].mxu0 %v2616
      %v2655 = vpop.f32.mrb[0].mxu0
      %v2656 = vadd.f32 0.0, %v2655
      %v2657 = vpop.f32.mrb[0].mxu0
      %v2658 = vpop.f32.mrb[0].mxu0
      %v2659 = vpop.f32.mrb[0].mxu0
      %2660 = vdwg.mxu0
      %v2661 = vpack.c.bf16 %v2656, %v2610
      %s2662 = scalar_lea.vmem %s859, 12
      %v2663 = vld [vmem:[%s2662] sm:$0xf]
      %v2665 = vsel %vm1100, %v2661, 0
      %v2668 = vsel %vm1220, %v2663, 0
      %2670 = vmatprep.subr.bf16.mxu0 0
      %2671 = vmatpush1.bf16.msra.mxu0 %v2668
      %2672 = vmatprep.subr.bf16.mxu0 0
      %2673 = vmatpush1.bf16.msra.mxu0 0
      %2674 = vmatprep.subr.bf16.mxu0 0
      %2675 = vmatpush1.bf16.msra.mxu0 0
      %2676 = vmatprep.subr.bf16.mxu0 0
      %2677 = vmatpush1.bf16.msra.mxu0 0
      %2678 = vmatprep.subr.bf16.mxu0 0
      %2679 = vmatpush1.bf16.msra.mxu0 0
      %2680 = vmatprep.subr.bf16.mxu0 0
      %2681 = vmatpush1.bf16.msra.mxu0 0
      %2682 = vmatprep.subr.bf16.mxu0 0
      %2683 = vmatpush1.bf16.msra.mxu0 0
      %2684 = vmatprep.subr.bf16.mxu0 0
      %2685 = vmatpush1.bf16.msra.mxu0 0
      %2686 = vmatprep.subr.bf16.mxu0 0
      %2687 = vmatpush1.bf16.msra.mxu0 0
      %2688 = vmatprep.subr.bf16.mxu0 0
      %2689 = vmatpush1.bf16.msra.mxu0 0
      %2690 = vmatprep.subr.bf16.mxu0 0
      %2691 = vmatpush1.bf16.msra.mxu0 0
      %2692 = vmatprep.subr.bf16.mxu0 0
      %2693 = vmatpush1.bf16.msra.mxu0 0
      %2694 = vmatprep.subr.bf16.mxu0 0
      %2695 = vmatpush1.bf16.msra.mxu0 0
      %2696 = vmatprep.subr.bf16.mxu0 0
      %2697 = vmatpush1.bf16.msra.mxu0 0
      %2698 = vmatprep.subr.bf16.mxu0 0
      %2699 = vmatpush1.bf16.msra.mxu0 0
      %2700 = vmatprep.subr.bf16.mxu0 0
      %2701 = vmatpush1.bf16.msra.mxu0 0
      %2702 = vmatprep.mubr.bf16.mxu0 0
      %2703 = vmatmul.mubr.bf16.gmra.mrb[0].mxu0 %v2665
      %v2704 = vpop.f32.mrb[0].mxu0
      %v2705 = vadd.f32 0.0, %v2704
      %v2706 = vpop.f32.mrb[0].mxu0
      %v2707 = vpop.f32.mrb[0].mxu0
      %v2708 = vadd.f32 0.0, %v2707
      %v2709 = vpop.f32.mrb[0].mxu0
      %2710 = vdwg.mxu0
      %v2711 = vadd.f32 %v2259, %v2705
      %v2712 = vadd.f32 %v2260, %v2708
      %v2713 = vld [vmem:[%s862] sm:$0x1]
      %v2715 = vlaneseq
      %v2716 = vshrl.u32 %v2715, 7
      %v2717 = vsub.s32 0, %v2716
      %v2718 = vrot.slane %v2713, %v2717
      %v2720 = vadd.f32 %v2711, %v2718
      %v2721 = vadd.f32 %v2712, %v2718
      %v2722 = vadd.f32 %v901, %v2720
      %v2723 = vadd.f32 %v902, %v2721
      %v2724 = vld [vmem:[%s865] sm:$0x1]
      %v2725 = vld [vmem:[%s868] sm:$0x1]
      %v2726 = vsel %vm927, %v2722, 0.0
      %2727 = vadd.xlane.f32.xlu0 %v2726
      %v2728 = vpop.xlane.xlu0 %2727
      %v2729 = vsel %vm927, %v2723, 0.0
      %2730 = vadd.xlane.f32.xlu0 %v2729
      %v2731 = vpop.xlane.xlu0 %2730
      %v2732 = vrcp.pop 32.0
      %v2733 = vmul.f32 %v2728, %v2732
      %v2734 = vmul.f32 %v2731, %v2732
      %v2735 = vsub.f32 %v2722, %v2733
      %v2736 = vsub.f32 %v2723, %v2734
      %v2737 = vmul.f32 %v2735, %v2735
      %v2738 = vmul.f32 %v2736, %v2736
      %v2739 = vsel %vm927, %v2737, 0.0
      %2740 = vadd.xlane.f32.xlu0 %v2739
      %v2741 = vpop.xlane.xlu0 %2740
      %v2742 = vsel %vm927, %v2738, 0.0
      %2743 = vadd.xlane.f32.xlu0 %v2742
      %v2744 = vpop.xlane.xlu0 %2743
      %v2745 = vmul.f32 %v2741, %v2732
      %v2746 = vmul.f32 %v2744, %v2732
      %v2747 = vadd.f32 %v2745, 1e-05
      %v2748 = vadd.f32 %v2746, 1e-05
      %v2749 = vrsqrt.pop %v2747
      %v2750 = vrsqrt.pop %v2748
      %v2751 = vmul.f32 %v2735, %v2749
      %v2752 = vmul.f32 %v2736, %v2750
      %v2754 = vlaneseq
      %v2755 = vshrl.u32 %v2754, 7
      %v2756 = vsub.s32 0, %v2755
      %v2757 = vrot.slane %v2724, %v2756
      %v2759 = vmul.f32 %v2751, %v2757
      %v2760 = vmul.f32 %v2752, %v2757
      %v2762 = vlaneseq
      %v2763 = vshrl.u32 %v2762, 7
      %v2764 = vsub.s32 0, %v2763
      %v2765 = vrot.slane %v2725, %v2764
      %v2767 = vadd.f32 %v2759, %v2765
      %v2768 = vadd.f32 %v2760, %v2765
      %v2769 = vpack.c.bf16 %v2768, %v2767
      %v2770 = vld [vmem:[%s873] sm:$0xf]
      %v2771 = vld [vmem:[%s873 + $0x4] sm:$0xf]
      %v2772 = vld [vmem:[%s873 + $0x8] sm:$0xf]
      %v2773 = vld [vmem:[%s873 + $0xc] sm:$0xf]
      %v2774 = vld [vmem:[%s876] sm:$0x1]
      %v2776 = vlaneseq
      %v2777 = vshrl.u32 %v2776, 7
      %v2778 = vsub.s32 0, %v2777
      %v2779 = vrot.slane %v2774, %v2778
      %v2785 = vunpack.c.l.b16 %v2770
      %v2786 = vunpack.c.l.b16 %v2771
      %v2787 = vunpack.c.l.b16 %v2772
      %v2788 = vunpack.c.l.b16 %v2773
      %v2789 = vpack.c.b16 %v2786, %v2785
      %v2790 = vpack.c.b16 %v2788, %v2787
      %v2794 = vsel %vm927, %v2769, 0
      %2796 = vmatprep.subr.bf16.mxu0 0
      %2797 = vmatpush1.bf16.msra.mxu0 %v2789
      %2798 = vmatprep.subr.bf16.mxu0 0
      %2799 = vmatpush1.bf16.msra.mxu0 %v2790
      %2800 = vmatprep.subr.bf16.mxu0 0
      %2801 = vmatpush1.bf16.msra.mxu0 0
      %2802 = vmatprep.subr.bf16.mxu0 0
      %2803 = vmatpush1.bf16.msra.mxu0 0
      %2804 = vmatprep.subr.bf16.mxu0 0
      %2805 = vmatpush1.bf16.msra.mxu0 0
      %2806 = vmatprep.subr.bf16.mxu0 0
      %2807 = vmatpush1.bf16.msra.mxu0 0
      %2808 = vmatprep.subr.bf16.mxu0 0
      %2809 = vmatpush1.bf16.msra.mxu0 0
      %2810 = vmatprep.subr.bf16.mxu0 0
      %2811 = vmatpush1.bf16.msra.mxu0 0
      %2812 = vmatprep.subr.bf16.mxu0 0
      %2813 = vmatpush1.bf16.msra.mxu0 0
      %2814 = vmatprep.subr.bf16.mxu0 0
      %2815 = vmatpush1.bf16.msra.mxu0 0
      %2816 = vmatprep.subr.bf16.mxu0 0
      %2817 = vmatpush1.bf16.msra.mxu0 0
      %2818 = vmatprep.subr.bf16.mxu0 0
      %2819 = vmatpush1.bf16.msra.mxu0 0
      %2820 = vmatprep.subr.bf16.mxu0 0
      %2821 = vmatpush1.bf16.msra.mxu0 0
      %2822 = vmatprep.subr.bf16.mxu0 0
      %2823 = vmatpush1.bf16.msra.mxu0 0
      %2824 = vmatprep.subr.bf16.mxu0 0
      %2825 = vmatpush1.bf16.msra.mxu0 0
      %2826 = vmatprep.subr.bf16.mxu0 0
      %2827 = vmatpush1.bf16.msra.mxu0 0
      %2828 = vmatprep.mubr.bf16.mxu0 0
      %2829 = vmatmul.mubr.bf16.gmra.mrb[0].mxu0 %v2794
      %v2830 = vpop.f32.mrb[0].mxu0
      %v2831 = vadd.f32 %v2779, %v2830
      %v2832 = vpop.f32.mrb[0].mxu0
      %v2833 = vpop.f32.mrb[0].mxu0
      %v2834 = vadd.f32 %v2779, %v2833
      %v2835 = vpop.f32.mrb[0].mxu0
      %2836 = vdwg.mxu0
      %v2837 = vmax.f32 %v2831, 0.0
      %v2838 = vmax.f32 %v2834, 0.0
      %v2839 = vpack.c.bf16 %v2838, %v2837
      %v2840 = vld [vmem:[%s881] sm:$0xf]
      %v2841 = vld [vmem:[%s881 + $0x4] sm:$0xf]
      %v2842 = vld [vmem:[%s881 + $0x8] sm:$0xf]
      %v2843 = vld [vmem:[%s881 + $0xc] sm:$0xf]
      %v2844 = vld [vmem:[%s881 + $0x10] sm:$0xf]
      %v2845 = vld [vmem:[%s881 + $0x14] sm:$0xf]
      %v2846 = vld [vmem:[%s881 + $0x18] sm:$0xf]
      %v2847 = vld [vmem:[%s881 + $0x1c] sm:$0xf]
      %v2848 = vld [vmem:[%s884] sm:$0x1]
      %v2850 = vlaneseq
      %v2851 = vshrl.u32 %v2850, 7
      %v2852 = vsub.s32 0, %v2851
      %v2853 = vrot.slane %v2848, %v2852
      %v2863 = vunpack.c.l.b16 %v2840
      %v2864 = vunpack.c.l.b16 %v2841
      %v2865 = vunpack.c.l.b16 %v2842
      %v2866 = vunpack.c.l.b16 %v2843
      %v2867 = vunpack.c.l.b16 %v2844
      %v2868 = vunpack.c.l.b16 %v2845
      %v2869 = vunpack.c.l.b16 %v2846
      %v2870 = vunpack.c.l.b16 %v2847
      %v2871 = vpack.c.b16 %v2864, %v2863
      %v2872 = vpack.c.b16 %v2866, %v2865
      %v2873 = vpack.c.b16 %v2868, %v2867
      %v2874 = vpack.c.b16 %v2870, %v2869
      %vm2879 = vcmask 523264
      %v2881 = vsel %vm2879, %v2839, 0
      %2883 = vmatprep.subr.bf16.mxu0 0
      %2884 = vmatpush1.bf16.msra.mxu0 %v2871
      %2885 = vmatprep.subr.bf16.mxu0 0
      %2886 = vmatpush1.bf16.msra.mxu0 %v2872
      %2887 = vmatprep.subr.bf16.mxu0 0
      %2888 = vmatpush1.bf16.msra.mxu0 %v2873
      %2889 = vmatprep.subr.bf16.mxu0 0
      %2890 = vmatpush1.bf16.msra.mxu0 %v2874
      %2891 = vmatprep.subr.bf16.mxu0 0
      %2892 = vmatpush1.bf16.msra.mxu0 0
      %2893 = vmatprep.subr.bf16.mxu0 0
      %2894 = vmatpush1.bf16.msra.mxu0 0
      %2895 = vmatprep.subr.bf16.mxu0 0
      %2896 = vmatpush1.bf16.msra.mxu0 0
      %2897 = vmatprep.subr.bf16.mxu0 0
      %2898 = vmatpush1.bf16.msra.mxu0 0
      %2899 = vmatprep.subr.bf16.mxu0 0
      %2900 = vmatpush1.bf16.msra.mxu0 0
      %2901 = vmatprep.subr.bf16.mxu0 0
      %2902 = vmatpush1.bf16.msra.mxu0 0
      %2903 = vmatprep.subr.bf16.mxu0 0
      %2904 = vmatpush1.bf16.msra.mxu0 0
      %2905 = vmatprep.subr.bf16.mxu0 0
      %2906 = vmatpush1.bf16.msra.mxu0 0
      %2907 = vmatprep.subr.bf16.mxu0 0
      %2908 = vmatpush1.bf16.msra.mxu0 0
      %2909 = vmatprep.subr.bf16.mxu0 0
      %2910 = vmatpush1.bf16.msra.mxu0 0
      %2911 = vmatprep.subr.bf16.mxu0 0
      %2912 = vmatpush1.bf16.msra.mxu0 0
      %2913 = vmatprep.subr.bf16.mxu0 0
      %2914 = vmatpush1.bf16.msra.mxu0 0
      %2915 = vmatprep.mubr.bf16.mxu0 0
      %2916 = vmatmul.mubr.bf16.gmra.mrb[0].mxu0 %v2881
      %v2917 = vpop.f32.mrb[0].mxu0
      %v2918 = vadd.f32 %v2853, %v2917
      %v2919 = vpop.f32.mrb[0].mxu0
      %v2920 = vpop.f32.mrb[0].mxu0
      %v2921 = vadd.f32 %v2853, %v2920
      %v2922 = vpop.f32.mrb[0].mxu0
      %2923 = vdwg.mxu0
      %v2924 = vadd.f32 %v2767, %v2918
      %v2925 = vadd.f32 %v2768, %v2921
      %v2926 = vld [vmem:[%s887] sm:$0x1]
      %v2927 = vld [vmem:[%s890] sm:$0x1]
      %v2928 = vsel %vm927, %v2924, 0.0
      %2929 = vadd.xlane.f32.xlu0 %v2928
      %v2930 = vpop.xlane.xlu0 %2929
      %v2931 = vsel %vm927, %v2925, 0.0
      %2932 = vadd.xlane.f32.xlu0 %v2931
      %v2933 = vpop.xlane.xlu0 %2932
      %v2934 = vmul.f32 %v2930, %v2732
      %v2935 = vmul.f32 %v2933, %v2732
      %v2936 = vsub.f32 %v2924, %v2934
      %v2937 = vsub.f32 %v2925, %v2935
      %v2938 = vmul.f32 %v2936, %v2936
      %v2939 = vmul.f32 %v2937, %v2937
      %v2940 = vsel %vm927, %v2938, 0.0
      %2941 = vadd.xlane.f32.xlu0 %v2940
      %v2942 = vpop.xlane.xlu0 %2941
      %v2943 = vsel %vm927, %v2939, 0.0
      %2944 = vadd.xlane.f32.xlu0 %v2943
      %v2945 = vpop.xlane.xlu0 %2944
      %v2946 = vmul.f32 %v2942, %v2732
      %v2947 = vmul.f32 %v2945, %v2732
      %v2948 = vadd.f32 %v2946, 1e-05
      %v2949 = vadd.f32 %v2947, 1e-05
      %v2950 = vrsqrt.pop %v2948
      %v2951 = vrsqrt.pop %v2949
      %v2952 = vmul.f32 %v2936, %v2950
      %v2953 = vmul.f32 %v2937, %v2951
      %v2955 = vlaneseq
      %v2956 = vshrl.u32 %v2955, 7
      %v2957 = vsub.s32 0, %v2956
      %v2958 = vrot.slane %v2926, %v2957
      %v2960 = vmul.f32 %v2952, %v2958
      %v2961 = vmul.f32 %v2953, %v2958
      %v2963 = vlaneseq
      %v2964 = vshrl.u32 %v2963, 7
      %v2965 = vsub.s32 0, %v2964
      %v2966 = vrot.slane %v2927, %v2965
      %v2968 = vadd.f32 %v2960, %v2966
      %v2969 = vadd.f32 %v2961, %v2966
      %2970 = vst.msk [vmem:[#allocation2] sm:$0xff] %vm927, %v2968
      %2971 = vst.msk [vmem:[#allocation2 + $0x8] sm:$0xff] %vm927, %v2969
      %p2972 = scmp.eq.s32.totalorder %s32, 1
      // Predicated region
      $region109: #{transformer_forward.1} parent=103 // pred_check
        %p2973 = pneg %p2972
      $region110: #{transformer_forward.1} parent=103 // pred_check_branch
        %2975 = sbr.rel (%p2973) target = $region112
      $region111: #{transformer_forward.1} parent=103 // pred_region
        %v2976 = vld [vmem:[%s17] sm:$0x1]
        %v2977 = vld [vmem:[%s18] sm:$0x1]
        %v2978 = vsel %vm927, %v2968, 0.0
        %2979 = vadd.xlane.f32.xlu0 %v2978
        %v2980 = vpop.xlane.xlu0 %2979
        %v2981 = vsel %vm927, %v2969, 0.0
        %2982 = vadd.xlane.f32.xlu0 %v2981
        %v2983 = vpop.xlane.xlu0 %2982
        %v2984 = vmul.f32 %v2980, %v2732
        %v2985 = vmul.f32 %v2983, %v2732
        %v2986 = vsub.f32 %v2968, %v2984
        %v2987 = vsub.f32 %v2969, %v2985
        %v2988 = vmul.f32 %v2986, %v2986
        %v2989 = vmul.f32 %v2987, %v2987
        %v2990 = vsel %vm927, %v2988, 0.0
        %2991 = vadd.xlane.f32.xlu0 %v2990
        %v2992 = vpop.xlane.xlu0 %2991
        %v2993 = vsel %vm927, %v2989, 0.0
        %2994 = vadd.xlane.f32.xlu0 %v2993
        %v2995 = vpop.xlane.xlu0 %2994
        %v2996 = vmul.f32 %v2992, %v2732
        %v2997 = vmul.f32 %v2995, %v2732
        %v2998 = vadd.f32 %v2996, 1e-05
        %v2999 = vadd.f32 %v2997, 1e-05
        %v3000 = vrsqrt.pop %v2998
        %v3001 = vrsqrt.pop %v2999
        %v3002 = vmul.f32 %v2986, %v3000
        %v3003 = vmul.f32 %v2987, %v3001
        %v3005 = vlaneseq
        %v3006 = vshrl.u32 %v3005, 7
        %v3007 = vsub.s32 0, %v3006
        %v3008 = vrot.slane %v2976, %v3007
        %v3010 = vmul.f32 %v3002, %v3008
        %v3011 = vmul.f32 %v3003, %v3008
        %v3013 = vlaneseq
        %v3014 = vshrl.u32 %v3013, 7
        %v3015 = vsub.s32 0, %v3014
        %v3016 = vrot.slane %v2977, %v3015
        %v3018 = vadd.f32 %v3010, %v3016
        %v3019 = vadd.f32 %v3011, %v3016
        %v3020 = vpack.c.bf16 %v3019, %v3018
        %v3021 = vld [vmem:[%s19] sm:$0xf]
        %v3022 = vld [vmem:[%s19 + $0x4] sm:$0xf]
        %v3023 = vld [vmem:[%s19 + $0x8] sm:$0xf]
        %v3024 = vld [vmem:[%s19 + $0xc] sm:$0xf]
        %v3025 = vld [vmem:[%s20] sm:$0x1]
        %v3027 = vlaneseq
        %v3028 = vshrl.u32 %v3027, 7
        %v3029 = vsub.s32 0, %v3028
        %v3030 = vrot.slane %v3025, %v3029
        %v3036 = vunpack.c.l.b16 %v3021
        %v3037 = vunpack.c.l.b16 %v3022
        %v3038 = vunpack.c.l.b16 %v3023
        %v3039 = vunpack.c.l.b16 %v3024
        %v3040 = vpack.c.b16 %v3037, %v3036
        %v3041 = vpack.c.b16 %v3039, %v3038
        %v3045 = vsel %vm927, %v3020, 0
        %3047 = vmatprep.subr.bf16.mxu0 0
        %3048 = vmatpush1.bf16.msra.mxu0 %v3040
        %3049 = vmatprep.subr.bf16.mxu0 0
        %3050 = vmatpush1.bf16.msra.mxu0 %v3041
        %3051 = vmatprep.subr.bf16.mxu0 0
        %3052 = vmatpush1.bf16.msra.mxu0 0
        %3053 = vmatprep.subr.bf16.mxu0 0
        %3054 = vmatpush1.bf16.msra.mxu0 0
        %3055 = vmatprep.subr.bf16.mxu0 0
        %3056 = vmatpush1.bf16.msra.mxu0 0
        %3057 = vmatprep.subr.bf16.mxu0 0
        %3058 = vmatpush1.bf16.msra.mxu0 0
        %3059 = vmatprep.subr.bf16.mxu0 0
        %3060 = vmatpush1.bf16.msra.mxu0 0
        %3061 = vmatprep.subr.bf16.mxu0 0
        %3062 = vmatpush1.bf16.msra.mxu0 0
        %3063 = vmatprep.subr.bf16.mxu0 0
        %3064 = vmatpush1.bf16.msra.mxu0 0
        %3065 = vmatprep.subr.bf16.mxu0 0
        %3066 = vmatpush1.bf16.msra.mxu0 0
        %3067 = vmatprep.subr.bf16.mxu0 0
        %3068 = vmatpush1.bf16.msra.mxu0 0
        %3069 = vmatprep.subr.bf16.mxu0 0
        %3070 = vmatpush1.bf16.msra.mxu0 0
        %3071 = vmatprep.subr.bf16.mxu0 0
        %3072 = vmatpush1.bf16.msra.mxu0 0
        %3073 = vmatprep.subr.bf16.mxu0 0
        %3074 = vmatpush1.bf16.msra.mxu0 0
        %3075 = vmatprep.subr.bf16.mxu0 0
        %3076 = vmatpush1.bf16.msra.mxu0 0
        %3077 = vmatprep.subr.bf16.mxu0 0
        %3078 = vmatpush1.bf16.msra.mxu0 0
        %3079 = vmatprep.mubr.bf16.mxu0 0
        %3080 = vmatmul.mubr.bf16.gmra.mrb[0].mxu0 %v3045
        %v3081 = vpop.f32.mrb[0].mxu0
        %v3082 = vadd.f32 %v3030, %v3081
        %v3083 = vpop.f32.mrb[0].mxu0
        %v3084 = vpop.f32.mrb[0].mxu0
        %v3085 = vadd.f32 %v3030, %v3084
        %v3086 = vpop.f32.mrb[0].mxu0
        %3087 = vdwg.mxu0
        %3088 = vst [vmem:[%s21] sm:$0xff] %v3082
        %3089 = vst [vmem:[%s21 + $0x8] sm:$0xff] %v3085
      $region112: #{transformer_forward.1} parent=103 // pred_fallthru
        _
      // Predicated region
      $region113: #{transformer_forward.1} parent=103 // pred_check
        %p3090 = pneg %p566
      $region114: #{transformer_forward.1} parent=103 // pred_check_branch
        %3092 = sbr.rel (%p3090) target = $region116
      $region115: #{transformer_forward.1} parent=103 // pred_region
        _
      $region116: #{transformer_forward.1} parent=103 // pred_fallthru
        _
      // Predicated region
      $region117: #{transformer_forward.1} parent=103 // pred_check
        %p3093 = pneg %p566
      $region118: #{transformer_forward.1} parent=103 // pred_check_branch
        %3095 = sbr.rel (%p3093) target = $region120
      $region119: #{transformer_forward.1} parent=103 // pred_region
        _
      $region120: #{transformer_forward.1} parent=103 // pred_fallthru
        _
    $region104: #{transformer_forward.1} parent=5 // pred_fallthru
      _
    %p3096 = scmp.le.s32.totalorder 2, %s27
    // Predicated region
    $region121: #{transformer_forward.1} parent=5 // pred_check
      %p3097 = pneg %p3096
    $region122: #{transformer_forward.1} parent=5 // pred_check_branch
      %3099 = sbr.rel (%p3097) target = $region124
    $region123: #{transformer_forward.1} parent=5 // pred_region
      %s3100 = ssub.s32 %s27, 2
    $region124: #{transformer_forward.1} parent=5 // pred_fallthru
      _
  $region6: #{transformer_forward.1} parent=0 // loop_footer
    %s31 = sadd.s32 1, %s27
  $region7: #{transformer_forward.1} parent=0 // loop_footer_branch
    %26 = sbr.rel target = $region3
  $region8: #{transformer_forward.1} parent=0 // loop_exit
    _

</llo_original>
